<compile_context>
chip_gen: v5e
topology: v5e:2x2
jax: 0.10.0
libtpu: 0.0.40
codegen_flags: <defaults>
</compile_context>

<pallas_src>
import functools

import jax
import jax.numpy as jnp
from jax import lax
from jax.experimental import pallas as pl
from jax.experimental.pallas import tpu as pltpu

NUM_H = 512  # hidden sizes fixed in SimulationNN.__init__


def _slab_width(num_actions):
    # lane-dense output slab: loc in [:, :A], log_std in [:, A:2A], value in
    # column 2A, rest padding.  Must hold 2A+1 columns.
    return max(128, ((2 * num_actions + 1 + 127) // 128) * 128)


# ----------------------------------------------------------------------------
# Pallas kernel: both MLP branches (policy + value) with FiLM conditioning.
# ----------------------------------------------------------------------------
def _mlp_film_kernel(x_ref, ls_ref,
                     W1, V1,
                     pW2, pV2, pW3, pV3, pW4, pV4,
                     vW2, vV2, vW3, vV3, vW4, v4v,
                     out_ref, *, num_actions):
    x = x_ref[...]                       # (TB, S) f32
    t = x[:, 0:1]                        # task indicator = first column, (TB, 1)

    def layer(h, w_ref, v_ref, relu):
        # bf16 operands to the MXU, f32 accumulation; FiLM/ReLU in f32.
        y = jnp.dot(h.astype(jnp.bfloat16), w_ref[...],
                    preferred_element_type=jnp.float32)
        y = y + v_ref[0:1, :]                       # linear bias
        gamma = t * v_ref[1:2, :] + v_ref[2:3, :]   # FiLM gamma_generator(t)
        beta = t * v_ref[3:4, :] + v_ref[4:5, :]    # FiLM beta_generator(t)
        y = gamma * y + beta
        if relu:
            y = jnp.maximum(y, 0.0)
        return y

    # fused first layer for both branches: (TB, S) @ (S, 2*NUM_H)
    h1 = layer(x, W1, V1, True)
    hp = h1[:, :NUM_H]                   # policy branch
    hv = h1[:, NUM_H:]                   # value branch

    # policy branch
    hp = layer(hp, pW2, pV2, True)
    hp = layer(hp, pW3, pV3, True)
    loc = layer(hp, pW4, pV4, False)     # (TB, OUT_W); columns >= A are exactly 0

    # value branch
    hv = layer(hv, vW2, vV2, True)
    hv = layer(hv, vW3, vV3, True)
    # value head as VPU multiply + lane reduction (avoids a (512,1) matmul)
    val = jnp.sum(hv * vW4[...], axis=-1, keepdims=True) + v4v[0:1, :]
    gamma_v = t * v4v[1:2, :] + v4v[2:3, :]
    beta_v = t * v4v[3:4, :] + v4v[4:5, :]
    val = gamma_v * val + beta_v         # (TB, 1)

    # pack lane-dense slab:
    #   loc (zero beyond A)  +  log_std row (nonzero only in [A, 2A))
    #   +  value masked into column 2A.
    col = lax.broadcasted_iota(jnp.int32, loc.shape, 1)
    out_ref[...] = (loc + ls_ref[0:1, :]
                    + jnp.where(col == 2 * num_actions, val, 0.0))


# ----------------------------------------------------------------------------
# Wrapper
# ----------------------------------------------------------------------------
def simulation_nn_ray_forward(x, params, *, tile_b=256):
    """Returns (action_tensor (B, 2*A), value (B, 1)) like SimulationNN_Ray.forward.

    tile_b: batch tile size (use 128 on v5e, 256 on v6e/v7x).
    """
    B, S = x.shape
    A = params["log_std"].shape[0]
    OUT_W = params["p4_W"].shape[1]

    TB = B if B <= tile_b else tile_b
    grid = (pl.cdiv(B, TB),)

    # log_std placed at columns [A, 2A) of the output slab (scale.log() == log_std)
    ls_row = jnp.pad(params["log_std"].astype(jnp.float32),
                     (A, OUT_W - 2 * A))[None, :]              # (1, OUT_W)

    inputs = [
        x, ls_row,
        params["W1"], params["V1"],
        params["p2_W"], params["p2_V"], params["p3_W"], params["p3_V"],
        params["p4_W"], params["p4_V"],
        params["v2_W"], params["v2_V"], params["v3_W"], params["v3_V"],
        params["v4_W"], params["v4_vec"],
    ]

    def _const_spec(arr):
        # full-array block, constant block index -> stays resident in VMEM
        return pl.BlockSpec(arr.shape, lambda i: (0, 0))

    in_specs = [pl.BlockSpec((TB, S), lambda i: (i, 0))]
    in_specs += [_const_spec(a) for a in inputs[1:]]
    out_specs = pl.BlockSpec((TB, OUT_W), lambda i: (i, 0))

    flops = 2 * B * (S * 2 * NUM_H            # fused layer 1
                     + 4 * NUM_H * NUM_H      # p2, p3, v2, v3
                     + NUM_H * OUT_W          # p4
                     + NUM_H)                 # value head reduction
    bytes_accessed = sum(int(a.size) * a.dtype.itemsize for a in inputs)
    bytes_accessed += B * OUT_W * 4

    kernel = functools.partial(_mlp_film_kernel, num_actions=A)

    slab = pl.pallas_call(
        kernel,
        grid=grid,
        in_specs=in_specs,
        out_specs=out_specs,
        out_shape=jax.ShapeDtypeStruct((B, OUT_W), jnp.float32),
        compiler_params=pltpu.CompilerParams(
            dimension_semantics=("parallel",)),
        cost_estimate=pl.CostEstimate(
            flops=flops, transcendentals=0, bytes_accessed=bytes_accessed),
    )(*inputs)

    action_tensor = slab[:, :2 * A]          # [loc | log_std]
    value = slab[:, 2 * A:2 * A + 1]         # (B, 1)
    return action_tensor, value


# ----------------------------------------------------------------------------
# Deterministic parameter init (mirrors weights_init: xavier_uniform + zero bias)
# ----------------------------------------------------------------------------
def _xavier(key, fan_in, fan_out, shape):
    bound = (6.0 / (fan_in + fan_out)) ** 0.5
    return jax.random.uniform(key, shape, jnp.float32, -bound, bound)


def init_params(key, num_states, num_actions):
    OUT_W = _slab_width(num_actions)
    keys = iter(jax.random.split(key, 32))

    def lin_w(din, dout):
        # torch Linear weight (dout, din) stored transposed as (din, dout)
        return _xavier(next(keys), din, dout, (din, dout))

    def film_pack(dout):
        # packed per-feature vectors: [bias, w_gamma, b_gamma, w_beta, b_beta]
        bias = jnp.zeros((dout,), jnp.float32)
        w_g = _xavier(next(keys), 1, dout, (dout,))   # gamma_generator: Linear(1, dout)
        b_g = jnp.zeros((dout,), jnp.float32)
        w_b = _xavier(next(keys), 1, dout, (dout,))   # beta_generator: Linear(1, dout)
        b_b = jnp.zeros((dout,), jnp.float32)
        return jnp.stack([bias, w_g, b_g, w_b, b_b], axis=0)   # (5, dout) f32

    params = {}

    # layer 1 fused across branches: [p_fc1 | v_fc1]
    p1_W = lin_w(num_states, NUM_H)
    v1_W = lin_w(num_states, NUM_H)
    params["W1"] = jnp.concatenate([p1_W, v1_W], axis=1).astype(jnp.bfloat16)
    params["V1"] = jnp.concatenate([film_pack(NUM_H), film_pack(NUM_H)], axis=1)

    for name in ("p2", "p3", "v2", "v3"):
        params[f"{name}_W"] = lin_w(NUM_H, NUM_H).astype(jnp.bfloat16)
        params[f"{name}_V"] = film_pack(NUM_H)

    # policy head, zero-padded to the lane-dense slab width
    p4_W = lin_w(NUM_H, num_actions)
    params["p4_W"] = jnp.pad(
        p4_W, ((0, 0), (0, OUT_W - num_actions))).astype(jnp.bfloat16)
    params["p4_V"] = jnp.pad(
        film_pack(num_actions), ((0, 0), (0, OUT_W - num_actions)))

    # value head: v_fc4 weight (1, 512) f32, used as VPU multiply + reduce
    params["v4_W"] = _xavier(next(keys), NUM_H, 1, (1, NUM_H))
    w_g = _xavier(next(keys), 1, 1, (1,))
    w_b = _xavier(next(keys), 1, 1, (1,))
    params["v4_vec"] = jnp.stack(
        [jnp.zeros((1,)), w_g, jnp.zeros((1,)), w_b, jnp.zeros((1,))],
        axis=0).astype(jnp.float32)                      # (5, 1)

    log_std = jnp.ones((num_actions,), jnp.float32)
    log_std = log_std.at[18:].multiply(0.5)
    log_std = log_std.at[-1].set(1.0)
    params["log_std"] = log_std
    return params


# ----------------------------------------------------------------------------
# Pure-JAX reference (mirrors the same bf16 weight quantization / math order)
# ----------------------------------------------------------------------------
def reference_forward(x, params):
    A = params["log_std"].shape[0]
    B = x.shape[0]
    t = x[:, 0:1]

    def layer(h, W, V, relu):
        y = jnp.dot(h.astype(jnp.bfloat16), W, preferred_element_type=jnp.float32)
        y = y + V[0:1, :]
        gamma = t * V[1:2, :] + V[2:3, :]
        beta = t * V[3:4, :] + V[4:5, :]
        y = gamma * y + beta
        return jnp.maximum(y, 0.0) if relu else y

    h1 = layer(x, params["W1"], params["V1"], True)
    hp, hv = h1[:, :NUM_H], h1[:, NUM_H:]

    hp = layer(hp, params["p2_W"], params["p2_V"], True)
    hp = layer(hp, params["p3_W"], params["p3_V"], True)
    loc = layer(hp, params["p4_W"], params["p4_V"], False)[:, :A]

    hv = layer(hv, params["v2_W"], params["v2_V"], True)
    hv = layer(hv, params["v3_W"], params["v3_V"], True)
    val = jnp.sum(hv * params["v4_W"], axis=-1, keepdims=True) + params["v4_vec"][0:1, :]
    gamma_v = t * params["v4_vec"][1:2, :] + params["v4_vec"][2:3, :]
    beta_v = t * params["v4_vec"][3:4, :] + params["v4_vec"][4:5, :]
    val = gamma_v * val + beta_v

    action = jnp.concatenate(
        [loc, jnp.broadcast_to(params["log_std"][None, :], (B, A))], axis=1)
    return action, val


if __name__ == "__main__":
    B, num_states, num_actions = 8, 64, 24   # small obs/action dims; hidden stays 512
    key = jax.random.PRNGKey(0)
    k_params, k_x = jax.random.split(key)
    params = init_params(k_params, num_states, num_actions)
    x = jax.random.normal(k_x, (B, num_states), jnp.float32)

    fwd = jax.jit(simulation_nn_ray_forward)
    action, value = fwd(x, params)
    jax.block_until_ready((action, value))

    act_ref, val_ref = reference_forward(x, params)
    assert action.shape == (B, 2 * num_actions) and value.shape == (B, 1)
    assert jnp.allclose(action, act_ref, atol=2e-3, rtol=2e-3)
    assert jnp.allclose(value, val_ref, atol=2e-3, rtol=2e-3)
    print("KERNEL_OK")
</pallas_src>

<mosaic_0001>
module attributes {stable_mosaic.version = 11 : i64} {
  func.func @_mlp_film_kernel(%arg0: i32, %arg1: memref<8x64xf32, #tpu.memory_space<vmem>>, %arg2: memref<1x128xf32, #tpu.memory_space<vmem>>, %arg3: memref<64x1024xbf16, #tpu.memory_space<vmem>>, %arg4: memref<5x1024xf32, #tpu.memory_space<vmem>>, %arg5: memref<512x512xbf16, #tpu.memory_space<vmem>>, %arg6: memref<5x512xf32, #tpu.memory_space<vmem>>, %arg7: memref<512x512xbf16, #tpu.memory_space<vmem>>, %arg8: memref<5x512xf32, #tpu.memory_space<vmem>>, %arg9: memref<512x128xbf16, #tpu.memory_space<vmem>>, %arg10: memref<5x128xf32, #tpu.memory_space<vmem>>, %arg11: memref<512x512xbf16, #tpu.memory_space<vmem>>, %arg12: memref<5x512xf32, #tpu.memory_space<vmem>>, %arg13: memref<512x512xbf16, #tpu.memory_space<vmem>>, %arg14: memref<5x512xf32, #tpu.memory_space<vmem>>, %arg15: memref<1x512xf32, #tpu.memory_space<vmem>>, %arg16: memref<5x1xf32, #tpu.memory_space<vmem>>, %arg17: memref<8x128xf32, #tpu.memory_space<vmem>>) attributes {dimension_semantics = [#tpu.dimension_semantics<parallel>], iteration_bounds = array<i64: 1>, scalar_prefetch = 0 : i64, scratch_operands = 0 : i64, tpu.core_type = #tpu.core_type<tc>, window_params = [{transform_indices = @transform_0, window_bounds = array<i64: 8, 64>}, {pipeline_mode = #tpu.pipeline_mode<synchronous>, transform_indices = @transform_1, window_bounds = array<i64: 1, 128>}, {pipeline_mode = #tpu.pipeline_mode<synchronous>, transform_indices = @transform_2, window_bounds = array<i64: 64, 1024>}, {pipeline_mode = #tpu.pipeline_mode<synchronous>, transform_indices = @transform_3, window_bounds = array<i64: 5, 1024>}, {pipeline_mode = #tpu.pipeline_mode<synchronous>, transform_indices = @transform_4, window_bounds = array<i64: 512, 512>}, {pipeline_mode = #tpu.pipeline_mode<synchronous>, transform_indices = @transform_5, window_bounds = array<i64: 5, 512>}, {pipeline_mode = #tpu.pipeline_mode<synchronous>, transform_indices = @transform_6, window_bounds = array<i64: 512, 512>}, {pipeline_mode = #tpu.pipeline_mode<synchronous>, transform_indices = @transform_7, window_bounds = array<i64: 5, 512>}, {pipeline_mode = #tpu.pipeline_mode<synchronous>, transform_indices = @transform_8, window_bounds = array<i64: 512, 128>}, {pipeline_mode = #tpu.pipeline_mode<synchronous>, transform_indices = @transform_9, window_bounds = array<i64: 5, 128>}, {pipeline_mode = #tpu.pipeline_mode<synchronous>, transform_indices = @transform_10, window_bounds = array<i64: 512, 512>}, {pipeline_mode = #tpu.pipeline_mode<synchronous>, transform_indices = @transform_11, window_bounds = array<i64: 5, 512>}, {pipeline_mode = #tpu.pipeline_mode<synchronous>, transform_indices = @transform_12, window_bounds = array<i64: 512, 512>}, {pipeline_mode = #tpu.pipeline_mode<synchronous>, transform_indices = @transform_13, window_bounds = array<i64: 5, 512>}, {pipeline_mode = #tpu.pipeline_mode<synchronous>, transform_indices = @transform_14, window_bounds = array<i64: 1, 512>}, {pipeline_mode = #tpu.pipeline_mode<synchronous>, transform_indices = @transform_15, window_bounds = array<i64: 5, 1>}, {transform_indices = @transform_16, window_bounds = array<i64: 8, 128>}]} {
    %c0 = arith.constant 0 : index
    %c0_0 = arith.constant 0 : index
    %0 = vector.load %arg1[%c0, %c0_0] : memref<8x64xf32, #tpu.memory_space<vmem>>, vector<8x64xf32>
    %1 = vector.extract_strided_slice %0 {offsets = [0, 0], sizes = [8, 1], strides = [1, 1]} : vector<8x64xf32> to vector<8x1xf32>
    %2 = arith.truncf %0 : vector<8x64xf32> to vector<8x64xbf16>
    %c0_1 = arith.constant 0 : index
    %c0_2 = arith.constant 0 : index
    %3 = vector.load %arg3[%c0_1, %c0_2] : memref<64x1024xbf16, #tpu.memory_space<vmem>>, vector<64x1024xbf16>
    %cst = arith.constant dense<0.000000e+00> : vector<8x1024xf32>
    %4 = tpu.matmul %2, %3, %cst {dimension_numbers = #tpu.dot_dimension_numbers<[1], [0], [0], [1], [0, 0, 1, 1], [], []>} : vector<8x64xbf16>, vector<64x1024xbf16>, vector<8x1024xf32> -> vector<8x1024xf32>
    %c0_3 = arith.constant 0 : index
    %c0_4 = arith.constant 0 : index
    %5 = vector.load %arg4[%c0_3, %c0_4] : memref<5x1024xf32, #tpu.memory_space<vmem>>, vector<1x1024xf32>
    %6 = vector.broadcast %5 : vector<1x1024xf32> to vector<8x1024xf32>
    %7 = arith.addf %4, %6 : vector<8x1024xf32>
    %c1 = arith.constant 1 : index
    %c0_5 = arith.constant 0 : index
    %8 = vector.load %arg4[%c1, %c0_5] : memref<5x1024xf32, #tpu.memory_space<vmem>>, vector<1x1024xf32>
    %9 = vector.broadcast %1 : vector<8x1xf32> to vector<8x1024xf32>
    %10 = vector.broadcast %8 : vector<1x1024xf32> to vector<8x1024xf32>
    %11 = arith.mulf %9, %10 : vector<8x1024xf32>
    %c2 = arith.constant 2 : index
    %c0_6 = arith.constant 0 : index
    %12 = vector.load %arg4[%c2, %c0_6] : memref<5x1024xf32, #tpu.memory_space<vmem>>, vector<1x1024xf32>
    %13 = vector.broadcast %12 : vector<1x1024xf32> to vector<8x1024xf32>
    %14 = arith.addf %11, %13 : vector<8x1024xf32>
    %c3 = arith.constant 3 : index
    %c0_7 = arith.constant 0 : index
    %15 = vector.load %arg4[%c3, %c0_7] : memref<5x1024xf32, #tpu.memory_space<vmem>>, vector<1x1024xf32>
    %16 = vector.broadcast %1 : vector<8x1xf32> to vector<8x1024xf32>
    %17 = vector.broadcast %15 : vector<1x1024xf32> to vector<8x1024xf32>
    %18 = arith.mulf %16, %17 : vector<8x1024xf32>
    %c4 = arith.constant 4 : index
    %c0_8 = arith.constant 0 : index
    %19 = vector.load %arg4[%c4, %c0_8] : memref<5x1024xf32, #tpu.memory_space<vmem>>, vector<1x1024xf32>
    %20 = vector.broadcast %19 : vector<1x1024xf32> to vector<8x1024xf32>
    %21 = arith.addf %18, %20 : vector<8x1024xf32>
    %22 = arith.mulf %14, %7 : vector<8x1024xf32>
    %23 = arith.addf %22, %21 : vector<8x1024xf32>
    %cst_9 = arith.constant 0.000000e+00 : f32
    %24 = vector.broadcast %cst_9 : f32 to vector<8x1024xf32>
    %25 = arith.maximumf %23, %24 : vector<8x1024xf32>
    %26 = vector.extract_strided_slice %25 {offsets = [0, 0], sizes = [8, 512], strides = [1, 1]} : vector<8x1024xf32> to vector<8x512xf32>
    %27 = vector.extract_strided_slice %25 {offsets = [0, 512], sizes = [8, 512], strides = [1, 1]} : vector<8x1024xf32> to vector<8x512xf32>
    %28 = arith.truncf %26 : vector<8x512xf32> to vector<8x512xbf16>
    %c0_10 = arith.constant 0 : index
    %c0_11 = arith.constant 0 : index
    %29 = vector.load %arg5[%c0_10, %c0_11] : memref<512x512xbf16, #tpu.memory_space<vmem>>, vector<512x512xbf16>
    %cst_12 = arith.constant dense<0.000000e+00> : vector<8x512xf32>
    %30 = tpu.matmul %28, %29, %cst_12 {dimension_numbers = #tpu.dot_dimension_numbers<[1], [0], [0], [1], [0, 0, 1, 1], [], []>} : vector<8x512xbf16>, vector<512x512xbf16>, vector<8x512xf32> -> vector<8x512xf32>
    %c0_13 = arith.constant 0 : index
    %c0_14 = arith.constant 0 : index
    %31 = vector.load %arg6[%c0_13, %c0_14] : memref<5x512xf32, #tpu.memory_space<vmem>>, vector<1x512xf32>
    %32 = vector.broadcast %31 : vector<1x512xf32> to vector<8x512xf32>
    %33 = arith.addf %30, %32 : vector<8x512xf32>
    %c1_15 = arith.constant 1 : index
    %c0_16 = arith.constant 0 : index
    %34 = vector.load %arg6[%c1_15, %c0_16] : memref<5x512xf32, #tpu.memory_space<vmem>>, vector<1x512xf32>
    %35 = vector.broadcast %1 : vector<8x1xf32> to vector<8x512xf32>
    %36 = vector.broadcast %34 : vector<1x512xf32> to vector<8x512xf32>
    %37 = arith.mulf %35, %36 : vector<8x512xf32>
    %c2_17 = arith.constant 2 : index
    %c0_18 = arith.constant 0 : index
    %38 = vector.load %arg6[%c2_17, %c0_18] : memref<5x512xf32, #tpu.memory_space<vmem>>, vector<1x512xf32>
    %39 = vector.broadcast %38 : vector<1x512xf32> to vector<8x512xf32>
    %40 = arith.addf %37, %39 : vector<8x512xf32>
    %c3_19 = arith.constant 3 : index
    %c0_20 = arith.constant 0 : index
    %41 = vector.load %arg6[%c3_19, %c0_20] : memref<5x512xf32, #tpu.memory_space<vmem>>, vector<1x512xf32>
    %42 = vector.broadcast %1 : vector<8x1xf32> to vector<8x512xf32>
    %43 = vector.broadcast %41 : vector<1x512xf32> to vector<8x512xf32>
    %44 = arith.mulf %42, %43 : vector<8x512xf32>
    %c4_21 = arith.constant 4 : index
    %c0_22 = arith.constant 0 : index
    %45 = vector.load %arg6[%c4_21, %c0_22] : memref<5x512xf32, #tpu.memory_space<vmem>>, vector<1x512xf32>
    %46 = vector.broadcast %45 : vector<1x512xf32> to vector<8x512xf32>
    %47 = arith.addf %44, %46 : vector<8x512xf32>
    %48 = arith.mulf %40, %33 : vector<8x512xf32>
    %49 = arith.addf %48, %47 : vector<8x512xf32>
    %cst_23 = arith.constant 0.000000e+00 : f32
    %50 = vector.broadcast %cst_23 : f32 to vector<8x512xf32>
    %51 = arith.maximumf %49, %50 : vector<8x512xf32>
    %52 = arith.truncf %51 : vector<8x512xf32> to vector<8x512xbf16>
    %c0_24 = arith.constant 0 : index
    %c0_25 = arith.constant 0 : index
    %53 = vector.load %arg7[%c0_24, %c0_25] : memref<512x512xbf16, #tpu.memory_space<vmem>>, vector<512x512xbf16>
    %cst_26 = arith.constant dense<0.000000e+00> : vector<8x512xf32>
    %54 = tpu.matmul %52, %53, %cst_26 {dimension_numbers = #tpu.dot_dimension_numbers<[1], [0], [0], [1], [0, 0, 1, 1], [], []>} : vector<8x512xbf16>, vector<512x512xbf16>, vector<8x512xf32> -> vector<8x512xf32>
    %c0_27 = arith.constant 0 : index
    %c0_28 = arith.constant 0 : index
    %55 = vector.load %arg8[%c0_27, %c0_28] : memref<5x512xf32, #tpu.memory_space<vmem>>, vector<1x512xf32>
    %56 = vector.broadcast %55 : vector<1x512xf32> to vector<8x512xf32>
    %57 = arith.addf %54, %56 : vector<8x512xf32>
    %c1_29 = arith.constant 1 : index
    %c0_30 = arith.constant 0 : index
    %58 = vector.load %arg8[%c1_29, %c0_30] : memref<5x512xf32, #tpu.memory_space<vmem>>, vector<1x512xf32>
    %59 = vector.broadcast %1 : vector<8x1xf32> to vector<8x512xf32>
    %60 = vector.broadcast %58 : vector<1x512xf32> to vector<8x512xf32>
    %61 = arith.mulf %59, %60 : vector<8x512xf32>
    %c2_31 = arith.constant 2 : index
    %c0_32 = arith.constant 0 : index
    %62 = vector.load %arg8[%c2_31, %c0_32] : memref<5x512xf32, #tpu.memory_space<vmem>>, vector<1x512xf32>
    %63 = vector.broadcast %62 : vector<1x512xf32> to vector<8x512xf32>
    %64 = arith.addf %61, %63 : vector<8x512xf32>
    %c3_33 = arith.constant 3 : index
    %c0_34 = arith.constant 0 : index
    %65 = vector.load %arg8[%c3_33, %c0_34] : memref<5x512xf32, #tpu.memory_space<vmem>>, vector<1x512xf32>
    %66 = vector.broadcast %1 : vector<8x1xf32> to vector<8x512xf32>
    %67 = vector.broadcast %65 : vector<1x512xf32> to vector<8x512xf32>
    %68 = arith.mulf %66, %67 : vector<8x512xf32>
    %c4_35 = arith.constant 4 : index
    %c0_36 = arith.constant 0 : index
    %69 = vector.load %arg8[%c4_35, %c0_36] : memref<5x512xf32, #tpu.memory_space<vmem>>, vector<1x512xf32>
    %70 = vector.broadcast %69 : vector<1x512xf32> to vector<8x512xf32>
    %71 = arith.addf %68, %70 : vector<8x512xf32>
    %72 = arith.mulf %64, %57 : vector<8x512xf32>
    %73 = arith.addf %72, %71 : vector<8x512xf32>
    %cst_37 = arith.constant 0.000000e+00 : f32
    %74 = vector.broadcast %cst_37 : f32 to vector<8x512xf32>
    %75 = arith.maximumf %73, %74 : vector<8x512xf32>
    %76 = arith.truncf %75 : vector<8x512xf32> to vector<8x512xbf16>
    %c0_38 = arith.constant 0 : index
    %c0_39 = arith.constant 0 : index
    %77 = vector.load %arg9[%c0_38, %c0_39] : memref<512x128xbf16, #tpu.memory_space<vmem>>, vector<512x128xbf16>
    %cst_40 = arith.constant dense<0.000000e+00> : vector<8x128xf32>
    %78 = tpu.matmul %76, %77, %cst_40 {dimension_numbers = #tpu.dot_dimension_numbers<[1], [0], [0], [1], [0, 0, 1, 1], [], []>} : vector<8x512xbf16>, vector<512x128xbf16>, vector<8x128xf32> -> vector<8x128xf32>
    %c0_41 = arith.constant 0 : index
    %c0_42 = arith.constant 0 : index
    %79 = vector.load %arg10[%c0_41, %c0_42] : memref<5x128xf32, #tpu.memory_space<vmem>>, vector<1x128xf32>
    %80 = vector.broadcast %79 : vector<1x128xf32> to vector<8x128xf32>
    %81 = arith.addf %78, %80 : vector<8x128xf32>
    %c1_43 = arith.constant 1 : index
    %c0_44 = arith.constant 0 : index
    %82 = vector.load %arg10[%c1_43, %c0_44] : memref<5x128xf32, #tpu.memory_space<vmem>>, vector<1x128xf32>
    %83 = vector.broadcast %1 : vector<8x1xf32> to vector<8x128xf32>
    %84 = vector.broadcast %82 : vector<1x128xf32> to vector<8x128xf32>
    %85 = arith.mulf %83, %84 : vector<8x128xf32>
    %c2_45 = arith.constant 2 : index
    %c0_46 = arith.constant 0 : index
    %86 = vector.load %arg10[%c2_45, %c0_46] : memref<5x128xf32, #tpu.memory_space<vmem>>, vector<1x128xf32>
    %87 = vector.broadcast %86 : vector<1x128xf32> to vector<8x128xf32>
    %88 = arith.addf %85, %87 : vector<8x128xf32>
    %c3_47 = arith.constant 3 : index
    %c0_48 = arith.constant 0 : index
    %89 = vector.load %arg10[%c3_47, %c0_48] : memref<5x128xf32, #tpu.memory_space<vmem>>, vector<1x128xf32>
    %90 = vector.broadcast %1 : vector<8x1xf32> to vector<8x128xf32>
    %91 = vector.broadcast %89 : vector<1x128xf32> to vector<8x128xf32>
    %92 = arith.mulf %90, %91 : vector<8x128xf32>
    %c4_49 = arith.constant 4 : index
    %c0_50 = arith.constant 0 : index
    %93 = vector.load %arg10[%c4_49, %c0_50] : memref<5x128xf32, #tpu.memory_space<vmem>>, vector<1x128xf32>
    %94 = vector.broadcast %93 : vector<1x128xf32> to vector<8x128xf32>
    %95 = arith.addf %92, %94 : vector<8x128xf32>
    %96 = arith.mulf %88, %81 : vector<8x128xf32>
    %97 = arith.addf %96, %95 : vector<8x128xf32>
    %98 = arith.truncf %27 : vector<8x512xf32> to vector<8x512xbf16>
    %c0_51 = arith.constant 0 : index
    %c0_52 = arith.constant 0 : index
    %99 = vector.load %arg11[%c0_51, %c0_52] : memref<512x512xbf16, #tpu.memory_space<vmem>>, vector<512x512xbf16>
    %cst_53 = arith.constant dense<0.000000e+00> : vector<8x512xf32>
    %100 = tpu.matmul %98, %99, %cst_53 {dimension_numbers = #tpu.dot_dimension_numbers<[1], [0], [0], [1], [0, 0, 1, 1], [], []>} : vector<8x512xbf16>, vector<512x512xbf16>, vector<8x512xf32> -> vector<8x512xf32>
    %c0_54 = arith.constant 0 : index
    %c0_55 = arith.constant 0 : index
    %101 = vector.load %arg12[%c0_54, %c0_55] : memref<5x512xf32, #tpu.memory_space<vmem>>, vector<1x512xf32>
    %102 = vector.broadcast %101 : vector<1x512xf32> to vector<8x512xf32>
    %103 = arith.addf %100, %102 : vector<8x512xf32>
    %c1_56 = arith.constant 1 : index
    %c0_57 = arith.constant 0 : index
    %104 = vector.load %arg12[%c1_56, %c0_57] : memref<5x512xf32, #tpu.memory_space<vmem>>, vector<1x512xf32>
    %105 = vector.broadcast %1 : vector<8x1xf32> to vector<8x512xf32>
    %106 = vector.broadcast %104 : vector<1x512xf32> to vector<8x512xf32>
    %107 = arith.mulf %105, %106 : vector<8x512xf32>
    %c2_58 = arith.constant 2 : index
    %c0_59 = arith.constant 0 : index
    %108 = vector.load %arg12[%c2_58, %c0_59] : memref<5x512xf32, #tpu.memory_space<vmem>>, vector<1x512xf32>
    %109 = vector.broadcast %108 : vector<1x512xf32> to vector<8x512xf32>
    %110 = arith.addf %107, %109 : vector<8x512xf32>
    %c3_60 = arith.constant 3 : index
    %c0_61 = arith.constant 0 : index
    %111 = vector.load %arg12[%c3_60, %c0_61] : memref<5x512xf32, #tpu.memory_space<vmem>>, vector<1x512xf32>
    %112 = vector.broadcast %1 : vector<8x1xf32> to vector<8x512xf32>
    %113 = vector.broadcast %111 : vector<1x512xf32> to vector<8x512xf32>
    %114 = arith.mulf %112, %113 : vector<8x512xf32>
    %c4_62 = arith.constant 4 : index
    %c0_63 = arith.constant 0 : index
    %115 = vector.load %arg12[%c4_62, %c0_63] : memref<5x512xf32, #tpu.memory_space<vmem>>, vector<1x512xf32>
    %116 = vector.broadcast %115 : vector<1x512xf32> to vector<8x512xf32>
    %117 = arith.addf %114, %116 : vector<8x512xf32>
    %118 = arith.mulf %110, %103 : vector<8x512xf32>
    %119 = arith.addf %118, %117 : vector<8x512xf32>
    %cst_64 = arith.constant 0.000000e+00 : f32
    %120 = vector.broadcast %cst_64 : f32 to vector<8x512xf32>
    %121 = arith.maximumf %119, %120 : vector<8x512xf32>
    %122 = arith.truncf %121 : vector<8x512xf32> to vector<8x512xbf16>
    %c0_65 = arith.constant 0 : index
    %c0_66 = arith.constant 0 : index
    %123 = vector.load %arg13[%c0_65, %c0_66] : memref<512x512xbf16, #tpu.memory_space<vmem>>, vector<512x512xbf16>
    %cst_67 = arith.constant dense<0.000000e+00> : vector<8x512xf32>
    %124 = tpu.matmul %122, %123, %cst_67 {dimension_numbers = #tpu.dot_dimension_numbers<[1], [0], [0], [1], [0, 0, 1, 1], [], []>} : vector<8x512xbf16>, vector<512x512xbf16>, vector<8x512xf32> -> vector<8x512xf32>
    %c0_68 = arith.constant 0 : index
    %c0_69 = arith.constant 0 : index
    %125 = vector.load %arg14[%c0_68, %c0_69] : memref<5x512xf32, #tpu.memory_space<vmem>>, vector<1x512xf32>
    %126 = vector.broadcast %125 : vector<1x512xf32> to vector<8x512xf32>
    %127 = arith.addf %124, %126 : vector<8x512xf32>
    %c1_70 = arith.constant 1 : index
    %c0_71 = arith.constant 0 : index
    %128 = vector.load %arg14[%c1_70, %c0_71] : memref<5x512xf32, #tpu.memory_space<vmem>>, vector<1x512xf32>
    %129 = vector.broadcast %1 : vector<8x1xf32> to vector<8x512xf32>
    %130 = vector.broadcast %128 : vector<1x512xf32> to vector<8x512xf32>
    %131 = arith.mulf %129, %130 : vector<8x512xf32>
    %c2_72 = arith.constant 2 : index
    %c0_73 = arith.constant 0 : index
    %132 = vector.load %arg14[%c2_72, %c0_73] : memref<5x512xf32, #tpu.memory_space<vmem>>, vector<1x512xf32>
    %133 = vector.broadcast %132 : vector<1x512xf32> to vector<8x512xf32>
    %134 = arith.addf %131, %133 : vector<8x512xf32>
    %c3_74 = arith.constant 3 : index
    %c0_75 = arith.constant 0 : index
    %135 = vector.load %arg14[%c3_74, %c0_75] : memref<5x512xf32, #tpu.memory_space<vmem>>, vector<1x512xf32>
    %136 = vector.broadcast %1 : vector<8x1xf32> to vector<8x512xf32>
    %137 = vector.broadcast %135 : vector<1x512xf32> to vector<8x512xf32>
    %138 = arith.mulf %136, %137 : vector<8x512xf32>
    %c4_76 = arith.constant 4 : index
    %c0_77 = arith.constant 0 : index
    %139 = vector.load %arg14[%c4_76, %c0_77] : memref<5x512xf32, #tpu.memory_space<vmem>>, vector<1x512xf32>
    %140 = vector.broadcast %139 : vector<1x512xf32> to vector<8x512xf32>
    %141 = arith.addf %138, %140 : vector<8x512xf32>
    %142 = arith.mulf %134, %127 : vector<8x512xf32>
    %143 = arith.addf %142, %141 : vector<8x512xf32>
    %cst_78 = arith.constant 0.000000e+00 : f32
    %144 = vector.broadcast %cst_78 : f32 to vector<8x512xf32>
    %145 = arith.maximumf %143, %144 : vector<8x512xf32>
    %c0_79 = arith.constant 0 : index
    %c0_80 = arith.constant 0 : index
    %146 = vector.load %arg15[%c0_79, %c0_80] : memref<1x512xf32, #tpu.memory_space<vmem>>, vector<1x512xf32>
    %147 = vector.broadcast %146 : vector<1x512xf32> to vector<8x512xf32>
    %148 = arith.mulf %145, %147 : vector<8x512xf32>
    %cst_81 = arith.constant dense<0.000000e+00> : vector<8xf32>
    %149 = vector.multi_reduction <add>, %148, %cst_81 [1] : vector<8x512xf32> to vector<8xf32>
    %150 = vector.shape_cast %149 : vector<8xf32> to vector<8x1xf32>
    %c0_82 = arith.constant 0 : index
    %c0_83 = arith.constant 0 : index
    %151 = vector.load %arg16[%c0_82, %c0_83] : memref<5x1xf32, #tpu.memory_space<vmem>>, vector<1x1xf32>
    %152 = vector.broadcast %151 : vector<1x1xf32> to vector<8x1xf32>
    %153 = arith.addf %150, %152 : vector<8x1xf32>
    %c1_84 = arith.constant 1 : index
    %c0_85 = arith.constant 0 : index
    %154 = vector.load %arg16[%c1_84, %c0_85] : memref<5x1xf32, #tpu.memory_space<vmem>>, vector<1x1xf32>
    %155 = vector.broadcast %154 : vector<1x1xf32> to vector<8x1xf32>
    %156 = arith.mulf %1, %155 : vector<8x1xf32>
    %c2_86 = arith.constant 2 : index
    %c0_87 = arith.constant 0 : index
    %157 = vector.load %arg16[%c2_86, %c0_87] : memref<5x1xf32, #tpu.memory_space<vmem>>, vector<1x1xf32>
    %158 = vector.broadcast %157 : vector<1x1xf32> to vector<8x1xf32>
    %159 = arith.addf %156, %158 : vector<8x1xf32>
    %c3_88 = arith.constant 3 : index
    %c0_89 = arith.constant 0 : index
    %160 = vector.load %arg16[%c3_88, %c0_89] : memref<5x1xf32, #tpu.memory_space<vmem>>, vector<1x1xf32>
    %161 = vector.broadcast %160 : vector<1x1xf32> to vector<8x1xf32>
    %162 = arith.mulf %1, %161 : vector<8x1xf32>
    %c4_90 = arith.constant 4 : index
    %c0_91 = arith.constant 0 : index
    %163 = vector.load %arg16[%c4_90, %c0_91] : memref<5x1xf32, #tpu.memory_space<vmem>>, vector<1x1xf32>
    %164 = vector.broadcast %163 : vector<1x1xf32> to vector<8x1xf32>
    %165 = arith.addf %162, %164 : vector<8x1xf32>
    %166 = arith.mulf %159, %153 : vector<8x1xf32>
    %167 = arith.addf %166, %165 : vector<8x1xf32>
    %168 = tpu.iota {dimensions = array<i32: 1>} : vector<8x128xi32>
    %c0_92 = arith.constant 0 : index
    %c0_93 = arith.constant 0 : index
    %169 = vector.load %arg2[%c0_92, %c0_93] : memref<1x128xf32, #tpu.memory_space<vmem>>, vector<1x128xf32>
    %170 = vector.broadcast %169 : vector<1x128xf32> to vector<8x128xf32>
    %171 = arith.addf %97, %170 : vector<8x128xf32>
    %c48_i32 = arith.constant 48 : i32
    %172 = vector.broadcast %c48_i32 : i32 to vector<8x128xi32>
    %173 = arith.cmpi eq, %168, %172 : vector<8x128xi32>
    %cst_94 = arith.constant 0.000000e+00 : f32
    %174 = vector.shape_cast %167 : vector<8x1xf32> to vector<8x1xf32>
    %175 = vector.broadcast %174 : vector<8x1xf32> to vector<8x128xf32>
    %176 = vector.broadcast %cst_94 : f32 to vector<8x128xf32>
    %177 = arith.select %173, %175, %176 : vector<8x128xi1>, vector<8x128xf32>
    %178 = arith.addf %171, %177 : vector<8x128xf32>
    %c0_95 = arith.constant 0 : index
    %c0_96 = arith.constant 0 : index
    %179 = vector.load %arg17[%c0_95, %c0_96] : memref<8x128xf32, #tpu.memory_space<vmem>>, vector<8x128xf32>
    tpu.vector_store %arg17[%c0_95, %c0_96], %178 {strides = array<i32>} : memref<8x128xf32, #tpu.memory_space<vmem>>, vector<8x128xf32>,
    return
  }
  func.func @transform_0(%arg0: i32) -> (i32, i32) {
    %c0_i32 = arith.constant 0 : i32
    %c0_i32_0 = arith.constant 0 : i32
    return %arg0, %c0_i32 : i32, i32
  }
  func.func @transform_1(%arg0: i32) -> (i32, i32) {
    %c0_i32 = arith.constant 0 : i32
    %c0_i32_0 = arith.constant 0 : i32
    %c0_i32_1 = arith.constant 0 : i32
    return %c0_i32, %c0_i32_0 : i32, i32
  }
  func.func @transform_2(%arg0: i32) -> (i32, i32) {
    %c0_i32 = arith.constant 0 : i32
    %c0_i32_0 = arith.constant 0 : i32
    %c0_i32_1 = arith.constant 0 : i32
    return %c0_i32, %c0_i32_0 : i32, i32
  }
  func.func @transform_3(%arg0: i32) -> (i32, i32) {
    %c0_i32 = arith.constant 0 : i32
    %c0_i32_0 = arith.constant 0 : i32
    %c0_i32_1 = arith.constant 0 : i32
    return %c0_i32, %c0_i32_0 : i32, i32
  }
  func.func @transform_4(%arg0: i32) -> (i32, i32) {
    %c0_i32 = arith.constant 0 : i32
    %c0_i32_0 = arith.constant 0 : i32
    %c0_i32_1 = arith.constant 0 : i32
    return %c0_i32, %c0_i32_0 : i32, i32
  }
  func.func @transform_5(%arg0: i32) -> (i32, i32) {
    %c0_i32 = arith.constant 0 : i32
    %c0_i32_0 = arith.constant 0 : i32
    %c0_i32_1 = arith.constant 0 : i32
    return %c0_i32, %c0_i32_0 : i32, i32
  }
  func.func @transform_6(%arg0: i32) -> (i32, i32) {
    %c0_i32 = arith.constant 0 : i32
    %c0_i32_0 = arith.constant 0 : i32
    %c0_i32_1 = arith.constant 0 : i32
    return %c0_i32, %c0_i32_0 : i32, i32
  }
  func.func @transform_7(%arg0: i32) -> (i32, i32) {
    %c0_i32 = arith.constant 0 : i32
    %c0_i32_0 = arith.constant 0 : i32
    %c0_i32_1 = arith.constant 0 : i32
    return %c0_i32, %c0_i32_0 : i32, i32
  }
  func.func @transform_8(%arg0: i32) -> (i32, i32) {
    %c0_i32 = arith.constant 0 : i32
    %c0_i32_0 = arith.constant 0 : i32
    %c0_i32_1 = arith.constant 0 : i32
    return %c0_i32, %c0_i32_0 : i32, i32
  }
  func.func @transform_9(%arg0: i32) -> (i32, i32) {
    %c0_i32 = arith.constant 0 : i32
    %c0_i32_0 = arith.constant 0 : i32
    %c0_i32_1 = arith.constant 0 : i32
    return %c0_i32, %c0_i32_0 : i32, i32
  }
  func.func @transform_10(%arg0: i32) -> (i32, i32) {
    %c0_i32 = arith.constant 0 : i32
    %c0_i32_0 = arith.constant 0 : i32
    %c0_i32_1 = arith.constant 0 : i32
    return %c0_i32, %c0_i32_0 : i32, i32
  }
  func.func @transform_11(%arg0: i32) -> (i32, i32) {
    %c0_i32 = arith.constant 0 : i32
    %c0_i32_0 = arith.constant 0 : i32
    %c0_i32_1 = arith.constant 0 : i32
    return %c0_i32, %c0_i32_0 : i32, i32
  }
  func.func @transform_12(%arg0: i32) -> (i32, i32) {
    %c0_i32 = arith.constant 0 : i32
    %c0_i32_0 = arith.constant 0 : i32
    %c0_i32_1 = arith.constant 0 : i32
    return %c0_i32, %c0_i32_0 : i32, i32
  }
  func.func @transform_13(%arg0: i32) -> (i32, i32) {
    %c0_i32 = arith.constant 0 : i32
    %c0_i32_0 = arith.constant 0 : i32
    %c0_i32_1 = arith.constant 0 : i32
    return %c0_i32, %c0_i32_0 : i32, i32
  }
  func.func @transform_14(%arg0: i32) -> (i32, i32) {
    %c0_i32 = arith.constant 0 : i32
    %c0_i32_0 = arith.constant 0 : i32
    %c0_i32_1 = arith.constant 0 : i32
    return %c0_i32, %c0_i32_0 : i32, i32
  }
  func.func @transform_15(%arg0: i32) -> (i32, i32) {
    %c0_i32 = arith.constant 0 : i32
    %c0_i32_0 = arith.constant 0 : i32
    %c0_i32_1 = arith.constant 0 : i32
    return %c0_i32, %c0_i32_0 : i32, i32
  }
  func.func @transform_16(%arg0: i32) -> (i32, i32) {
    %c0_i32 = arith.constant 0 : i32
    %c0_i32_0 = arith.constant 0 : i32
    return %arg0, %c0_i32 : i32, i32
  }
}

</mosaic_0001>

<llo_original>
// kernel: simulation_nn_ray_forward.1
$region0: #{simulation_nn_ray_forward.1}
  #allocation0 [shape = 'u32[]', space=smem, size = 0x4, offset = 0x4, fixed_abs, tag = 'smem constant byte address 0x4 - core index']
  #allocation1 [shape = 'u32[72,128]{1,0:T(1,128)}', space=vmem, size = 0x9000, scoped, tag = 'internal scratch']
  %s0 = inlined_call_operand.vmem [shape: f32[8,64], index: 0, kind: input, shape index: {}]
  %s1 = inlined_call_operand.vmem [shape: f32[1,128], index: 1, kind: input, shape index: {}]
  %s2 = inlined_call_operand.hbm [shape: bf16[64,1024], index: 2, kind: input, shape index: {}]
  %s3 = inlined_call_operand.hbm [shape: f32[5,1024], index: 3, kind: input, shape index: {}]
  %s4 = inlined_call_operand.hbm [shape: bf16[512,512], index: 4, kind: input, shape index: {}]
  %s5 = inlined_call_operand.hbm [shape: f32[5,512], index: 5, kind: input, shape index: {}]
  %s6 = inlined_call_operand.hbm [shape: bf16[512,512], index: 6, kind: input, shape index: {}]
  %s7 = inlined_call_operand.hbm [shape: f32[5,512], index: 7, kind: input, shape index: {}]
  %s8 = inlined_call_operand.hbm [shape: bf16[512,128], index: 8, kind: input, shape index: {}]
  %s9 = inlined_call_operand.vmem [shape: f32[5,128], index: 9, kind: input, shape index: {}]
  %s10 = inlined_call_operand.hbm [shape: bf16[512,512], index: 10, kind: input, shape index: {}]
  %s11 = inlined_call_operand.hbm [shape: f32[5,512], index: 11, kind: input, shape index: {}]
  %s12 = inlined_call_operand.hbm [shape: bf16[512,512], index: 12, kind: input, shape index: {}]
  %s13 = inlined_call_operand.hbm [shape: f32[5,512], index: 13, kind: input, shape index: {}]
  %s14 = inlined_call_operand.vmem [shape: f32[1,512], index: 14, kind: input, shape index: {}]
  %s15 = inlined_call_operand.vmem [shape: f32[5,1], index: 15, kind: input, shape index: {}]
  %s16 = inlined_call_operand.vmem [shape: f32[8,128], index: 16, kind: output, shape index: {}]
  %s17 = sld [smem:[#allocation0]]
  $region118: #{simulation_nn_ray_forward.1} parent=0
    _
  %s19 = ssub.s32 1, %s17
  %s20 = scalar_select 0, %s19, %s17
  $region1: #{simulation_nn_ray_forward.1} parent=0
    #allocation2 [shape = 'u8[131072]{0}', space=vmem, size = 0x20000, scoped, tag = 'input window, operand 2, single buffered']
    #allocation3 [shape = 's32[1]{0}', space=sflag, size = 0x4, scoped, tag = 'scoped memory for simulation_nn_ray_forward.1']
    #allocation4 [shape = 'u8[32768]{0}', space=vmem, size = 0x8000, scoped, tag = 'input window, operand 3, single buffered']
    #allocation5 [shape = 's32[1]{0}', space=sflag, size = 0x4, scoped, tag = 'scoped memory for simulation_nn_ray_forward.1']
    #allocation6 [shape = 'u8[524288]{0}', space=vmem, size = 0x80000, scoped, tag = 'input window, operand 4, single buffered']
    #allocation7 [shape = 'u8[16384]{0}', space=vmem, size = 0x4000, scoped, tag = 'input window, operand 5, single buffered']
    #allocation8 [shape = 's32[1]{0}', space=sflag, size = 0x4, scoped, tag = 'scoped memory for simulation_nn_ray_forward.1']
    #allocation9 [shape = 'u8[524288]{0}', space=vmem, size = 0x80000, scoped, tag = 'input window, operand 6, single buffered']
    #allocation10 [shape = 'u8[16384]{0}', space=vmem, size = 0x4000, scoped, tag = 'input window, operand 7, single buffered']
    #allocation11 [shape = 's32[1]{0}', space=sflag, size = 0x4, scoped, tag = 'scoped memory for simulation_nn_ray_forward.1']
    #allocation12 [shape = 'u8[131072]{0}', space=vmem, size = 0x20000, scoped, tag = 'input window, operand 8, single buffered']
    #allocation13 [shape = 'u8[524288]{0}', space=vmem, size = 0x80000, scoped, tag = 'input window, operand 10, single buffered']
    #allocation14 [shape = 's32[1]{0}', space=sflag, size = 0x4, scoped, tag = 'scoped memory for simulation_nn_ray_forward.1']
    #allocation15 [shape = 'u8[16384]{0}', space=vmem, size = 0x4000, scoped, tag = 'input window, operand 11, single buffered']
    #allocation16 [shape = 'u8[524288]{0}', space=vmem, size = 0x80000, scoped, tag = 'input window, operand 12, single buffered']
    #allocation17 [shape = 's32[1]{0}', space=sflag, size = 0x4, scoped, tag = 'scoped memory for simulation_nn_ray_forward.1']
    #allocation18 [shape = 'u8[16384]{0}', space=vmem, size = 0x4000, scoped, tag = 'input window, operand 13, single buffered']
    %21 = vsyncpa [#allocation3], 0
    %22 = vsyncpa [#allocation5], 0
    %23 = vsyncpa [#allocation8], 0
    %24 = vsyncpa [#allocation11], 0
    %25 = vsyncpa [#allocation14], 0
    %26 = vsyncpa [#allocation17], 0
    // Predicated region
    $region2: #{simulation_nn_ray_forward.1} parent=1 // pred_check
      _
    $region3: #{simulation_nn_ray_forward.1} parent=1 // pred_check_branch
      %28 = sbr.rel (0) target = $region5
    $region4: #{simulation_nn_ray_forward.1} parent=1 // pred_region
      _
    $region5: #{simulation_nn_ray_forward.1} parent=1 // pred_fallthru
      _
    // Predicated region
    $region6: #{simulation_nn_ray_forward.1} parent=1 // pred_check
      _
    $region7: #{simulation_nn_ray_forward.1} parent=1 // pred_check_branch
      %30 = sbr.rel (0) target = $region9
    $region8: #{simulation_nn_ray_forward.1} parent=1 // pred_region
      _
    $region9: #{simulation_nn_ray_forward.1} parent=1 // pred_fallthru
      _
    // Predicated region
    $region10: #{simulation_nn_ray_forward.1} parent=1 // pred_check
      _
    $region11: #{simulation_nn_ray_forward.1} parent=1 // pred_check_branch
      %32 = sbr.rel (0) target = $region13
    $region12: #{simulation_nn_ray_forward.1} parent=1 // pred_region
      %34 = vsyncadd [#allocation3], 0
      %s35 = sshll.u32 %s2, 4
      %s36 = int_to_ptr.hbm [resolvable:$true] %s35
      %s37 = sshll.u32 [#allocation2], 4
      %s38 = int_to_ptr.vmem [resolvable:$true] %s37
      %43 = dma.hbm_to_vmem [thread:$0]  %s36, 4096, %s38, [#allocation3], 512, 512, 32
    $region13: #{simulation_nn_ray_forward.1} parent=1 // pred_fallthru
      _
    // Predicated region
    $region14: #{simulation_nn_ray_forward.1} parent=1 // pred_check
      _
    $region15: #{simulation_nn_ray_forward.1} parent=1 // pred_check_branch
      %45 = sbr.rel (0) target = $region17
    $region16: #{simulation_nn_ray_forward.1} parent=1 // pred_region
      %47 = vsyncadd [#allocation5], 0
      %s49 = sshll.u32 %s3, 4
      %s50 = int_to_ptr.hbm [resolvable:$true] %s49
      %s51 = sshll.u32 [#allocation4], 4
      %s52 = int_to_ptr.vmem [resolvable:$true] %s51
      %54 = dma.hbm_to_vmem [thread:$0]  %s50, 1024, %s52, [#allocation5]
    $region17: #{simulation_nn_ray_forward.1} parent=1 // pred_fallthru
      _
    // Predicated region
    $region18: #{simulation_nn_ray_forward.1} parent=1 // pred_check
      _
    $region19: #{simulation_nn_ray_forward.1} parent=1 // pred_check_branch
      %56 = sbr.rel (0) target = $region21
    $region20: #{simulation_nn_ray_forward.1} parent=1 // pred_region
      %58 = vsyncadd [#allocation5], 0
      %s59 = sshll.u32 %s4, 4
      %s60 = int_to_ptr.hbm [resolvable:$true] %s59
      %s61 = sshll.u32 [#allocation6], 4
      %s62 = int_to_ptr.vmem [resolvable:$true] %s61
      %67 = dma.hbm_to_vmem [thread:$0]  %s60, 16384, %s62, [#allocation5], 256, 256, 16
    $region21: #{simulation_nn_ray_forward.1} parent=1 // pred_fallthru
      _
    // Predicated region
    $region22: #{simulation_nn_ray_forward.1} parent=1 // pred_check
      _
    $region23: #{simulation_nn_ray_forward.1} parent=1 // pred_check_branch
      %69 = sbr.rel (0) target = $region25
    $region24: #{simulation_nn_ray_forward.1} parent=1 // pred_region
      %71 = vsyncadd [#allocation8], 0
      %s73 = sshll.u32 %s5, 4
      %s74 = int_to_ptr.hbm [resolvable:$true] %s73
      %s75 = sshll.u32 [#allocation7], 4
      %s76 = int_to_ptr.vmem [resolvable:$true] %s75
      %78 = dma.hbm_to_vmem [thread:$0]  %s74, 512, %s76, [#allocation8]
    $region25: #{simulation_nn_ray_forward.1} parent=1 // pred_fallthru
      _
    // Predicated region
    $region26: #{simulation_nn_ray_forward.1} parent=1 // pred_check
      _
    $region27: #{simulation_nn_ray_forward.1} parent=1 // pred_check_branch
      %80 = sbr.rel (0) target = $region29
    $region28: #{simulation_nn_ray_forward.1} parent=1 // pred_region
      %82 = vsyncadd [#allocation8], 0
      %s83 = sshll.u32 %s6, 4
      %s84 = int_to_ptr.hbm [resolvable:$true] %s83
      %s85 = sshll.u32 [#allocation9], 4
      %s86 = int_to_ptr.vmem [resolvable:$true] %s85
      %91 = dma.hbm_to_vmem [thread:$0]  %s84, 16384, %s86, [#allocation8], 256, 256, 16
    $region29: #{simulation_nn_ray_forward.1} parent=1 // pred_fallthru
      _
    // Predicated region
    $region30: #{simulation_nn_ray_forward.1} parent=1 // pred_check
      _
    $region31: #{simulation_nn_ray_forward.1} parent=1 // pred_check_branch
      %93 = sbr.rel (0) target = $region33
    $region32: #{simulation_nn_ray_forward.1} parent=1 // pred_region
      %95 = vsyncadd [#allocation11], 0
      %s97 = sshll.u32 %s7, 4
      %s98 = int_to_ptr.hbm [resolvable:$true] %s97
      %s99 = sshll.u32 [#allocation10], 4
      %s100 = int_to_ptr.vmem [resolvable:$true] %s99
      %102 = dma.hbm_to_vmem [thread:$0]  %s98, 512, %s100, [#allocation11]
    $region33: #{simulation_nn_ray_forward.1} parent=1 // pred_fallthru
      _
    // Predicated region
    $region34: #{simulation_nn_ray_forward.1} parent=1 // pred_check
      _
    $region35: #{simulation_nn_ray_forward.1} parent=1 // pred_check_branch
      %104 = sbr.rel (0) target = $region37
    $region36: #{simulation_nn_ray_forward.1} parent=1 // pred_region
      %106 = vsyncadd [#allocation11], 0
      %s107 = sshll.u32 %s8, 4
      %s108 = int_to_ptr.hbm [resolvable:$true] %s107
      %s109 = sshll.u32 [#allocation12], 4
      %s110 = int_to_ptr.vmem [resolvable:$true] %s109
      %115 = dma.hbm_to_vmem [thread:$0]  %s108, 4096, %s110, [#allocation11], 64, 64, 4
    $region37: #{simulation_nn_ray_forward.1} parent=1 // pred_fallthru
      _
    // Predicated region
    $region38: #{simulation_nn_ray_forward.1} parent=1 // pred_check
      _
    $region39: #{simulation_nn_ray_forward.1} parent=1 // pred_check_branch
      %117 = sbr.rel (0) target = $region41
    $region40: #{simulation_nn_ray_forward.1} parent=1 // pred_region
      _
    $region41: #{simulation_nn_ray_forward.1} parent=1 // pred_fallthru
      _
    // Predicated region
    $region42: #{simulation_nn_ray_forward.1} parent=1 // pred_check
      _
    $region43: #{simulation_nn_ray_forward.1} parent=1 // pred_check_branch
      %119 = sbr.rel (0) target = $region45
    $region44: #{simulation_nn_ray_forward.1} parent=1 // pred_region
      %121 = vsyncadd [#allocation14], 0
      %s122 = sshll.u32 %s10, 4
      %s123 = int_to_ptr.hbm [resolvable:$true] %s122
      %s124 = sshll.u32 [#allocation13], 4
      %s125 = int_to_ptr.vmem [resolvable:$true] %s124
      %130 = dma.hbm_to_vmem [thread:$0]  %s123, 16384, %s125, [#allocation14], 256, 256, 16
    $region45: #{simulation_nn_ray_forward.1} parent=1 // pred_fallthru
      _
    // Predicated region
    $region46: #{simulation_nn_ray_forward.1} parent=1 // pred_check
      _
    $region47: #{simulation_nn_ray_forward.1} parent=1 // pred_check_branch
      %132 = sbr.rel (0) target = $region49
    $region48: #{simulation_nn_ray_forward.1} parent=1 // pred_region
      %134 = vsyncadd [#allocation14], 0
      %s136 = sshll.u32 %s11, 4
      %s137 = int_to_ptr.hbm [resolvable:$true] %s136
      %s138 = sshll.u32 [#allocation15], 4
      %s139 = int_to_ptr.vmem [resolvable:$true] %s138
      %141 = dma.hbm_to_vmem [thread:$0]  %s137, 512, %s139, [#allocation14]
    $region49: #{simulation_nn_ray_forward.1} parent=1 // pred_fallthru
      _
    // Predicated region
    $region50: #{simulation_nn_ray_forward.1} parent=1 // pred_check
      _
    $region51: #{simulation_nn_ray_forward.1} parent=1 // pred_check_branch
      %143 = sbr.rel (0) target = $region53
    $region52: #{simulation_nn_ray_forward.1} parent=1 // pred_region
      %145 = vsyncadd [#allocation17], 0
      %s146 = sshll.u32 %s12, 4
      %s147 = int_to_ptr.hbm [resolvable:$true] %s146
      %s148 = sshll.u32 [#allocation16], 4
      %s149 = int_to_ptr.vmem [resolvable:$true] %s148
      %154 = dma.hbm_to_vmem [thread:$0]  %s147, 16384, %s149, [#allocation17], 256, 256, 16
    $region53: #{simulation_nn_ray_forward.1} parent=1 // pred_fallthru
      _
    // Predicated region
    $region54: #{simulation_nn_ray_forward.1} parent=1 // pred_check
      _
    $region55: #{simulation_nn_ray_forward.1} parent=1 // pred_check_branch
      %156 = sbr.rel (0) target = $region57
    $region56: #{simulation_nn_ray_forward.1} parent=1 // pred_region
      %158 = vsyncadd [#allocation17], 0
      %s160 = sshll.u32 %s13, 4
      %s161 = int_to_ptr.hbm [resolvable:$true] %s160
      %s162 = sshll.u32 [#allocation18], 4
      %s163 = int_to_ptr.vmem [resolvable:$true] %s162
      %165 = dma.hbm_to_vmem [thread:$0]  %s161, 512, %s163, [#allocation17]
    $region57: #{simulation_nn_ray_forward.1} parent=1 // pred_fallthru
      _
    // Predicated region
    $region58: #{simulation_nn_ray_forward.1} parent=1 // pred_check
      _
    $region59: #{simulation_nn_ray_forward.1} parent=1 // pred_check_branch
      %167 = sbr.rel (0) target = $region61
    $region60: #{simulation_nn_ray_forward.1} parent=1 // pred_region
      _
    $region61: #{simulation_nn_ray_forward.1} parent=1 // pred_fallthru
      _
    // Predicated region
    $region62: #{simulation_nn_ray_forward.1} parent=1 // pred_check
      _
    $region63: #{simulation_nn_ray_forward.1} parent=1 // pred_check_branch
      %169 = sbr.rel (0) target = $region65
    $region64: #{simulation_nn_ray_forward.1} parent=1 // pred_region
      _
    $region65: #{simulation_nn_ray_forward.1} parent=1 // pred_fallthru
      _
    // Predicated region
    $region66: #{simulation_nn_ray_forward.1} parent=1 // pred_check
      _
    $region67: #{simulation_nn_ray_forward.1} parent=1 // pred_check_branch
      %171 = sbr.rel (0) target = $region69
    $region68: #{simulation_nn_ray_forward.1} parent=1 // pred_region
      %173 = dma.done [#allocation3], 4096
    $region69: #{simulation_nn_ray_forward.1} parent=1 // pred_fallthru
      _
    // Predicated region
    $region70: #{simulation_nn_ray_forward.1} parent=1 // pred_check
      _
    $region71: #{simulation_nn_ray_forward.1} parent=1 // pred_check_branch
      %175 = sbr.rel (0) target = $region73
    $region72: #{simulation_nn_ray_forward.1} parent=1 // pred_region
      %177 = dma.done [#allocation5], 1024
    $region73: #{simulation_nn_ray_forward.1} parent=1 // pred_fallthru
      _
    // Predicated region
    $region74: #{simulation_nn_ray_forward.1} parent=1 // pred_check
      _
    $region75: #{simulation_nn_ray_forward.1} parent=1 // pred_check_branch
      %179 = sbr.rel (0) target = $region77
    $region76: #{simulation_nn_ray_forward.1} parent=1 // pred_region
      %181 = dma.done [#allocation5], 16384
    $region77: #{simulation_nn_ray_forward.1} parent=1 // pred_fallthru
      _
    // Predicated region
    $region78: #{simulation_nn_ray_forward.1} parent=1 // pred_check
      _
    $region79: #{simulation_nn_ray_forward.1} parent=1 // pred_check_branch
      %183 = sbr.rel (0) target = $region81
    $region80: #{simulation_nn_ray_forward.1} parent=1 // pred_region
      %185 = dma.done [#allocation8], 512
    $region81: #{simulation_nn_ray_forward.1} parent=1 // pred_fallthru
      _
    // Predicated region
    $region82: #{simulation_nn_ray_forward.1} parent=1 // pred_check
      _
    $region83: #{simulation_nn_ray_forward.1} parent=1 // pred_check_branch
      %187 = sbr.rel (0) target = $region85
    $region84: #{simulation_nn_ray_forward.1} parent=1 // pred_region
      %189 = dma.done [#allocation8], 16384
    $region85: #{simulation_nn_ray_forward.1} parent=1 // pred_fallthru
      _
    // Predicated region
    $region86: #{simulation_nn_ray_forward.1} parent=1 // pred_check
      _
    $region87: #{simulation_nn_ray_forward.1} parent=1 // pred_check_branch
      %191 = sbr.rel (0) target = $region89
    $region88: #{simulation_nn_ray_forward.1} parent=1 // pred_region
      %193 = dma.done [#allocation11], 512
    $region89: #{simulation_nn_ray_forward.1} parent=1 // pred_fallthru
      _
    // Predicated region
    $region90: #{simulation_nn_ray_forward.1} parent=1 // pred_check
      _
    $region91: #{simulation_nn_ray_forward.1} parent=1 // pred_check_branch
      %195 = sbr.rel (0) target = $region93
    $region92: #{simulation_nn_ray_forward.1} parent=1 // pred_region
      %197 = dma.done [#allocation11], 4096
    $region93: #{simulation_nn_ray_forward.1} parent=1 // pred_fallthru
      _
    // Predicated region
    $region94: #{simulation_nn_ray_forward.1} parent=1 // pred_check
      _
    $region95: #{simulation_nn_ray_forward.1} parent=1 // pred_check_branch
      %199 = sbr.rel (0) target = $region97
    $region96: #{simulation_nn_ray_forward.1} parent=1 // pred_region
      %201 = dma.done [#allocation14], 16384
    $region97: #{simulation_nn_ray_forward.1} parent=1 // pred_fallthru
      _
    // Predicated region
    $region98: #{simulation_nn_ray_forward.1} parent=1 // pred_check
      _
    $region99: #{simulation_nn_ray_forward.1} parent=1 // pred_check_branch
      %203 = sbr.rel (0) target = $region101
    $region100: #{simulation_nn_ray_forward.1} parent=1 // pred_region
      %205 = dma.done [#allocation14], 512
    $region101: #{simulation_nn_ray_forward.1} parent=1 // pred_fallthru
      _
    // Predicated region
    $region102: #{simulation_nn_ray_forward.1} parent=1 // pred_check
      _
    $region103: #{simulation_nn_ray_forward.1} parent=1 // pred_check_branch
      %207 = sbr.rel (0) target = $region105
    $region104: #{simulation_nn_ray_forward.1} parent=1 // pred_region
      %209 = dma.done [#allocation17], 16384
    $region105: #{simulation_nn_ray_forward.1} parent=1 // pred_fallthru
      _
    // Predicated region
    $region106: #{simulation_nn_ray_forward.1} parent=1 // pred_check
      _
    $region107: #{simulation_nn_ray_forward.1} parent=1 // pred_check_branch
      %211 = sbr.rel (0) target = $region109
    $region108: #{simulation_nn_ray_forward.1} parent=1 // pred_region
      %213 = dma.done [#allocation17], 512
    $region109: #{simulation_nn_ray_forward.1} parent=1 // pred_fallthru
      _
    %v215 = vld [vmem:[%s0] sm:$0xff]
    %v216 = vpack.c.bf16 %v215, %v215
    %v217 = vld [vmem:[#allocation2] sm:$0xff]
    %v218 = vld [vmem:[#allocation2 + $0x8] sm:$0xff]
    %v219 = vld [vmem:[#allocation2 + $0x10] sm:$0xff]
    %v220 = vld [vmem:[#allocation2 + $0x18] sm:$0xff]
    %v221 = vld [vmem:[#allocation2 + $0x20] sm:$0xff]
    %v222 = vld [vmem:[#allocation2 + $0x28] sm:$0xff]
    %v223 = vld [vmem:[#allocation2 + $0x30] sm:$0xff]
    %v224 = vld [vmem:[#allocation2 + $0x38] sm:$0xff]
    %v225 = vld [vmem:[#allocation2 + $0x40] sm:$0xff]
    %v226 = vld [vmem:[#allocation2 + $0x48] sm:$0xff]
    %v227 = vld [vmem:[#allocation2 + $0x50] sm:$0xff]
    %v228 = vld [vmem:[#allocation2 + $0x58] sm:$0xff]
    %v229 = vld [vmem:[#allocation2 + $0x60] sm:$0xff]
    %v230 = vld [vmem:[#allocation2 + $0x68] sm:$0xff]
    %v231 = vld [vmem:[#allocation2 + $0x70] sm:$0xff]
    %v232 = vld [vmem:[#allocation2 + $0x78] sm:$0xff]
    %v233 = vld [vmem:[#allocation2 + $0x80] sm:$0xff]
    %v234 = vld [vmem:[#allocation2 + $0x88] sm:$0xff]
    %v235 = vld [vmem:[#allocation2 + $0x90] sm:$0xff]
    %v236 = vld [vmem:[#allocation2 + $0x98] sm:$0xff]
    %v237 = vld [vmem:[#allocation2 + $0xa0] sm:$0xff]
    %v238 = vld [vmem:[#allocation2 + $0xa8] sm:$0xff]
    %v239 = vld [vmem:[#allocation2 + $0xb0] sm:$0xff]
    %v240 = vld [vmem:[#allocation2 + $0xb8] sm:$0xff]
    %v241 = vld [vmem:[#allocation2 + $0xc0] sm:$0xff]
    %v242 = vld [vmem:[#allocation2 + $0xc8] sm:$0xff]
    %v243 = vld [vmem:[#allocation2 + $0xd0] sm:$0xff]
    %v244 = vld [vmem:[#allocation2 + $0xd8] sm:$0xff]
    %v245 = vld [vmem:[#allocation2 + $0xe0] sm:$0xff]
    %v246 = vld [vmem:[#allocation2 + $0xe8] sm:$0xff]
    %v247 = vld [vmem:[#allocation2 + $0xf0] sm:$0xff]
    %v248 = vld [vmem:[#allocation2 + $0xf8] sm:$0xff]
    %v249 = vld [vmem:[#allocation4] ss:$8 sm:$0xf]
    %v250 = vld [vmem:[#allocation4] ss:$8 sm:$0xf0]
    %v251 = vor.u32 %v249, %v250
    %v253 = vperm.slane %v251, 0
    %v254 = vperm.slane %v251, 1
    %v255 = vperm.slane %v251, 2
    %v256 = vperm.slane %v251, 3
    %v257 = vperm.slane %v251, 4
    %v258 = vperm.slane %v251, 5
    %v259 = vperm.slane %v251, 6
    %v260 = vperm.slane %v251, 7
    %v301 = vunpack.c.l.b16 %v217
    %v302 = vunpack.c.h.b16 %v217
    %v303 = vunpack.c.l.b16 %v218
    %v304 = vunpack.c.h.b16 %v218
    %v305 = vunpack.c.l.b16 %v219
    %v306 = vunpack.c.h.b16 %v219
    %v307 = vunpack.c.l.b16 %v220
    %v308 = vunpack.c.h.b16 %v220
    %v309 = vunpack.c.l.b16 %v221
    %v310 = vunpack.c.h.b16 %v221
    %v311 = vunpack.c.l.b16 %v222
    %v312 = vunpack.c.h.b16 %v222
    %v313 = vunpack.c.l.b16 %v223
    %v314 = vunpack.c.h.b16 %v223
    %v315 = vunpack.c.l.b16 %v224
    %v316 = vunpack.c.h.b16 %v224
    %v317 = vunpack.c.l.b16 %v225
    %v318 = vunpack.c.h.b16 %v225
    %v319 = vunpack.c.l.b16 %v226
    %v320 = vunpack.c.h.b16 %v226
    %v321 = vunpack.c.l.b16 %v227
    %v322 = vunpack.c.h.b16 %v227
    %v323 = vunpack.c.l.b16 %v228
    %v324 = vunpack.c.h.b16 %v228
    %v325 = vunpack.c.l.b16 %v229
    %v326 = vunpack.c.h.b16 %v229
    %v327 = vunpack.c.l.b16 %v230
    %v328 = vunpack.c.h.b16 %v230
    %v329 = vunpack.c.l.b16 %v231
    %v330 = vunpack.c.h.b16 %v231
    %v331 = vunpack.c.l.b16 %v232
    %v332 = vunpack.c.h.b16 %v232
    %v333 = vunpack.c.l.b16 %v233
    %v334 = vunpack.c.h.b16 %v233
    %v335 = vunpack.c.l.b16 %v234
    %v336 = vunpack.c.h.b16 %v234
    %v337 = vunpack.c.l.b16 %v235
    %v338 = vunpack.c.h.b16 %v235
    %v339 = vunpack.c.l.b16 %v236
    %v340 = vunpack.c.h.b16 %v236
    %v341 = vunpack.c.l.b16 %v237
    %v342 = vunpack.c.h.b16 %v237
    %v343 = vunpack.c.l.b16 %v238
    %v344 = vunpack.c.h.b16 %v238
    %v345 = vunpack.c.l.b16 %v239
    %v346 = vunpack.c.h.b16 %v239
    %v347 = vunpack.c.l.b16 %v240
    %v348 = vunpack.c.h.b16 %v240
    %v349 = vunpack.c.l.b16 %v241
    %v350 = vunpack.c.h.b16 %v241
    %v351 = vunpack.c.l.b16 %v242
    %v352 = vunpack.c.h.b16 %v242
    %v353 = vunpack.c.l.b16 %v243
    %v354 = vunpack.c.h.b16 %v243
    %v355 = vunpack.c.l.b16 %v244
    %v356 = vunpack.c.h.b16 %v244
    %v357 = vunpack.c.l.b16 %v245
    %v358 = vunpack.c.h.b16 %v245
    %v359 = vunpack.c.l.b16 %v246
    %v360 = vunpack.c.h.b16 %v246
    %v361 = vunpack.c.l.b16 %v247
    %v362 = vunpack.c.h.b16 %v247
    %v363 = vunpack.c.l.b16 %v248
    %v364 = vunpack.c.h.b16 %v248
    %v365 = vpack.c.b16 %v309, %v301
    %v366 = vpack.c.b16 %v310, %v302
    %v367 = vpack.c.b16 %v311, %v303
    %v368 = vpack.c.b16 %v312, %v304
    %v369 = vpack.c.b16 %v313, %v305
    %v370 = vpack.c.b16 %v314, %v306
    %v371 = vpack.c.b16 %v315, %v307
    %v372 = vpack.c.b16 %v316, %v308
    %v373 = vpack.c.b16 %v325, %v317
    %v374 = vpack.c.b16 %v326, %v318
    %v375 = vpack.c.b16 %v327, %v319
    %v376 = vpack.c.b16 %v328, %v320
    %v377 = vpack.c.b16 %v329, %v321
    %v378 = vpack.c.b16 %v330, %v322
    %v379 = vpack.c.b16 %v331, %v323
    %v380 = vpack.c.b16 %v332, %v324
    %v381 = vpack.c.b16 %v341, %v333
    %v382 = vpack.c.b16 %v342, %v334
    %v383 = vpack.c.b16 %v343, %v335
    %v384 = vpack.c.b16 %v344, %v336
    %v385 = vpack.c.b16 %v345, %v337
    %v386 = vpack.c.b16 %v346, %v338
    %v387 = vpack.c.b16 %v347, %v339
    %v388 = vpack.c.b16 %v348, %v340
    %v389 = vpack.c.b16 %v357, %v349
    %v390 = vpack.c.b16 %v358, %v350
    %v391 = vpack.c.b16 %v359, %v351
    %v392 = vpack.c.b16 %v360, %v352
    %v393 = vpack.c.b16 %v361, %v353
    %v394 = vpack.c.b16 %v362, %v354
    %v395 = vpack.c.b16 %v363, %v355
    %v396 = vpack.c.b16 %v364, %v356
    %vm429 = vcmask 523264
    %v431 = vsel %vm429, %v216, 0
    %433 = vmatpush.bf16.msra.mxu0 0
    %434 = vmatpush.bf16.msra.mxu0 0
    %435 = vmatpush.bf16.msra.mxu0 0
    %436 = vmatpush.bf16.msra.mxu0 0
    %437 = vmatpush.bf16.msra.mxu0 %v389
    %438 = vmatpush.bf16.msra.mxu0 %v381
    %439 = vmatpush.bf16.msra.mxu0 %v373
    %440 = vmatpush.bf16.msra.mxu0 %v365
    %441 = vmatmul.bf16.gmra.mxu0 %v431
    %v442 = vpop.f32.mrf.mxu0
    %v443 = vadd.f32 %v253, %v442
    %v444 = vpop.f32.mrf.mxu0
    %445 = vdwg.mxu0
    %446 = vmatpush.bf16.msra.mxu0 0
    %447 = vmatpush.bf16.msra.mxu0 0
    %448 = vmatpush.bf16.msra.mxu0 0
    %449 = vmatpush.bf16.msra.mxu0 0
    %450 = vmatpush.bf16.msra.mxu0 %v390
    %451 = vmatpush.bf16.msra.mxu0 %v382
    %452 = vmatpush.bf16.msra.mxu0 %v374
    %453 = vmatpush.bf16.msra.mxu0 %v366
    %454 = vmatmul.bf16.gmra.mxu0 %v431
    %v455 = vpop.f32.mrf.mxu0
    %v456 = vadd.f32 %v254, %v455
    %v457 = vpop.f32.mrf.mxu0
    %458 = vdwg.mxu0
    %459 = vmatpush.bf16.msra.mxu0 0
    %460 = vmatpush.bf16.msra.mxu0 0
    %461 = vmatpush.bf16.msra.mxu0 0
    %462 = vmatpush.bf16.msra.mxu0 0
    %463 = vmatpush.bf16.msra.mxu0 %v391
    %464 = vmatpush.bf16.msra.mxu0 %v383
    %465 = vmatpush.bf16.msra.mxu0 %v375
    %466 = vmatpush.bf16.msra.mxu0 %v367
    %467 = vmatmul.bf16.gmra.mxu0 %v431
    %v468 = vpop.f32.mrf.mxu0
    %v469 = vadd.f32 %v255, %v468
    %v470 = vpop.f32.mrf.mxu0
    %471 = vdwg.mxu0
    %472 = vmatpush.bf16.msra.mxu0 0
    %473 = vmatpush.bf16.msra.mxu0 0
    %474 = vmatpush.bf16.msra.mxu0 0
    %475 = vmatpush.bf16.msra.mxu0 0
    %476 = vmatpush.bf16.msra.mxu0 %v392
    %477 = vmatpush.bf16.msra.mxu0 %v384
    %478 = vmatpush.bf16.msra.mxu0 %v376
    %479 = vmatpush.bf16.msra.mxu0 %v368
    %480 = vmatmul.bf16.gmra.mxu0 %v431
    %v481 = vpop.f32.mrf.mxu0
    %v482 = vadd.f32 %v256, %v481
    %v483 = vpop.f32.mrf.mxu0
    %484 = vdwg.mxu0
    %485 = vmatpush.bf16.msra.mxu0 0
    %486 = vmatpush.bf16.msra.mxu0 0
    %487 = vmatpush.bf16.msra.mxu0 0
    %488 = vmatpush.bf16.msra.mxu0 0
    %489 = vmatpush.bf16.msra.mxu0 %v393
    %490 = vmatpush.bf16.msra.mxu0 %v385
    %491 = vmatpush.bf16.msra.mxu0 %v377
    %492 = vmatpush.bf16.msra.mxu0 %v369
    %493 = vmatmul.bf16.gmra.mxu0 %v431
    %v494 = vpop.f32.mrf.mxu0
    %v495 = vadd.f32 %v257, %v494
    %v496 = vpop.f32.mrf.mxu0
    %497 = vdwg.mxu0
    %498 = vmatpush.bf16.msra.mxu0 0
    %499 = vmatpush.bf16.msra.mxu0 0
    %500 = vmatpush.bf16.msra.mxu0 0
    %501 = vmatpush.bf16.msra.mxu0 0
    %502 = vmatpush.bf16.msra.mxu0 %v394
    %503 = vmatpush.bf16.msra.mxu0 %v386
    %504 = vmatpush.bf16.msra.mxu0 %v378
    %505 = vmatpush.bf16.msra.mxu0 %v370
    %506 = vmatmul.bf16.gmra.mxu0 %v431
    %v507 = vpop.f32.mrf.mxu0
    %v508 = vadd.f32 %v258, %v507
    %v509 = vpop.f32.mrf.mxu0
    %510 = vdwg.mxu0
    %511 = vmatpush.bf16.msra.mxu0 0
    %512 = vmatpush.bf16.msra.mxu0 0
    %513 = vmatpush.bf16.msra.mxu0 0
    %514 = vmatpush.bf16.msra.mxu0 0
    %515 = vmatpush.bf16.msra.mxu0 %v395
    %516 = vmatpush.bf16.msra.mxu0 %v387
    %517 = vmatpush.bf16.msra.mxu0 %v379
    %518 = vmatpush.bf16.msra.mxu0 %v371
    %519 = vmatmul.bf16.gmra.mxu0 %v431
    %v520 = vpop.f32.mrf.mxu0
    %v521 = vadd.f32 %v259, %v520
    %v522 = vpop.f32.mrf.mxu0
    %523 = vdwg.mxu0
    %524 = vmatpush.bf16.msra.mxu0 0
    %525 = vmatpush.bf16.msra.mxu0 0
    %526 = vmatpush.bf16.msra.mxu0 0
    %527 = vmatpush.bf16.msra.mxu0 0
    %528 = vmatpush.bf16.msra.mxu0 %v396
    %529 = vmatpush.bf16.msra.mxu0 %v388
    %530 = vmatpush.bf16.msra.mxu0 %v380
    %531 = vmatpush.bf16.msra.mxu0 %v372
    %532 = vmatmul.bf16.gmra.mxu0 %v431
    %v533 = vpop.f32.mrf.mxu0
    %v534 = vadd.f32 %v260, %v533
    %v535 = vpop.f32.mrf.mxu0
    %536 = vdwg.mxu0
    %s537 = scalar_lea.vmem [#allocation4], 1
    %v538 = vld [vmem:[%s537] ss:$8 sm:$0xf]
    %v539 = vld [vmem:[%s537] ss:$8 sm:$0xf0]
    %v540 = vor.u32 %v538, %v539
    %542 = vset.pattern.permute.xlu0 0
    %543 = vperm.xlu0 %542, %v215
    %v544 = vpop.permute.xlu0 %543
    %v547 = vperm.slane %v540, 0
    %v548 = vperm.slane %v540, 1
    %v549 = vperm.slane %v540, 2
    %v550 = vperm.slane %v540, 3
    %v551 = vperm.slane %v540, 4
    %v552 = vperm.slane %v540, 5
    %v553 = vperm.slane %v540, 6
    %v554 = vperm.slane %v540, 7
    %v563 = vmul.f32 %v544, %v547
    %v564 = vmul.f32 %v544, %v548
    %v565 = vmul.f32 %v544, %v549
    %v566 = vmul.f32 %v544, %v550
    %v567 = vmul.f32 %v544, %v551
    %v568 = vmul.f32 %v544, %v552
    %v569 = vmul.f32 %v544, %v553
    %v570 = vmul.f32 %v544, %v554
    %s571 = scalar_lea.vmem [#allocation4], 2
    %v572 = vld [vmem:[%s571] ss:$8 sm:$0xf]
    %v573 = vld [vmem:[%s571] ss:$8 sm:$0xf0]
    %v574 = vor.u32 %v572, %v573
    %v576 = vperm.slane %v574, 0
    %v577 = vperm.slane %v574, 1
    %v578 = vperm.slane %v574, 2
    %v579 = vperm.slane %v574, 3
    %v580 = vperm.slane %v574, 4
    %v581 = vperm.slane %v574, 5
    %v582 = vperm.slane %v574, 6
    %v583 = vperm.slane %v574, 7
    %v592 = vadd.f32 %v563, %v576
    %v593 = vadd.f32 %v564, %v577
    %v594 = vadd.f32 %v565, %v578
    %v595 = vadd.f32 %v566, %v579
    %v596 = vadd.f32 %v567, %v580
    %v597 = vadd.f32 %v568, %v581
    %v598 = vadd.f32 %v569, %v582
    %v599 = vadd.f32 %v570, %v583
    %s600 = scalar_lea.vmem [#allocation4], 3
    %v601 = vld [vmem:[%s600] ss:$8 sm:$0xf]
    %v602 = vld [vmem:[%s600] ss:$8 sm:$0xf0]
    %v603 = vor.u32 %v601, %v602
    %v605 = vperm.slane %v603, 0
    %v606 = vperm.slane %v603, 1
    %v607 = vperm.slane %v603, 2
    %v608 = vperm.slane %v603, 3
    %v609 = vperm.slane %v603, 4
    %v610 = vperm.slane %v603, 5
    %v611 = vperm.slane %v603, 6
    %v612 = vperm.slane %v603, 7
    %v621 = vmul.f32 %v544, %v605
    %v622 = vmul.f32 %v544, %v606
    %v623 = vmul.f32 %v544, %v607
    %v624 = vmul.f32 %v544, %v608
    %v625 = vmul.f32 %v544, %v609
    %v626 = vmul.f32 %v544, %v610
    %v627 = vmul.f32 %v544, %v611
    %v628 = vmul.f32 %v544, %v612
    %s629 = scalar_lea.vmem [#allocation4], 4
    %v630 = vld [vmem:[%s629] ss:$8 sm:$0xf]
    %v631 = vld [vmem:[%s629] ss:$8 sm:$0xf0]
    %v632 = vor.u32 %v630, %v631
    %v634 = vperm.slane %v632, 0
    %v635 = vperm.slane %v632, 1
    %v636 = vperm.slane %v632, 2
    %v637 = vperm.slane %v632, 3
    %v638 = vperm.slane %v632, 4
    %v639 = vperm.slane %v632, 5
    %v640 = vperm.slane %v632, 6
    %v641 = vperm.slane %v632, 7
    %v650 = vadd.f32 %v621, %v634
    %v651 = vadd.f32 %v622, %v635
    %v652 = vadd.f32 %v623, %v636
    %v653 = vadd.f32 %v624, %v637
    %v654 = vadd.f32 %v625, %v638
    %v655 = vadd.f32 %v626, %v639
    %v656 = vadd.f32 %v627, %v640
    %v657 = vadd.f32 %v628, %v641
    %v658 = vmul.f32 %v592, %v443
    %v659 = vmul.f32 %v593, %v456
    %v660 = vmul.f32 %v594, %v469
    %v661 = vmul.f32 %v595, %v482
    %v662 = vmul.f32 %v596, %v495
    %v663 = vmul.f32 %v597, %v508
    %v664 = vmul.f32 %v598, %v521
    %v665 = vmul.f32 %v599, %v534
    %v666 = vadd.f32 %v658, %v650
    %v667 = vadd.f32 %v659, %v651
    %v668 = vadd.f32 %v660, %v652
    %v669 = vadd.f32 %v661, %v653
    %v670 = vadd.f32 %v662, %v654
    %v671 = vadd.f32 %v663, %v655
    %v672 = vadd.f32 %v664, %v656
    %v673 = vadd.f32 %v665, %v657
    %v674 = vmax.f32 %v666, 0.0
    %v675 = vmax.f32 %v667, 0.0
    %v676 = vmax.f32 %v668, 0.0
    %v677 = vmax.f32 %v669, 0.0
    %v678 = vmax.f32 %v670, 0.0
    %v679 = vmax.f32 %v671, 0.0
    %v680 = vmax.f32 %v672, 0.0
    %v681 = vmax.f32 %v673, 0.0
    %v682 = vpack.c.bf16 %v674, %v674
    %v683 = vpack.c.bf16 %v675, %v675
    %v684 = vpack.c.bf16 %v676, %v676
    %v685 = vpack.c.bf16 %v677, %v677
    %v686 = vld [vmem:[#allocation6] sm:$0xff]
    %v687 = vld [vmem:[#allocation6 + $0x8] sm:$0xff]
    %v688 = vld [vmem:[#allocation6 + $0x10] sm:$0xff]
    %v689 = vld [vmem:[#allocation6 + $0x18] sm:$0xff]
    %v690 = vld [vmem:[#allocation6 + $0x20] sm:$0xff]
    %v691 = vld [vmem:[#allocation6 + $0x28] sm:$0xff]
    %v692 = vld [vmem:[#allocation6 + $0x30] sm:$0xff]
    %v693 = vld [vmem:[#allocation6 + $0x38] sm:$0xff]
    %v694 = vld [vmem:[#allocation6 + $0x40] sm:$0xff]
    %v695 = vld [vmem:[#allocation6 + $0x48] sm:$0xff]
    %v696 = vld [vmem:[#allocation6 + $0x50] sm:$0xff]
    %v697 = vld [vmem:[#allocation6 + $0x58] sm:$0xff]
    %v698 = vld [vmem:[#allocation6 + $0x60] sm:$0xff]
    %v699 = vld [vmem:[#allocation6 + $0x68] sm:$0xff]
    %v700 = vld [vmem:[#allocation6 + $0x70] sm:$0xff]
    %v701 = vld [vmem:[#allocation6 + $0x78] sm:$0xff]
    %v702 = vld [vmem:[#allocation6 + $0x80] sm:$0xff]
    %v703 = vld [vmem:[#allocation6 + $0x88] sm:$0xff]
    %v704 = vld [vmem:[#allocation6 + $0x90] sm:$0xff]
    %v705 = vld [vmem:[#allocation6 + $0x98] sm:$0xff]
    %v706 = vld [vmem:[#allocation6 + $0xa0] sm:$0xff]
    %v707 = vld [vmem:[#allocation6 + $0xa8] sm:$0xff]
    %v708 = vld [vmem:[#allocation6 + $0xb0] sm:$0xff]
    %v709 = vld [vmem:[#allocation6 + $0xb8] sm:$0xff]
    %v710 = vld [vmem:[#allocation6 + $0xc0] sm:$0xff]
    %v711 = vld [vmem:[#allocation6 + $0xc8] sm:$0xff]
    %v712 = vld [vmem:[#allocation6 + $0xd0] sm:$0xff]
    %v713 = vld [vmem:[#allocation6 + $0xd8] sm:$0xff]
    %v714 = vld [vmem:[#allocation6 + $0xe0] sm:$0xff]
    %v715 = vld [vmem:[#allocation6 + $0xe8] sm:$0xff]
    %v716 = vld [vmem:[#allocation6 + $0xf0] sm:$0xff]
    %v717 = vld [vmem:[#allocation6 + $0xf8] sm:$0xff]
    %v718 = vld [vmem:[#allocation6 + $0x100] sm:$0xff]
    %v719 = vld [vmem:[#allocation6 + $0x108] sm:$0xff]
    %v720 = vld [vmem:[#allocation6 + $0x110] sm:$0xff]
    %v721 = vld [vmem:[#allocation6 + $0x118] sm:$0xff]
    %v722 = vld [vmem:[#allocation6 + $0x120] sm:$0xff]
    %v723 = vld [vmem:[#allocation6 + $0x128] sm:$0xff]
    %v724 = vld [vmem:[#allocation6 + $0x130] sm:$0xff]
    %v725 = vld [vmem:[#allocation6 + $0x138] sm:$0xff]
    %v726 = vld [vmem:[#allocation6 + $0x140] sm:$0xff]
    %v727 = vld [vmem:[#allocation6 + $0x148] sm:$0xff]
    %v728 = vld [vmem:[#allocation6 + $0x150] sm:$0xff]
    %v729 = vld [vmem:[#allocation6 + $0x158] sm:$0xff]
    %v730 = vld [vmem:[#allocation6 + $0x160] sm:$0xff]
    %v731 = vld [vmem:[#allocation6 + $0x168] sm:$0xff]
    %v732 = vld [vmem:[#allocation6 + $0x170] sm:$0xff]
    %v733 = vld [vmem:[#allocation6 + $0x178] sm:$0xff]
    %v734 = vld [vmem:[#allocation6 + $0x180] sm:$0xff]
    %v735 = vld [vmem:[#allocation6 + $0x188] sm:$0xff]
    %v736 = vld [vmem:[#allocation6 + $0x190] sm:$0xff]
    %v737 = vld [vmem:[#allocation6 + $0x198] sm:$0xff]
    %v738 = vld [vmem:[#allocation6 + $0x1a0] sm:$0xff]
    %v739 = vld [vmem:[#allocation6 + $0x1a8] sm:$0xff]
    %v740 = vld [vmem:[#allocation6 + $0x1b0] sm:$0xff]
    %v741 = vld [vmem:[#allocation6 + $0x1b8] sm:$0xff]
    %v742 = vld [vmem:[#allocation6 + $0x1c0] sm:$0xff]
    %v743 = vld [vmem:[#allocation6 + $0x1c8] sm:$0xff]
    %v744 = vld [vmem:[#allocation6 + $0x1d0] sm:$0xff]
    %v745 = vld [vmem:[#allocation6 + $0x1d8] sm:$0xff]
    %v746 = vld [vmem:[#allocation6 + $0x1e0] sm:$0xff]
    %v747 = vld [vmem:[#allocation6 + $0x1e8] sm:$0xff]
    %v748 = vld [vmem:[#allocation6 + $0x1f0] sm:$0xff]
    %v749 = vld [vmem:[#allocation6 + $0x1f8] sm:$0xff]
    %v750 = vld [vmem:[#allocation6 + $0x200] sm:$0xff]
    %v751 = vld [vmem:[#allocation6 + $0x208] sm:$0xff]
    %v752 = vld [vmem:[#allocation6 + $0x210] sm:$0xff]
    %v753 = vld [vmem:[#allocation6 + $0x218] sm:$0xff]
    %v754 = vld [vmem:[#allocation6 + $0x220] sm:$0xff]
    %v755 = vld [vmem:[#allocation6 + $0x228] sm:$0xff]
    %v756 = vld [vmem:[#allocation6 + $0x230] sm:$0xff]
    %v757 = vld [vmem:[#allocation6 + $0x238] sm:$0xff]
    %v758 = vld [vmem:[#allocation6 + $0x240] sm:$0xff]
    %v759 = vld [vmem:[#allocation6 + $0x248] sm:$0xff]
    %v760 = vld [vmem:[#allocation6 + $0x250] sm:$0xff]
    %v761 = vld [vmem:[#allocation6 + $0x258] sm:$0xff]
    %v762 = vld [vmem:[#allocation6 + $0x260] sm:$0xff]
    %v763 = vld [vmem:[#allocation6 + $0x268] sm:$0xff]
    %v764 = vld [vmem:[#allocation6 + $0x270] sm:$0xff]
    %v765 = vld [vmem:[#allocation6 + $0x278] sm:$0xff]
    %v766 = vld [vmem:[#allocation6 + $0x280] sm:$0xff]
    %v767 = vld [vmem:[#allocation6 + $0x288] sm:$0xff]
    %v768 = vld [vmem:[#allocation6 + $0x290] sm:$0xff]
    %v769 = vld [vmem:[#allocation6 + $0x298] sm:$0xff]
    %v770 = vld [vmem:[#allocation6 + $0x2a0] sm:$0xff]
    %v771 = vld [vmem:[#allocation6 + $0x2a8] sm:$0xff]
    %v772 = vld [vmem:[#allocation6 + $0x2b0] sm:$0xff]
    %v773 = vld [vmem:[#allocation6 + $0x2b8] sm:$0xff]
    %v774 = vld [vmem:[#allocation6 + $0x2c0] sm:$0xff]
    %v775 = vld [vmem:[#allocation6 + $0x2c8] sm:$0xff]
    %v776 = vld [vmem:[#allocation6 + $0x2d0] sm:$0xff]
    %v777 = vld [vmem:[#allocation6 + $0x2d8] sm:$0xff]
    %v778 = vld [vmem:[#allocation6 + $0x2e0] sm:$0xff]
    %v779 = vld [vmem:[#allocation6 + $0x2e8] sm:$0xff]
    %v780 = vld [vmem:[#allocation6 + $0x2f0] sm:$0xff]
    %v781 = vld [vmem:[#allocation6 + $0x2f8] sm:$0xff]
    %v782 = vld [vmem:[#allocation6 + $0x300] sm:$0xff]
    %v783 = vld [vmem:[#allocation6 + $0x308] sm:$0xff]
    %v784 = vld [vmem:[#allocation6 + $0x310] sm:$0xff]
    %v785 = vld [vmem:[#allocation6 + $0x318] sm:$0xff]
    %v786 = vld [vmem:[#allocation6 + $0x320] sm:$0xff]
    %v787 = vld [vmem:[#allocation6 + $0x328] sm:$0xff]
    %v788 = vld [vmem:[#allocation6 + $0x330] sm:$0xff]
    %v789 = vld [vmem:[#allocation6 + $0x338] sm:$0xff]
    %v790 = vld [vmem:[#allocation6 + $0x340] sm:$0xff]
    %v791 = vld [vmem:[#allocation6 + $0x348] sm:$0xff]
    %v792 = vld [vmem:[#allocation6 + $0x350] sm:$0xff]
    %v793 = vld [vmem:[#allocation6 + $0x358] sm:$0xff]
    %v794 = vld [vmem:[#allocation6 + $0x360] sm:$0xff]
    %v795 = vld [vmem:[#allocation6 + $0x368] sm:$0xff]
    %v796 = vld [vmem:[#allocation6 + $0x370] sm:$0xff]
    %v797 = vld [vmem:[#allocation6 + $0x378] sm:$0xff]
    %v798 = vld [vmem:[#allocation6 + $0x380] sm:$0xff]
    %v799 = vld [vmem:[#allocation6 + $0x388] sm:$0xff]
    %v800 = vld [vmem:[#allocation6 + $0x390] sm:$0xff]
    %v801 = vld [vmem:[#allocation6 + $0x398] sm:$0xff]
    %v802 = vld [vmem:[#allocation6 + $0x3a0] sm:$0xff]
    %v803 = vld [vmem:[#allocation6 + $0x3a8] sm:$0xff]
    %v804 = vld [vmem:[#allocation6 + $0x3b0] sm:$0xff]
    %v805 = vld [vmem:[#allocation6 + $0x3b8] sm:$0xff]
    %v806 = vld [vmem:[#allocation6 + $0x3c0] sm:$0xff]
    %v807 = vld [vmem:[#allocation6 + $0x3c8] sm:$0xff]
    %v808 = vld [vmem:[#allocation6 + $0x3d0] sm:$0xff]
    %v809 = vld [vmem:[#allocation6 + $0x3d8] sm:$0xff]
    %v810 = vld [vmem:[#allocation6 + $0x3e0] sm:$0xff]
    %v811 = vld [vmem:[#allocation6 + $0x3e8] sm:$0xff]
    %v812 = vld [vmem:[#allocation6 + $0x3f0] sm:$0xff]
    %v813 = vld [vmem:[#allocation6 + $0x3f8] sm:$0xff]
    %v814 = vld [vmem:[#allocation7] ss:$8 sm:$0xf]
    %v816 = vperm.slane %v814, 0
    %v817 = vperm.slane %v814, 1
    %v818 = vperm.slane %v814, 2
    %v819 = vperm.slane %v814, 3
    %v952 = vunpack.c.l.b16 %v686
    %v953 = vunpack.c.h.b16 %v686
    %v954 = vunpack.c.l.b16 %v687
    %v955 = vunpack.c.h.b16 %v687
    %v956 = vunpack.c.l.b16 %v688
    %v957 = vunpack.c.h.b16 %v688
    %v958 = vunpack.c.l.b16 %v689
    %v959 = vunpack.c.h.b16 %v689
    %v960 = vunpack.c.l.b16 %v690
    %v961 = vunpack.c.h.b16 %v690
    %v962 = vunpack.c.l.b16 %v691
    %v963 = vunpack.c.h.b16 %v691
    %v964 = vunpack.c.l.b16 %v692
    %v965 = vunpack.c.h.b16 %v692
    %v966 = vunpack.c.l.b16 %v693
    %v967 = vunpack.c.h.b16 %v693
    %v968 = vunpack.c.l.b16 %v694
    %v969 = vunpack.c.h.b16 %v694
    %v970 = vunpack.c.l.b16 %v695
    %v971 = vunpack.c.h.b16 %v695
    %v972 = vunpack.c.l.b16 %v696
    %v973 = vunpack.c.h.b16 %v696
    %v974 = vunpack.c.l.b16 %v697
    %v975 = vunpack.c.h.b16 %v697
    %v976 = vunpack.c.l.b16 %v698
    %v977 = vunpack.c.h.b16 %v698
    %v978 = vunpack.c.l.b16 %v699
    %v979 = vunpack.c.h.b16 %v699
    %v980 = vunpack.c.l.b16 %v700
    %v981 = vunpack.c.h.b16 %v700
    %v982 = vunpack.c.l.b16 %v701
    %v983 = vunpack.c.h.b16 %v701
    %v984 = vunpack.c.l.b16 %v702
    %v985 = vunpack.c.h.b16 %v702
    %v986 = vunpack.c.l.b16 %v703
    %v987 = vunpack.c.h.b16 %v703
    %v988 = vunpack.c.l.b16 %v704
    %v989 = vunpack.c.h.b16 %v704
    %v990 = vunpack.c.l.b16 %v705
    %v991 = vunpack.c.h.b16 %v705
    %v992 = vunpack.c.l.b16 %v706
    %v993 = vunpack.c.h.b16 %v706
    %v994 = vunpack.c.l.b16 %v707
    %v995 = vunpack.c.h.b16 %v707
    %v996 = vunpack.c.l.b16 %v708
    %v997 = vunpack.c.h.b16 %v708
    %v998 = vunpack.c.l.b16 %v709
    %v999 = vunpack.c.h.b16 %v709
    %v1000 = vunpack.c.l.b16 %v710
    %v1001 = vunpack.c.h.b16 %v710
    %v1002 = vunpack.c.l.b16 %v711
    %v1003 = vunpack.c.h.b16 %v711
    %v1004 = vunpack.c.l.b16 %v712
    %v1005 = vunpack.c.h.b16 %v712
    %v1006 = vunpack.c.l.b16 %v713
    %v1007 = vunpack.c.h.b16 %v713
    %v1008 = vunpack.c.l.b16 %v714
    %v1009 = vunpack.c.h.b16 %v714
    %v1010 = vunpack.c.l.b16 %v715
    %v1011 = vunpack.c.h.b16 %v715
    %v1012 = vunpack.c.l.b16 %v716
    %v1013 = vunpack.c.h.b16 %v716
    %v1014 = vunpack.c.l.b16 %v717
    %v1015 = vunpack.c.h.b16 %v717
    %v1016 = vunpack.c.l.b16 %v718
    %v1017 = vunpack.c.h.b16 %v718
    %v1018 = vunpack.c.l.b16 %v719
    %v1019 = vunpack.c.h.b16 %v719
    %v1020 = vunpack.c.l.b16 %v720
    %v1021 = vunpack.c.h.b16 %v720
    %v1022 = vunpack.c.l.b16 %v721
    %v1023 = vunpack.c.h.b16 %v721
    %v1024 = vunpack.c.l.b16 %v722
    %v1025 = vunpack.c.h.b16 %v722
    %v1026 = vunpack.c.l.b16 %v723
    %v1027 = vunpack.c.h.b16 %v723
    %v1028 = vunpack.c.l.b16 %v724
    %v1029 = vunpack.c.h.b16 %v724
    %v1030 = vunpack.c.l.b16 %v725
    %v1031 = vunpack.c.h.b16 %v725
    %v1032 = vunpack.c.l.b16 %v726
    %v1033 = vunpack.c.h.b16 %v726
    %v1034 = vunpack.c.l.b16 %v727
    %v1035 = vunpack.c.h.b16 %v727
    %v1036 = vunpack.c.l.b16 %v728
    %v1037 = vunpack.c.h.b16 %v728
    %v1038 = vunpack.c.l.b16 %v729
    %v1039 = vunpack.c.h.b16 %v729
    %v1040 = vunpack.c.l.b16 %v730
    %v1041 = vunpack.c.h.b16 %v730
    %v1042 = vunpack.c.l.b16 %v731
    %v1043 = vunpack.c.h.b16 %v731
    %v1044 = vunpack.c.l.b16 %v732
    %v1045 = vunpack.c.h.b16 %v732
    %v1046 = vunpack.c.l.b16 %v733
    %v1047 = vunpack.c.h.b16 %v733
    %v1048 = vunpack.c.l.b16 %v734
    %v1049 = vunpack.c.h.b16 %v734
    %v1050 = vunpack.c.l.b16 %v735
    %v1051 = vunpack.c.h.b16 %v735
    %v1052 = vunpack.c.l.b16 %v736
    %v1053 = vunpack.c.h.b16 %v736
    %v1054 = vunpack.c.l.b16 %v737
    %v1055 = vunpack.c.h.b16 %v737
    %v1056 = vunpack.c.l.b16 %v738
    %v1057 = vunpack.c.h.b16 %v738
    %v1058 = vunpack.c.l.b16 %v739
    %v1059 = vunpack.c.h.b16 %v739
    %v1060 = vunpack.c.l.b16 %v740
    %v1061 = vunpack.c.h.b16 %v740
    %v1062 = vunpack.c.l.b16 %v741
    %v1063 = vunpack.c.h.b16 %v741
    %v1064 = vunpack.c.l.b16 %v742
    %v1065 = vunpack.c.h.b16 %v742
    %v1066 = vunpack.c.l.b16 %v743
    %v1067 = vunpack.c.h.b16 %v743
    %v1068 = vunpack.c.l.b16 %v744
    %v1069 = vunpack.c.h.b16 %v744
    %v1070 = vunpack.c.l.b16 %v745
    %v1071 = vunpack.c.h.b16 %v745
    %v1072 = vunpack.c.l.b16 %v746
    %v1073 = vunpack.c.h.b16 %v746
    %v1074 = vunpack.c.l.b16 %v747
    %v1075 = vunpack.c.h.b16 %v747
    %v1076 = vunpack.c.l.b16 %v748
    %v1077 = vunpack.c.h.b16 %v748
    %v1078 = vunpack.c.l.b16 %v749
    %v1079 = vunpack.c.h.b16 %v749
    %v1080 = vunpack.c.l.b16 %v750
    %v1081 = vunpack.c.h.b16 %v750
    %v1082 = vunpack.c.l.b16 %v751
    %v1083 = vunpack.c.h.b16 %v751
    %v1084 = vunpack.c.l.b16 %v752
    %v1085 = vunpack.c.h.b16 %v752
    %v1086 = vunpack.c.l.b16 %v753
    %v1087 = vunpack.c.h.b16 %v753
    %v1088 = vunpack.c.l.b16 %v754
    %v1089 = vunpack.c.h.b16 %v754
    %v1090 = vunpack.c.l.b16 %v755
    %v1091 = vunpack.c.h.b16 %v755
    %v1092 = vunpack.c.l.b16 %v756
    %v1093 = vunpack.c.h.b16 %v756
    %v1094 = vunpack.c.l.b16 %v757
    %v1095 = vunpack.c.h.b16 %v757
    %v1096 = vunpack.c.l.b16 %v758
    %v1097 = vunpack.c.h.b16 %v758
    %v1098 = vunpack.c.l.b16 %v759
    %v1099 = vunpack.c.h.b16 %v759
    %v1100 = vunpack.c.l.b16 %v760
    %v1101 = vunpack.c.h.b16 %v760
    %v1102 = vunpack.c.l.b16 %v761
    %v1103 = vunpack.c.h.b16 %v761
    %v1104 = vunpack.c.l.b16 %v762
    %v1105 = vunpack.c.h.b16 %v762
    %v1106 = vunpack.c.l.b16 %v763
    %v1107 = vunpack.c.h.b16 %v763
    %v1108 = vunpack.c.l.b16 %v764
    %v1109 = vunpack.c.h.b16 %v764
    %v1110 = vunpack.c.l.b16 %v765
    %v1111 = vunpack.c.h.b16 %v765
    %v1112 = vunpack.c.l.b16 %v766
    %v1113 = vunpack.c.h.b16 %v766
    %v1114 = vunpack.c.l.b16 %v767
    %v1115 = vunpack.c.h.b16 %v767
    %v1116 = vunpack.c.l.b16 %v768
    %v1117 = vunpack.c.h.b16 %v768
    %v1118 = vunpack.c.l.b16 %v769
    %v1119 = vunpack.c.h.b16 %v769
    %v1120 = vunpack.c.l.b16 %v770
    %v1121 = vunpack.c.h.b16 %v770
    %v1122 = vunpack.c.l.b16 %v771
    %v1123 = vunpack.c.h.b16 %v771
    %v1124 = vunpack.c.l.b16 %v772
    %v1125 = vunpack.c.h.b16 %v772
    %v1126 = vunpack.c.l.b16 %v773
    %v1127 = vunpack.c.h.b16 %v773
    %v1128 = vunpack.c.l.b16 %v774
    %v1129 = vunpack.c.h.b16 %v774
    %v1130 = vunpack.c.l.b16 %v775
    %v1131 = vunpack.c.h.b16 %v775
    %v1132 = vunpack.c.l.b16 %v776
    %v1133 = vunpack.c.h.b16 %v776
    %v1134 = vunpack.c.l.b16 %v777
    %v1135 = vunpack.c.h.b16 %v777
    %v1136 = vunpack.c.l.b16 %v778
    %v1137 = vunpack.c.h.b16 %v778
    %v1138 = vunpack.c.l.b16 %v779
    %v1139 = vunpack.c.h.b16 %v779
    %v1140 = vunpack.c.l.b16 %v780
    %v1141 = vunpack.c.h.b16 %v780
    %v1142 = vunpack.c.l.b16 %v781
    %v1143 = vunpack.c.h.b16 %v781
    %v1144 = vunpack.c.l.b16 %v782
    %v1145 = vunpack.c.h.b16 %v782
    %v1146 = vunpack.c.l.b16 %v783
    %v1147 = vunpack.c.h.b16 %v783
    %v1148 = vunpack.c.l.b16 %v784
    %v1149 = vunpack.c.h.b16 %v784
    %v1150 = vunpack.c.l.b16 %v785
    %v1151 = vunpack.c.h.b16 %v785
    %v1152 = vunpack.c.l.b16 %v786
    %v1153 = vunpack.c.h.b16 %v786
    %v1154 = vunpack.c.l.b16 %v787
    %v1155 = vunpack.c.h.b16 %v787
    %v1156 = vunpack.c.l.b16 %v788
    %v1157 = vunpack.c.h.b16 %v788
    %v1158 = vunpack.c.l.b16 %v789
    %v1159 = vunpack.c.h.b16 %v789
    %v1160 = vunpack.c.l.b16 %v790
    %v1161 = vunpack.c.h.b16 %v790
    %v1162 = vunpack.c.l.b16 %v791
    %v1163 = vunpack.c.h.b16 %v791
    %v1164 = vunpack.c.l.b16 %v792
    %v1165 = vunpack.c.h.b16 %v792
    %v1166 = vunpack.c.l.b16 %v793
    %v1167 = vunpack.c.h.b16 %v793
    %v1168 = vunpack.c.l.b16 %v794
    %v1169 = vunpack.c.h.b16 %v794
    %v1170 = vunpack.c.l.b16 %v795
    %v1171 = vunpack.c.h.b16 %v795
    %v1172 = vunpack.c.l.b16 %v796
    %v1173 = vunpack.c.h.b16 %v796
    %v1174 = vunpack.c.l.b16 %v797
    %v1175 = vunpack.c.h.b16 %v797
    %v1176 = vunpack.c.l.b16 %v798
    %v1177 = vunpack.c.h.b16 %v798
    %v1178 = vunpack.c.l.b16 %v799
    %v1179 = vunpack.c.h.b16 %v799
    %v1180 = vunpack.c.l.b16 %v800
    %v1181 = vunpack.c.h.b16 %v800
    %v1182 = vunpack.c.l.b16 %v801
    %v1183 = vunpack.c.h.b16 %v801
    %v1184 = vunpack.c.l.b16 %v802
    %v1185 = vunpack.c.h.b16 %v802
    %v1186 = vunpack.c.l.b16 %v803
    %v1187 = vunpack.c.h.b16 %v803
    %v1188 = vunpack.c.l.b16 %v804
    %v1189 = vunpack.c.h.b16 %v804
    %v1190 = vunpack.c.l.b16 %v805
    %v1191 = vunpack.c.h.b16 %v805
    %v1192 = vunpack.c.l.b16 %v806
    %v1193 = vunpack.c.h.b16 %v806
    %v1194 = vunpack.c.l.b16 %v807
    %v1195 = vunpack.c.h.b16 %v807
    %v1196 = vunpack.c.l.b16 %v808
    %v1197 = vunpack.c.h.b16 %v808
    %v1198 = vunpack.c.l.b16 %v809
    %v1199 = vunpack.c.h.b16 %v809
    %v1200 = vunpack.c.l.b16 %v810
    %v1201 = vunpack.c.h.b16 %v810
    %v1202 = vunpack.c.l.b16 %v811
    %v1203 = vunpack.c.h.b16 %v811
    %v1204 = vunpack.c.l.b16 %v812
    %v1205 = vunpack.c.h.b16 %v812
    %v1206 = vunpack.c.l.b16 %v813
    %v1207 = vunpack.c.h.b16 %v813
    %v1208 = vpack.c.b16 %v956, %v952
    %v1209 = vpack.c.b16 %v957, %v953
    %v1210 = vpack.c.b16 %v958, %v954
    %v1211 = vpack.c.b16 %v959, %v955
    %v1212 = vpack.c.b16 %v964, %v960
    %v1213 = vpack.c.b16 %v965, %v961
    %v1214 = vpack.c.b16 %v966, %v962
    %v1215 = vpack.c.b16 %v967, %v963
    %v1216 = vpack.c.b16 %v972, %v968
    %v1217 = vpack.c.b16 %v973, %v969
    %v1218 = vpack.c.b16 %v974, %v970
    %v1219 = vpack.c.b16 %v975, %v971
    %v1220 = vpack.c.b16 %v980, %v976
    %v1221 = vpack.c.b16 %v981, %v977
    %v1222 = vpack.c.b16 %v982, %v978
    %v1223 = vpack.c.b16 %v983, %v979
    %v1224 = vpack.c.b16 %v988, %v984
    %v1225 = vpack.c.b16 %v989, %v985
    %v1226 = vpack.c.b16 %v990, %v986
    %v1227 = vpack.c.b16 %v991, %v987
    %v1228 = vpack.c.b16 %v996, %v992
    %v1229 = vpack.c.b16 %v997, %v993
    %v1230 = vpack.c.b16 %v998, %v994
    %v1231 = vpack.c.b16 %v999, %v995
    %v1232 = vpack.c.b16 %v1004, %v1000
    %v1233 = vpack.c.b16 %v1005, %v1001
    %v1234 = vpack.c.b16 %v1006, %v1002
    %v1235 = vpack.c.b16 %v1007, %v1003
    %v1236 = vpack.c.b16 %v1012, %v1008
    %v1237 = vpack.c.b16 %v1013, %v1009
    %v1238 = vpack.c.b16 %v1014, %v1010
    %v1239 = vpack.c.b16 %v1015, %v1011
    %v1240 = vpack.c.b16 %v1020, %v1016
    %v1241 = vpack.c.b16 %v1021, %v1017
    %v1242 = vpack.c.b16 %v1022, %v1018
    %v1243 = vpack.c.b16 %v1023, %v1019
    %v1244 = vpack.c.b16 %v1028, %v1024
    %v1245 = vpack.c.b16 %v1029, %v1025
    %v1246 = vpack.c.b16 %v1030, %v1026
    %v1247 = vpack.c.b16 %v1031, %v1027
    %v1248 = vpack.c.b16 %v1036, %v1032
    %v1249 = vpack.c.b16 %v1037, %v1033
    %v1250 = vpack.c.b16 %v1038, %v1034
    %v1251 = vpack.c.b16 %v1039, %v1035
    %v1252 = vpack.c.b16 %v1044, %v1040
    %v1253 = vpack.c.b16 %v1045, %v1041
    %v1254 = vpack.c.b16 %v1046, %v1042
    %v1255 = vpack.c.b16 %v1047, %v1043
    %v1256 = vpack.c.b16 %v1052, %v1048
    %v1257 = vpack.c.b16 %v1053, %v1049
    %v1258 = vpack.c.b16 %v1054, %v1050
    %v1259 = vpack.c.b16 %v1055, %v1051
    %v1260 = vpack.c.b16 %v1060, %v1056
    %v1261 = vpack.c.b16 %v1061, %v1057
    %v1262 = vpack.c.b16 %v1062, %v1058
    %v1263 = vpack.c.b16 %v1063, %v1059
    %v1264 = vpack.c.b16 %v1068, %v1064
    %v1265 = vpack.c.b16 %v1069, %v1065
    %v1266 = vpack.c.b16 %v1070, %v1066
    %v1267 = vpack.c.b16 %v1071, %v1067
    %v1268 = vpack.c.b16 %v1076, %v1072
    %v1269 = vpack.c.b16 %v1077, %v1073
    %v1270 = vpack.c.b16 %v1078, %v1074
    %v1271 = vpack.c.b16 %v1079, %v1075
    %v1272 = vpack.c.b16 %v1084, %v1080
    %v1273 = vpack.c.b16 %v1085, %v1081
    %v1274 = vpack.c.b16 %v1086, %v1082
    %v1275 = vpack.c.b16 %v1087, %v1083
    %v1276 = vpack.c.b16 %v1092, %v1088
    %v1277 = vpack.c.b16 %v1093, %v1089
    %v1278 = vpack.c.b16 %v1094, %v1090
    %v1279 = vpack.c.b16 %v1095, %v1091
    %v1280 = vpack.c.b16 %v1100, %v1096
    %v1281 = vpack.c.b16 %v1101, %v1097
    %v1282 = vpack.c.b16 %v1102, %v1098
    %v1283 = vpack.c.b16 %v1103, %v1099
    %v1284 = vpack.c.b16 %v1108, %v1104
    %v1285 = vpack.c.b16 %v1109, %v1105
    %v1286 = vpack.c.b16 %v1110, %v1106
    %v1287 = vpack.c.b16 %v1111, %v1107
    %v1288 = vpack.c.b16 %v1116, %v1112
    %v1289 = vpack.c.b16 %v1117, %v1113
    %v1290 = vpack.c.b16 %v1118, %v1114
    %v1291 = vpack.c.b16 %v1119, %v1115
    %v1292 = vpack.c.b16 %v1124, %v1120
    %v1293 = vpack.c.b16 %v1125, %v1121
    %v1294 = vpack.c.b16 %v1126, %v1122
    %v1295 = vpack.c.b16 %v1127, %v1123
    %v1296 = vpack.c.b16 %v1132, %v1128
    %v1297 = vpack.c.b16 %v1133, %v1129
    %v1298 = vpack.c.b16 %v1134, %v1130
    %v1299 = vpack.c.b16 %v1135, %v1131
    %v1300 = vpack.c.b16 %v1140, %v1136
    %v1301 = vpack.c.b16 %v1141, %v1137
    %v1302 = vpack.c.b16 %v1142, %v1138
    %v1303 = vpack.c.b16 %v1143, %v1139
    %v1304 = vpack.c.b16 %v1148, %v1144
    %v1305 = vpack.c.b16 %v1149, %v1145
    %v1306 = vpack.c.b16 %v1150, %v1146
    %v1307 = vpack.c.b16 %v1151, %v1147
    %v1308 = vpack.c.b16 %v1156, %v1152
    %v1309 = vpack.c.b16 %v1157, %v1153
    %v1310 = vpack.c.b16 %v1158, %v1154
    %v1311 = vpack.c.b16 %v1159, %v1155
    %v1312 = vpack.c.b16 %v1164, %v1160
    %v1313 = vpack.c.b16 %v1165, %v1161
    %v1314 = vpack.c.b16 %v1166, %v1162
    %v1315 = vpack.c.b16 %v1167, %v1163
    %v1316 = vpack.c.b16 %v1172, %v1168
    %v1317 = vpack.c.b16 %v1173, %v1169
    %v1318 = vpack.c.b16 %v1174, %v1170
    %v1319 = vpack.c.b16 %v1175, %v1171
    %v1320 = vpack.c.b16 %v1180, %v1176
    %v1321 = vpack.c.b16 %v1181, %v1177
    %v1322 = vpack.c.b16 %v1182, %v1178
    %v1323 = vpack.c.b16 %v1183, %v1179
    %v1324 = vpack.c.b16 %v1188, %v1184
    %v1325 = vpack.c.b16 %v1189, %v1185
    %v1326 = vpack.c.b16 %v1190, %v1186
    %v1327 = vpack.c.b16 %v1191, %v1187
    %v1328 = vpack.c.b16 %v1196, %v1192
    %v1329 = vpack.c.b16 %v1197, %v1193
    %v1330 = vpack.c.b16 %v1198, %v1194
    %v1331 = vpack.c.b16 %v1199, %v1195
    %v1332 = vpack.c.b16 %v1204, %v1200
    %v1333 = vpack.c.b16 %v1205, %v1201
    %v1334 = vpack.c.b16 %v1206, %v1202
    %v1335 = vpack.c.b16 %v1207, %v1203
    %1464 = vmatpush.bf16.msra.mxu0 %v1236
    %1465 = vmatpush.bf16.msra.mxu0 %v1232
    %1466 = vmatpush.bf16.msra.mxu0 %v1228
    %1467 = vmatpush.bf16.msra.mxu0 %v1224
    %1468 = vmatpush.bf16.msra.mxu0 %v1220
    %1469 = vmatpush.bf16.msra.mxu0 %v1216
    %1470 = vmatpush.bf16.msra.mxu0 %v1212
    %1471 = vmatpush.bf16.msra.mxu0 %v1208
    %1472 = vmatmul.bf16.gmra.mxu0 %v682
    %v1473 = vpop.f32.mrf.mxu0
    %v1474 = vadd.f32 %v816, %v1473
    %v1475 = vpop.f32.mrf.mxu0
    %1476 = vdwg.mxu0
    %1477 = vmatpush.bf16.msra.mxu0 %v1268
    %1478 = vmatpush.bf16.msra.mxu0 %v1264
    %1479 = vmatpush.bf16.msra.mxu0 %v1260
    %1480 = vmatpush.bf16.msra.mxu0 %v1256
    %1481 = vmatpush.bf16.msra.mxu0 %v1252
    %1482 = vmatpush.bf16.msra.mxu0 %v1248
    %1483 = vmatpush.bf16.msra.mxu0 %v1244
    %1484 = vmatpush.bf16.msra.mxu0 %v1240
    %1485 = vmatmul.bf16.gmra.mxu0 %v683
    %v1486 = vpop.f32.mrf.mxu0
    %v1487 = vadd.f32 %v1474, %v1486
    %v1488 = vpop.f32.mrf.mxu0
    %1489 = vdwg.mxu0
    %1490 = vmatpush.bf16.msra.mxu0 %v1300
    %1491 = vmatpush.bf16.msra.mxu0 %v1296
    %1492 = vmatpush.bf16.msra.mxu0 %v1292
    %1493 = vmatpush.bf16.msra.mxu0 %v1288
    %1494 = vmatpush.bf16.msra.mxu0 %v1284
    %1495 = vmatpush.bf16.msra.mxu0 %v1280
    %1496 = vmatpush.bf16.msra.mxu0 %v1276
    %1497 = vmatpush.bf16.msra.mxu0 %v1272
    %1498 = vmatmul.bf16.gmra.mxu0 %v684
    %v1499 = vpop.f32.mrf.mxu0
    %v1500 = vadd.f32 %v1487, %v1499
    %v1501 = vpop.f32.mrf.mxu0
    %1502 = vdwg.mxu0
    %1503 = vmatpush.bf16.msra.mxu0 %v1332
    %1504 = vmatpush.bf16.msra.mxu0 %v1328
    %1505 = vmatpush.bf16.msra.mxu0 %v1324
    %1506 = vmatpush.bf16.msra.mxu0 %v1320
    %1507 = vmatpush.bf16.msra.mxu0 %v1316
    %1508 = vmatpush.bf16.msra.mxu0 %v1312
    %1509 = vmatpush.bf16.msra.mxu0 %v1308
    %1510 = vmatpush.bf16.msra.mxu0 %v1304
    %1511 = vmatmul.bf16.gmra.mxu0 %v685
    %v1512 = vpop.f32.mrf.mxu0
    %v1513 = vadd.f32 %v1500, %v1512
    %v1514 = vpop.f32.mrf.mxu0
    %1515 = vdwg.mxu0
    %1516 = vmatpush.bf16.msra.mxu0 %v1237
    %1517 = vmatpush.bf16.msra.mxu0 %v1233
    %1518 = vmatpush.bf16.msra.mxu0 %v1229
    %1519 = vmatpush.bf16.msra.mxu0 %v1225
    %1520 = vmatpush.bf16.msra.mxu0 %v1221
    %1521 = vmatpush.bf16.msra.mxu0 %v1217
    %1522 = vmatpush.bf16.msra.mxu0 %v1213
    %1523 = vmatpush.bf16.msra.mxu0 %v1209
    %1524 = vmatmul.bf16.gmra.mxu0 %v682
    %v1525 = vpop.f32.mrf.mxu0
    %v1526 = vadd.f32 %v817, %v1525
    %v1527 = vpop.f32.mrf.mxu0
    %1528 = vdwg.mxu0
    %1529 = vmatpush.bf16.msra.mxu0 %v1269
    %1530 = vmatpush.bf16.msra.mxu0 %v1265
    %1531 = vmatpush.bf16.msra.mxu0 %v1261
    %1532 = vmatpush.bf16.msra.mxu0 %v1257
    %1533 = vmatpush.bf16.msra.mxu0 %v1253
    %1534 = vmatpush.bf16.msra.mxu0 %v1249
    %1535 = vmatpush.bf16.msra.mxu0 %v1245
    %1536 = vmatpush.bf16.msra.mxu0 %v1241
    %1537 = vmatmul.bf16.gmra.mxu0 %v683
    %v1538 = vpop.f32.mrf.mxu0
    %v1539 = vadd.f32 %v1526, %v1538
    %v1540 = vpop.f32.mrf.mxu0
    %1541 = vdwg.mxu0
    %1542 = vmatpush.bf16.msra.mxu0 %v1301
    %1543 = vmatpush.bf16.msra.mxu0 %v1297
    %1544 = vmatpush.bf16.msra.mxu0 %v1293
    %1545 = vmatpush.bf16.msra.mxu0 %v1289
    %1546 = vmatpush.bf16.msra.mxu0 %v1285
    %1547 = vmatpush.bf16.msra.mxu0 %v1281
    %1548 = vmatpush.bf16.msra.mxu0 %v1277
    %1549 = vmatpush.bf16.msra.mxu0 %v1273
    %1550 = vmatmul.bf16.gmra.mxu0 %v684
    %v1551 = vpop.f32.mrf.mxu0
    %v1552 = vadd.f32 %v1539, %v1551
    %v1553 = vpop.f32.mrf.mxu0
    %1554 = vdwg.mxu0
    %1555 = vmatpush.bf16.msra.mxu0 %v1333
    %1556 = vmatpush.bf16.msra.mxu0 %v1329
    %1557 = vmatpush.bf16.msra.mxu0 %v1325
    %1558 = vmatpush.bf16.msra.mxu0 %v1321
    %1559 = vmatpush.bf16.msra.mxu0 %v1317
    %1560 = vmatpush.bf16.msra.mxu0 %v1313
    %1561 = vmatpush.bf16.msra.mxu0 %v1309
    %1562 = vmatpush.bf16.msra.mxu0 %v1305
    %1563 = vmatmul.bf16.gmra.mxu0 %v685
    %v1564 = vpop.f32.mrf.mxu0
    %v1565 = vadd.f32 %v1552, %v1564
    %v1566 = vpop.f32.mrf.mxu0
    %1567 = vdwg.mxu0
    %1568 = vmatpush.bf16.msra.mxu0 %v1238
    %1569 = vmatpush.bf16.msra.mxu0 %v1234
    %1570 = vmatpush.bf16.msra.mxu0 %v1230
    %1571 = vmatpush.bf16.msra.mxu0 %v1226
    %1572 = vmatpush.bf16.msra.mxu0 %v1222
    %1573 = vmatpush.bf16.msra.mxu0 %v1218
    %1574 = vmatpush.bf16.msra.mxu0 %v1214
    %1575 = vmatpush.bf16.msra.mxu0 %v1210
    %1576 = vmatmul.bf16.gmra.mxu0 %v682
    %v1577 = vpop.f32.mrf.mxu0
    %v1578 = vadd.f32 %v818, %v1577
    %v1579 = vpop.f32.mrf.mxu0
    %1580 = vdwg.mxu0
    %1581 = vmatpush.bf16.msra.mxu0 %v1270
    %1582 = vmatpush.bf16.msra.mxu0 %v1266
    %1583 = vmatpush.bf16.msra.mxu0 %v1262
    %1584 = vmatpush.bf16.msra.mxu0 %v1258
    %1585 = vmatpush.bf16.msra.mxu0 %v1254
    %1586 = vmatpush.bf16.msra.mxu0 %v1250
    %1587 = vmatpush.bf16.msra.mxu0 %v1246
    %1588 = vmatpush.bf16.msra.mxu0 %v1242
    %1589 = vmatmul.bf16.gmra.mxu0 %v683
    %v1590 = vpop.f32.mrf.mxu0
    %v1591 = vadd.f32 %v1578, %v1590
    %v1592 = vpop.f32.mrf.mxu0
    %1593 = vdwg.mxu0
    %1594 = vmatpush.bf16.msra.mxu0 %v1302
    %1595 = vmatpush.bf16.msra.mxu0 %v1298
    %1596 = vmatpush.bf16.msra.mxu0 %v1294
    %1597 = vmatpush.bf16.msra.mxu0 %v1290
    %1598 = vmatpush.bf16.msra.mxu0 %v1286
    %1599 = vmatpush.bf16.msra.mxu0 %v1282
    %1600 = vmatpush.bf16.msra.mxu0 %v1278
    %1601 = vmatpush.bf16.msra.mxu0 %v1274
    %1602 = vmatmul.bf16.gmra.mxu0 %v684
    %v1603 = vpop.f32.mrf.mxu0
    %v1604 = vadd.f32 %v1591, %v1603
    %v1605 = vpop.f32.mrf.mxu0
    %1606 = vdwg.mxu0
    %1607 = vmatpush.bf16.msra.mxu0 %v1334
    %1608 = vmatpush.bf16.msra.mxu0 %v1330
    %1609 = vmatpush.bf16.msra.mxu0 %v1326
    %1610 = vmatpush.bf16.msra.mxu0 %v1322
    %1611 = vmatpush.bf16.msra.mxu0 %v1318
    %1612 = vmatpush.bf16.msra.mxu0 %v1314
    %1613 = vmatpush.bf16.msra.mxu0 %v1310
    %1614 = vmatpush.bf16.msra.mxu0 %v1306
    %1615 = vmatmul.bf16.gmra.mxu0 %v685
    %v1616 = vpop.f32.mrf.mxu0
    %v1617 = vadd.f32 %v1604, %v1616
    %v1618 = vpop.f32.mrf.mxu0
    %1619 = vdwg.mxu0
    %1620 = vmatpush.bf16.msra.mxu0 %v1239
    %1621 = vmatpush.bf16.msra.mxu0 %v1235
    %1622 = vmatpush.bf16.msra.mxu0 %v1231
    %1623 = vmatpush.bf16.msra.mxu0 %v1227
    %1624 = vmatpush.bf16.msra.mxu0 %v1223
    %1625 = vmatpush.bf16.msra.mxu0 %v1219
    %1626 = vmatpush.bf16.msra.mxu0 %v1215
    %1627 = vmatpush.bf16.msra.mxu0 %v1211
    %1628 = vmatmul.bf16.gmra.mxu0 %v682
    %v1629 = vpop.f32.mrf.mxu0
    %v1630 = vadd.f32 %v819, %v1629
    %v1631 = vpop.f32.mrf.mxu0
    %1632 = vdwg.mxu0
    %1633 = vmatpush.bf16.msra.mxu0 %v1271
    %1634 = vmatpush.bf16.msra.mxu0 %v1267
    %1635 = vmatpush.bf16.msra.mxu0 %v1263
    %1636 = vmatpush.bf16.msra.mxu0 %v1259
    %1637 = vmatpush.bf16.msra.mxu0 %v1255
    %1638 = vmatpush.bf16.msra.mxu0 %v1251
    %1639 = vmatpush.bf16.msra.mxu0 %v1247
    %1640 = vmatpush.bf16.msra.mxu0 %v1243
    %1641 = vmatmul.bf16.gmra.mxu0 %v683
    %v1642 = vpop.f32.mrf.mxu0
    %v1643 = vadd.f32 %v1630, %v1642
    %v1644 = vpop.f32.mrf.mxu0
    %1645 = vdwg.mxu0
    %1646 = vmatpush.bf16.msra.mxu0 %v1303
    %1647 = vmatpush.bf16.msra.mxu0 %v1299
    %1648 = vmatpush.bf16.msra.mxu0 %v1295
    %1649 = vmatpush.bf16.msra.mxu0 %v1291
    %1650 = vmatpush.bf16.msra.mxu0 %v1287
    %1651 = vmatpush.bf16.msra.mxu0 %v1283
    %1652 = vmatpush.bf16.msra.mxu0 %v1279
    %1653 = vmatpush.bf16.msra.mxu0 %v1275
    %1654 = vmatmul.bf16.gmra.mxu0 %v684
    %v1655 = vpop.f32.mrf.mxu0
    %v1656 = vadd.f32 %v1643, %v1655
    %v1657 = vpop.f32.mrf.mxu0
    %1658 = vdwg.mxu0
    %1659 = vmatpush.bf16.msra.mxu0 %v1335
    %1660 = vmatpush.bf16.msra.mxu0 %v1331
    %1661 = vmatpush.bf16.msra.mxu0 %v1327
    %1662 = vmatpush.bf16.msra.mxu0 %v1323
    %1663 = vmatpush.bf16.msra.mxu0 %v1319
    %1664 = vmatpush.bf16.msra.mxu0 %v1315
    %1665 = vmatpush.bf16.msra.mxu0 %v1311
    %1666 = vmatpush.bf16.msra.mxu0 %v1307
    %1667 = vmatmul.bf16.gmra.mxu0 %v685
    %v1668 = vpop.f32.mrf.mxu0
    %v1669 = vadd.f32 %v1656, %v1668
    %v1670 = vpop.f32.mrf.mxu0
    %1671 = vdwg.mxu0
    %s1672 = scalar_lea.vmem [#allocation7], 1
    %v1673 = vld [vmem:[%s1672] ss:$8 sm:$0xf]
    %v1675 = vperm.slane %v1673, 0
    %v1676 = vperm.slane %v1673, 1
    %v1677 = vperm.slane %v1673, 2
    %v1678 = vperm.slane %v1673, 3
    %v1683 = vmul.f32 %v544, %v1675
    %v1684 = vmul.f32 %v544, %v1676
    %v1685 = vmul.f32 %v544, %v1677
    %v1686 = vmul.f32 %v544, %v1678
    %s1687 = scalar_lea.vmem [#allocation7], 2
    %v1688 = vld [vmem:[%s1687] ss:$8 sm:$0xf]
    %v1690 = vperm.slane %v1688, 0
    %v1691 = vperm.slane %v1688, 1
    %v1692 = vperm.slane %v1688, 2
    %v1693 = vperm.slane %v1688, 3
    %v1698 = vadd.f32 %v1683, %v1690
    %v1699 = vadd.f32 %v1684, %v1691
    %v1700 = vadd.f32 %v1685, %v1692
    %v1701 = vadd.f32 %v1686, %v1693
    %s1702 = scalar_lea.vmem [#allocation7], 3
    %v1703 = vld [vmem:[%s1702] ss:$8 sm:$0xf]
    %v1705 = vperm.slane %v1703, 0
    %v1706 = vperm.slane %v1703, 1
    %v1707 = vperm.slane %v1703, 2
    %v1708 = vperm.slane %v1703, 3
    %v1713 = vmul.f32 %v544, %v1705
    %v1714 = vmul.f32 %v544, %v1706
    %v1715 = vmul.f32 %v544, %v1707
    %v1716 = vmul.f32 %v544, %v1708
    %s1717 = scalar_lea.vmem [#allocation7], 4
    %v1718 = vld [vmem:[%s1717] ss:$8 sm:$0xf]
    %v1720 = vperm.slane %v1718, 0
    %v1721 = vperm.slane %v1718, 1
    %v1722 = vperm.slane %v1718, 2
    %v1723 = vperm.slane %v1718, 3
    %v1728 = vadd.f32 %v1713, %v1720
    %v1729 = vadd.f32 %v1714, %v1721
    %v1730 = vadd.f32 %v1715, %v1722
    %v1731 = vadd.f32 %v1716, %v1723
    %v1732 = vmul.f32 %v1698, %v1513
    %v1733 = vmul.f32 %v1699, %v1565
    %v1734 = vmul.f32 %v1700, %v1617
    %v1735 = vmul.f32 %v1701, %v1669
    %v1736 = vadd.f32 %v1732, %v1728
    %v1737 = vadd.f32 %v1733, %v1729
    %v1738 = vadd.f32 %v1734, %v1730
    %v1739 = vadd.f32 %v1735, %v1731
    %v1740 = vmax.f32 %v1736, 0.0
    %v1741 = vmax.f32 %v1737, 0.0
    %v1742 = vmax.f32 %v1738, 0.0
    %v1743 = vmax.f32 %v1739, 0.0
    %v1744 = vpack.c.bf16 %v1740, %v1740
    %v1745 = vpack.c.bf16 %v1741, %v1741
    %v1746 = vpack.c.bf16 %v1742, %v1742
    %v1747 = vpack.c.bf16 %v1743, %v1743
    %v1748 = vld [vmem:[#allocation9] sm:$0xff]
    %v1749 = vld [vmem:[#allocation9 + $0x8] sm:$0xff]
    %v1750 = vld [vmem:[#allocation9 + $0x10] sm:$0xff]
    %v1751 = vld [vmem:[#allocation9 + $0x18] sm:$0xff]
    %v1752 = vld [vmem:[#allocation9 + $0x20] sm:$0xff]
    %v1753 = vld [vmem:[#allocation9 + $0x28] sm:$0xff]
    %v1754 = vld [vmem:[#allocation9 + $0x30] sm:$0xff]
    %v1755 = vld [vmem:[#allocation9 + $0x38] sm:$0xff]
    %v1756 = vld [vmem:[#allocation9 + $0x40] sm:$0xff]
    %v1757 = vld [vmem:[#allocation9 + $0x48] sm:$0xff]
    %v1758 = vld [vmem:[#allocation9 + $0x50] sm:$0xff]
    %v1759 = vld [vmem:[#allocation9 + $0x58] sm:$0xff]
    %v1760 = vld [vmem:[#allocation9 + $0x60] sm:$0xff]
    %v1761 = vld [vmem:[#allocation9 + $0x68] sm:$0xff]
    %v1762 = vld [vmem:[#allocation9 + $0x70] sm:$0xff]
    %v1763 = vld [vmem:[#allocation9 + $0x78] sm:$0xff]
    %v1764 = vld [vmem:[#allocation9 + $0x80] sm:$0xff]
    %v1765 = vld [vmem:[#allocation9 + $0x88] sm:$0xff]
    %v1766 = vld [vmem:[#allocation9 + $0x90] sm:$0xff]
    %v1767 = vld [vmem:[#allocation9 + $0x98] sm:$0xff]
    %v1768 = vld [vmem:[#allocation9 + $0xa0] sm:$0xff]
    %v1769 = vld [vmem:[#allocation9 + $0xa8] sm:$0xff]
    %v1770 = vld [vmem:[#allocation9 + $0xb0] sm:$0xff]
    %v1771 = vld [vmem:[#allocation9 + $0xb8] sm:$0xff]
    %v1772 = vld [vmem:[#allocation9 + $0xc0] sm:$0xff]
    %v1773 = vld [vmem:[#allocation9 + $0xc8] sm:$0xff]
    %v1774 = vld [vmem:[#allocation9 + $0xd0] sm:$0xff]
    %v1775 = vld [vmem:[#allocation9 + $0xd8] sm:$0xff]
    %v1776 = vld [vmem:[#allocation9 + $0xe0] sm:$0xff]
    %v1777 = vld [vmem:[#allocation9 + $0xe8] sm:$0xff]
    %v1778 = vld [vmem:[#allocation9 + $0xf0] sm:$0xff]
    %v1779 = vld [vmem:[#allocation9 + $0xf8] sm:$0xff]
    %v1780 = vld [vmem:[#allocation9 + $0x100] sm:$0xff]
    %v1781 = vld [vmem:[#allocation9 + $0x108] sm:$0xff]
    %v1782 = vld [vmem:[#allocation9 + $0x110] sm:$0xff]
    %v1783 = vld [vmem:[#allocation9 + $0x118] sm:$0xff]
    %v1784 = vld [vmem:[#allocation9 + $0x120] sm:$0xff]
    %v1785 = vld [vmem:[#allocation9 + $0x128] sm:$0xff]
    %v1786 = vld [vmem:[#allocation9 + $0x130] sm:$0xff]
    %v1787 = vld [vmem:[#allocation9 + $0x138] sm:$0xff]
    %v1788 = vld [vmem:[#allocation9 + $0x140] sm:$0xff]
    %v1789 = vld [vmem:[#allocation9 + $0x148] sm:$0xff]
    %v1790 = vld [vmem:[#allocation9 + $0x150] sm:$0xff]
    %v1791 = vld [vmem:[#allocation9 + $0x158] sm:$0xff]
    %v1792 = vld [vmem:[#allocation9 + $0x160] sm:$0xff]
    %v1793 = vld [vmem:[#allocation9 + $0x168] sm:$0xff]
    %v1794 = vld [vmem:[#allocation9 + $0x170] sm:$0xff]
    %v1795 = vld [vmem:[#allocation9 + $0x178] sm:$0xff]
    %v1796 = vld [vmem:[#allocation9 + $0x180] sm:$0xff]
    %v1797 = vld [vmem:[#allocation9 + $0x188] sm:$0xff]
    %v1798 = vld [vmem:[#allocation9 + $0x190] sm:$0xff]
    %v1799 = vld [vmem:[#allocation9 + $0x198] sm:$0xff]
    %v1800 = vld [vmem:[#allocation9 + $0x1a0] sm:$0xff]
    %v1801 = vld [vmem:[#allocation9 + $0x1a8] sm:$0xff]
    %v1802 = vld [vmem:[#allocation9 + $0x1b0] sm:$0xff]
    %v1803 = vld [vmem:[#allocation9 + $0x1b8] sm:$0xff]
    %v1804 = vld [vmem:[#allocation9 + $0x1c0] sm:$0xff]
    %v1805 = vld [vmem:[#allocation9 + $0x1c8] sm:$0xff]
    %v1806 = vld [vmem:[#allocation9 + $0x1d0] sm:$0xff]
    %v1807 = vld [vmem:[#allocation9 + $0x1d8] sm:$0xff]
    %v1808 = vld [vmem:[#allocation9 + $0x1e0] sm:$0xff]
    %v1809 = vld [vmem:[#allocation9 + $0x1e8] sm:$0xff]
    %v1810 = vld [vmem:[#allocation9 + $0x1f0] sm:$0xff]
    %v1811 = vld [vmem:[#allocation9 + $0x1f8] sm:$0xff]
    %v1812 = vld [vmem:[#allocation9 + $0x200] sm:$0xff]
    %v1813 = vld [vmem:[#allocation9 + $0x208] sm:$0xff]
    %v1814 = vld [vmem:[#allocation9 + $0x210] sm:$0xff]
    %v1815 = vld [vmem:[#allocation9 + $0x218] sm:$0xff]
    %v1816 = vld [vmem:[#allocation9 + $0x220] sm:$0xff]
    %v1817 = vld [vmem:[#allocation9 + $0x228] sm:$0xff]
    %v1818 = vld [vmem:[#allocation9 + $0x230] sm:$0xff]
    %v1819 = vld [vmem:[#allocation9 + $0x238] sm:$0xff]
    %v1820 = vld [vmem:[#allocation9 + $0x240] sm:$0xff]
    %v1821 = vld [vmem:[#allocation9 + $0x248] sm:$0xff]
    %v1822 = vld [vmem:[#allocation9 + $0x250] sm:$0xff]
    %v1823 = vld [vmem:[#allocation9 + $0x258] sm:$0xff]
    %v1824 = vld [vmem:[#allocation9 + $0x260] sm:$0xff]
    %v1825 = vld [vmem:[#allocation9 + $0x268] sm:$0xff]
    %v1826 = vld [vmem:[#allocation9 + $0x270] sm:$0xff]
    %v1827 = vld [vmem:[#allocation9 + $0x278] sm:$0xff]
    %v1828 = vld [vmem:[#allocation9 + $0x280] sm:$0xff]
    %v1829 = vld [vmem:[#allocation9 + $0x288] sm:$0xff]
    %v1830 = vld [vmem:[#allocation9 + $0x290] sm:$0xff]
    %v1831 = vld [vmem:[#allocation9 + $0x298] sm:$0xff]
    %v1832 = vld [vmem:[#allocation9 + $0x2a0] sm:$0xff]
    %v1833 = vld [vmem:[#allocation9 + $0x2a8] sm:$0xff]
    %v1834 = vld [vmem:[#allocation9 + $0x2b0] sm:$0xff]
    %v1835 = vld [vmem:[#allocation9 + $0x2b8] sm:$0xff]
    %v1836 = vld [vmem:[#allocation9 + $0x2c0] sm:$0xff]
    %v1837 = vld [vmem:[#allocation9 + $0x2c8] sm:$0xff]
    %v1838 = vld [vmem:[#allocation9 + $0x2d0] sm:$0xff]
    %v1839 = vld [vmem:[#allocation9 + $0x2d8] sm:$0xff]
    %v1840 = vld [vmem:[#allocation9 + $0x2e0] sm:$0xff]
    %v1841 = vld [vmem:[#allocation9 + $0x2e8] sm:$0xff]
    %v1842 = vld [vmem:[#allocation9 + $0x2f0] sm:$0xff]
    %v1843 = vld [vmem:[#allocation9 + $0x2f8] sm:$0xff]
    %v1844 = vld [vmem:[#allocation9 + $0x300] sm:$0xff]
    %v1845 = vld [vmem:[#allocation9 + $0x308] sm:$0xff]
    %v1846 = vld [vmem:[#allocation9 + $0x310] sm:$0xff]
    %v1847 = vld [vmem:[#allocation9 + $0x318] sm:$0xff]
    %v1848 = vld [vmem:[#allocation9 + $0x320] sm:$0xff]
    %v1849 = vld [vmem:[#allocation9 + $0x328] sm:$0xff]
    %v1850 = vld [vmem:[#allocation9 + $0x330] sm:$0xff]
    %v1851 = vld [vmem:[#allocation9 + $0x338] sm:$0xff]
    %v1852 = vld [vmem:[#allocation9 + $0x340] sm:$0xff]
    %v1853 = vld [vmem:[#allocation9 + $0x348] sm:$0xff]
    %v1854 = vld [vmem:[#allocation9 + $0x350] sm:$0xff]
    %v1855 = vld [vmem:[#allocation9 + $0x358] sm:$0xff]
    %v1856 = vld [vmem:[#allocation9 + $0x360] sm:$0xff]
    %v1857 = vld [vmem:[#allocation9 + $0x368] sm:$0xff]
    %v1858 = vld [vmem:[#allocation9 + $0x370] sm:$0xff]
    %v1859 = vld [vmem:[#allocation9 + $0x378] sm:$0xff]
    %v1860 = vld [vmem:[#allocation9 + $0x380] sm:$0xff]
    %v1861 = vld [vmem:[#allocation9 + $0x388] sm:$0xff]
    %v1862 = vld [vmem:[#allocation9 + $0x390] sm:$0xff]
    %v1863 = vld [vmem:[#allocation9 + $0x398] sm:$0xff]
    %v1864 = vld [vmem:[#allocation9 + $0x3a0] sm:$0xff]
    %v1865 = vld [vmem:[#allocation9 + $0x3a8] sm:$0xff]
    %v1866 = vld [vmem:[#allocation9 + $0x3b0] sm:$0xff]
    %v1867 = vld [vmem:[#allocation9 + $0x3b8] sm:$0xff]
    %v1868 = vld [vmem:[#allocation9 + $0x3c0] sm:$0xff]
    %v1869 = vld [vmem:[#allocation9 + $0x3c8] sm:$0xff]
    %v1870 = vld [vmem:[#allocation9 + $0x3d0] sm:$0xff]
    %v1871 = vld [vmem:[#allocation9 + $0x3d8] sm:$0xff]
    %v1872 = vld [vmem:[#allocation9 + $0x3e0] sm:$0xff]
    %v1873 = vld [vmem:[#allocation9 + $0x3e8] sm:$0xff]
    %v1874 = vld [vmem:[#allocation9 + $0x3f0] sm:$0xff]
    %v1875 = vld [vmem:[#allocation9 + $0x3f8] sm:$0xff]
    %v1876 = vld [vmem:[#allocation10] ss:$8 sm:$0xf]
    %v1878 = vperm.slane %v1876, 0
    %v1879 = vperm.slane %v1876, 1
    %v1880 = vperm.slane %v1876, 2
    %v1881 = vperm.slane %v1876, 3
    %v2014 = vunpack.c.l.b16 %v1748
    %v2015 = vunpack.c.h.b16 %v1748
    %v2016 = vunpack.c.l.b16 %v1749
    %v2017 = vunpack.c.h.b16 %v1749
    %v2018 = vunpack.c.l.b16 %v1750
    %v2019 = vunpack.c.h.b16 %v1750
    %v2020 = vunpack.c.l.b16 %v1751
    %v2021 = vunpack.c.h.b16 %v1751
    %v2022 = vunpack.c.l.b16 %v1752
    %v2023 = vunpack.c.h.b16 %v1752
    %v2024 = vunpack.c.l.b16 %v1753
    %v2025 = vunpack.c.h.b16 %v1753
    %v2026 = vunpack.c.l.b16 %v1754
    %v2027 = vunpack.c.h.b16 %v1754
    %v2028 = vunpack.c.l.b16 %v1755
    %v2029 = vunpack.c.h.b16 %v1755
    %v2030 = vunpack.c.l.b16 %v1756
    %v2031 = vunpack.c.h.b16 %v1756
    %v2032 = vunpack.c.l.b16 %v1757
    %v2033 = vunpack.c.h.b16 %v1757
    %v2034 = vunpack.c.l.b16 %v1758
    %v2035 = vunpack.c.h.b16 %v1758
    %v2036 = vunpack.c.l.b16 %v1759
    %v2037 = vunpack.c.h.b16 %v1759
    %v2038 = vunpack.c.l.b16 %v1760
    %v2039 = vunpack.c.h.b16 %v1760
    %v2040 = vunpack.c.l.b16 %v1761
    %v2041 = vunpack.c.h.b16 %v1761
    %v2042 = vunpack.c.l.b16 %v1762
    %v2043 = vunpack.c.h.b16 %v1762
    %v2044 = vunpack.c.l.b16 %v1763
    %v2045 = vunpack.c.h.b16 %v1763
    %v2046 = vunpack.c.l.b16 %v1764
    %v2047 = vunpack.c.h.b16 %v1764
    %v2048 = vunpack.c.l.b16 %v1765
    %v2049 = vunpack.c.h.b16 %v1765
    %v2050 = vunpack.c.l.b16 %v1766
    %v2051 = vunpack.c.h.b16 %v1766
    %v2052 = vunpack.c.l.b16 %v1767
    %v2053 = vunpack.c.h.b16 %v1767
    %v2054 = vunpack.c.l.b16 %v1768
    %v2055 = vunpack.c.h.b16 %v1768
    %v2056 = vunpack.c.l.b16 %v1769
    %v2057 = vunpack.c.h.b16 %v1769
    %v2058 = vunpack.c.l.b16 %v1770
    %v2059 = vunpack.c.h.b16 %v1770
    %v2060 = vunpack.c.l.b16 %v1771
    %v2061 = vunpack.c.h.b16 %v1771
    %v2062 = vunpack.c.l.b16 %v1772
    %v2063 = vunpack.c.h.b16 %v1772
    %v2064 = vunpack.c.l.b16 %v1773
    %v2065 = vunpack.c.h.b16 %v1773
    %v2066 = vunpack.c.l.b16 %v1774
    %v2067 = vunpack.c.h.b16 %v1774
    %v2068 = vunpack.c.l.b16 %v1775
    %v2069 = vunpack.c.h.b16 %v1775
    %v2070 = vunpack.c.l.b16 %v1776
    %v2071 = vunpack.c.h.b16 %v1776
    %v2072 = vunpack.c.l.b16 %v1777
    %v2073 = vunpack.c.h.b16 %v1777
    %v2074 = vunpack.c.l.b16 %v1778
    %v2075 = vunpack.c.h.b16 %v1778
    %v2076 = vunpack.c.l.b16 %v1779
    %v2077 = vunpack.c.h.b16 %v1779
    %v2078 = vunpack.c.l.b16 %v1780
    %v2079 = vunpack.c.h.b16 %v1780
    %v2080 = vunpack.c.l.b16 %v1781
    %v2081 = vunpack.c.h.b16 %v1781
    %v2082 = vunpack.c.l.b16 %v1782
    %v2083 = vunpack.c.h.b16 %v1782
    %v2084 = vunpack.c.l.b16 %v1783
    %v2085 = vunpack.c.h.b16 %v1783
    %v2086 = vunpack.c.l.b16 %v1784
    %v2087 = vunpack.c.h.b16 %v1784
    %v2088 = vunpack.c.l.b16 %v1785
    %v2089 = vunpack.c.h.b16 %v1785
    %v2090 = vunpack.c.l.b16 %v1786
    %v2091 = vunpack.c.h.b16 %v1786
    %v2092 = vunpack.c.l.b16 %v1787
    %v2093 = vunpack.c.h.b16 %v1787
    %v2094 = vunpack.c.l.b16 %v1788
    %v2095 = vunpack.c.h.b16 %v1788
    %v2096 = vunpack.c.l.b16 %v1789
    %v2097 = vunpack.c.h.b16 %v1789
    %v2098 = vunpack.c.l.b16 %v1790
    %v2099 = vunpack.c.h.b16 %v1790
    %v2100 = vunpack.c.l.b16 %v1791
    %v2101 = vunpack.c.h.b16 %v1791
    %v2102 = vunpack.c.l.b16 %v1792
    %v2103 = vunpack.c.h.b16 %v1792
    %v2104 = vunpack.c.l.b16 %v1793
    %v2105 = vunpack.c.h.b16 %v1793
    %v2106 = vunpack.c.l.b16 %v1794
    %v2107 = vunpack.c.h.b16 %v1794
    %v2108 = vunpack.c.l.b16 %v1795
    %v2109 = vunpack.c.h.b16 %v1795
    %v2110 = vunpack.c.l.b16 %v1796
    %v2111 = vunpack.c.h.b16 %v1796
    %v2112 = vunpack.c.l.b16 %v1797
    %v2113 = vunpack.c.h.b16 %v1797
    %v2114 = vunpack.c.l.b16 %v1798
    %v2115 = vunpack.c.h.b16 %v1798
    %v2116 = vunpack.c.l.b16 %v1799
    %v2117 = vunpack.c.h.b16 %v1799
    %v2118 = vunpack.c.l.b16 %v1800
    %v2119 = vunpack.c.h.b16 %v1800
    %v2120 = vunpack.c.l.b16 %v1801
    %v2121 = vunpack.c.h.b16 %v1801
    %v2122 = vunpack.c.l.b16 %v1802
    %v2123 = vunpack.c.h.b16 %v1802
    %v2124 = vunpack.c.l.b16 %v1803
    %v2125 = vunpack.c.h.b16 %v1803
    %v2126 = vunpack.c.l.b16 %v1804
    %v2127 = vunpack.c.h.b16 %v1804
    %v2128 = vunpack.c.l.b16 %v1805
    %v2129 = vunpack.c.h.b16 %v1805
    %v2130 = vunpack.c.l.b16 %v1806
    %v2131 = vunpack.c.h.b16 %v1806
    %v2132 = vunpack.c.l.b16 %v1807
    %v2133 = vunpack.c.h.b16 %v1807
    %v2134 = vunpack.c.l.b16 %v1808
    %v2135 = vunpack.c.h.b16 %v1808
    %v2136 = vunpack.c.l.b16 %v1809
    %v2137 = vunpack.c.h.b16 %v1809
    %v2138 = vunpack.c.l.b16 %v1810
    %v2139 = vunpack.c.h.b16 %v1810
    %v2140 = vunpack.c.l.b16 %v1811
    %v2141 = vunpack.c.h.b16 %v1811
    %v2142 = vunpack.c.l.b16 %v1812
    %v2143 = vunpack.c.h.b16 %v1812
    %v2144 = vunpack.c.l.b16 %v1813
    %v2145 = vunpack.c.h.b16 %v1813
    %v2146 = vunpack.c.l.b16 %v1814
    %v2147 = vunpack.c.h.b16 %v1814
    %v2148 = vunpack.c.l.b16 %v1815
    %v2149 = vunpack.c.h.b16 %v1815
    %v2150 = vunpack.c.l.b16 %v1816
    %v2151 = vunpack.c.h.b16 %v1816
    %v2152 = vunpack.c.l.b16 %v1817
    %v2153 = vunpack.c.h.b16 %v1817
    %v2154 = vunpack.c.l.b16 %v1818
    %v2155 = vunpack.c.h.b16 %v1818
    %v2156 = vunpack.c.l.b16 %v1819
    %v2157 = vunpack.c.h.b16 %v1819
    %v2158 = vunpack.c.l.b16 %v1820
    %v2159 = vunpack.c.h.b16 %v1820
    %v2160 = vunpack.c.l.b16 %v1821
    %v2161 = vunpack.c.h.b16 %v1821
    %v2162 = vunpack.c.l.b16 %v1822
    %v2163 = vunpack.c.h.b16 %v1822
    %v2164 = vunpack.c.l.b16 %v1823
    %v2165 = vunpack.c.h.b16 %v1823
    %v2166 = vunpack.c.l.b16 %v1824
    %v2167 = vunpack.c.h.b16 %v1824
    %v2168 = vunpack.c.l.b16 %v1825
    %v2169 = vunpack.c.h.b16 %v1825
    %v2170 = vunpack.c.l.b16 %v1826
    %v2171 = vunpack.c.h.b16 %v1826
    %v2172 = vunpack.c.l.b16 %v1827
    %v2173 = vunpack.c.h.b16 %v1827
    %v2174 = vunpack.c.l.b16 %v1828
    %v2175 = vunpack.c.h.b16 %v1828
    %v2176 = vunpack.c.l.b16 %v1829
    %v2177 = vunpack.c.h.b16 %v1829
    %v2178 = vunpack.c.l.b16 %v1830
    %v2179 = vunpack.c.h.b16 %v1830
    %v2180 = vunpack.c.l.b16 %v1831
    %v2181 = vunpack.c.h.b16 %v1831
    %v2182 = vunpack.c.l.b16 %v1832
    %v2183 = vunpack.c.h.b16 %v1832
    %v2184 = vunpack.c.l.b16 %v1833
    %v2185 = vunpack.c.h.b16 %v1833
    %v2186 = vunpack.c.l.b16 %v1834
    %v2187 = vunpack.c.h.b16 %v1834
    %v2188 = vunpack.c.l.b16 %v1835
    %v2189 = vunpack.c.h.b16 %v1835
    %v2190 = vunpack.c.l.b16 %v1836
    %v2191 = vunpack.c.h.b16 %v1836
    %v2192 = vunpack.c.l.b16 %v1837
    %v2193 = vunpack.c.h.b16 %v1837
    %v2194 = vunpack.c.l.b16 %v1838
    %v2195 = vunpack.c.h.b16 %v1838
    %v2196 = vunpack.c.l.b16 %v1839
    %v2197 = vunpack.c.h.b16 %v1839
    %v2198 = vunpack.c.l.b16 %v1840
    %v2199 = vunpack.c.h.b16 %v1840
    %v2200 = vunpack.c.l.b16 %v1841
    %v2201 = vunpack.c.h.b16 %v1841
    %v2202 = vunpack.c.l.b16 %v1842
    %v2203 = vunpack.c.h.b16 %v1842
    %v2204 = vunpack.c.l.b16 %v1843
    %v2205 = vunpack.c.h.b16 %v1843
    %v2206 = vunpack.c.l.b16 %v1844
    %v2207 = vunpack.c.h.b16 %v1844
    %v2208 = vunpack.c.l.b16 %v1845
    %v2209 = vunpack.c.h.b16 %v1845
    %v2210 = vunpack.c.l.b16 %v1846
    %v2211 = vunpack.c.h.b16 %v1846
    %v2212 = vunpack.c.l.b16 %v1847
    %v2213 = vunpack.c.h.b16 %v1847
    %v2214 = vunpack.c.l.b16 %v1848
    %v2215 = vunpack.c.h.b16 %v1848
    %v2216 = vunpack.c.l.b16 %v1849
    %v2217 = vunpack.c.h.b16 %v1849
    %v2218 = vunpack.c.l.b16 %v1850
    %v2219 = vunpack.c.h.b16 %v1850
    %v2220 = vunpack.c.l.b16 %v1851
    %v2221 = vunpack.c.h.b16 %v1851
    %v2222 = vunpack.c.l.b16 %v1852
    %v2223 = vunpack.c.h.b16 %v1852
    %v2224 = vunpack.c.l.b16 %v1853
    %v2225 = vunpack.c.h.b16 %v1853
    %v2226 = vunpack.c.l.b16 %v1854
    %v2227 = vunpack.c.h.b16 %v1854
    %v2228 = vunpack.c.l.b16 %v1855
    %v2229 = vunpack.c.h.b16 %v1855
    %v2230 = vunpack.c.l.b16 %v1856
    %v2231 = vunpack.c.h.b16 %v1856
    %v2232 = vunpack.c.l.b16 %v1857
    %v2233 = vunpack.c.h.b16 %v1857
    %v2234 = vunpack.c.l.b16 %v1858
    %v2235 = vunpack.c.h.b16 %v1858
    %v2236 = vunpack.c.l.b16 %v1859
    %v2237 = vunpack.c.h.b16 %v1859
    %v2238 = vunpack.c.l.b16 %v1860
    %v2239 = vunpack.c.h.b16 %v1860
    %v2240 = vunpack.c.l.b16 %v1861
    %v2241 = vunpack.c.h.b16 %v1861
    %v2242 = vunpack.c.l.b16 %v1862
    %v2243 = vunpack.c.h.b16 %v1862
    %v2244 = vunpack.c.l.b16 %v1863
    %v2245 = vunpack.c.h.b16 %v1863
    %v2246 = vunpack.c.l.b16 %v1864
    %v2247 = vunpack.c.h.b16 %v1864
    %v2248 = vunpack.c.l.b16 %v1865
    %v2249 = vunpack.c.h.b16 %v1865
    %v2250 = vunpack.c.l.b16 %v1866
    %v2251 = vunpack.c.h.b16 %v1866
    %v2252 = vunpack.c.l.b16 %v1867
    %v2253 = vunpack.c.h.b16 %v1867
    %v2254 = vunpack.c.l.b16 %v1868
    %v2255 = vunpack.c.h.b16 %v1868
    %v2256 = vunpack.c.l.b16 %v1869
    %v2257 = vunpack.c.h.b16 %v1869
    %v2258 = vunpack.c.l.b16 %v1870
    %v2259 = vunpack.c.h.b16 %v1870
    %v2260 = vunpack.c.l.b16 %v1871
    %v2261 = vunpack.c.h.b16 %v1871
    %v2262 = vunpack.c.l.b16 %v1872
    %v2263 = vunpack.c.h.b16 %v1872
    %v2264 = vunpack.c.l.b16 %v1873
    %v2265 = vunpack.c.h.b16 %v1873
    %v2266 = vunpack.c.l.b16 %v1874
    %v2267 = vunpack.c.h.b16 %v1874
    %v2268 = vunpack.c.l.b16 %v1875
    %v2269 = vunpack.c.h.b16 %v1875
    %v2270 = vpack.c.b16 %v2018, %v2014
    %v2271 = vpack.c.b16 %v2019, %v2015
    %v2272 = vpack.c.b16 %v2020, %v2016
    %v2273 = vpack.c.b16 %v2021, %v2017
    %v2274 = vpack.c.b16 %v2026, %v2022
    %v2275 = vpack.c.b16 %v2027, %v2023
    %v2276 = vpack.c.b16 %v2028, %v2024
    %v2277 = vpack.c.b16 %v2029, %v2025
    %v2278 = vpack.c.b16 %v2034, %v2030
    %v2279 = vpack.c.b16 %v2035, %v2031
    %v2280 = vpack.c.b16 %v2036, %v2032
    %v2281 = vpack.c.b16 %v2037, %v2033
    %v2282 = vpack.c.b16 %v2042, %v2038
    %v2283 = vpack.c.b16 %v2043, %v2039
    %v2284 = vpack.c.b16 %v2044, %v2040
    %v2285 = vpack.c.b16 %v2045, %v2041
    %v2286 = vpack.c.b16 %v2050, %v2046
    %v2287 = vpack.c.b16 %v2051, %v2047
    %v2288 = vpack.c.b16 %v2052, %v2048
    %v2289 = vpack.c.b16 %v2053, %v2049
    %v2290 = vpack.c.b16 %v2058, %v2054
    %v2291 = vpack.c.b16 %v2059, %v2055
    %v2292 = vpack.c.b16 %v2060, %v2056
    %v2293 = vpack.c.b16 %v2061, %v2057
    %v2294 = vpack.c.b16 %v2066, %v2062
    %v2295 = vpack.c.b16 %v2067, %v2063
    %v2296 = vpack.c.b16 %v2068, %v2064
    %v2297 = vpack.c.b16 %v2069, %v2065
    %v2298 = vpack.c.b16 %v2074, %v2070
    %v2299 = vpack.c.b16 %v2075, %v2071
    %v2300 = vpack.c.b16 %v2076, %v2072
    %v2301 = vpack.c.b16 %v2077, %v2073
    %v2302 = vpack.c.b16 %v2082, %v2078
    %v2303 = vpack.c.b16 %v2083, %v2079
    %v2304 = vpack.c.b16 %v2084, %v2080
    %v2305 = vpack.c.b16 %v2085, %v2081
    %v2306 = vpack.c.b16 %v2090, %v2086
    %v2307 = vpack.c.b16 %v2091, %v2087
    %v2308 = vpack.c.b16 %v2092, %v2088
    %v2309 = vpack.c.b16 %v2093, %v2089
    %v2310 = vpack.c.b16 %v2098, %v2094
    %v2311 = vpack.c.b16 %v2099, %v2095
    %v2312 = vpack.c.b16 %v2100, %v2096
    %v2313 = vpack.c.b16 %v2101, %v2097
    %v2314 = vpack.c.b16 %v2106, %v2102
    %v2315 = vpack.c.b16 %v2107, %v2103
    %v2316 = vpack.c.b16 %v2108, %v2104
    %v2317 = vpack.c.b16 %v2109, %v2105
    %v2318 = vpack.c.b16 %v2114, %v2110
    %v2319 = vpack.c.b16 %v2115, %v2111
    %v2320 = vpack.c.b16 %v2116, %v2112
    %v2321 = vpack.c.b16 %v2117, %v2113
    %v2322 = vpack.c.b16 %v2122, %v2118
    %v2323 = vpack.c.b16 %v2123, %v2119
    %v2324 = vpack.c.b16 %v2124, %v2120
    %v2325 = vpack.c.b16 %v2125, %v2121
    %v2326 = vpack.c.b16 %v2130, %v2126
    %v2327 = vpack.c.b16 %v2131, %v2127
    %v2328 = vpack.c.b16 %v2132, %v2128
    %v2329 = vpack.c.b16 %v2133, %v2129
    %v2330 = vpack.c.b16 %v2138, %v2134
    %v2331 = vpack.c.b16 %v2139, %v2135
    %v2332 = vpack.c.b16 %v2140, %v2136
    %v2333 = vpack.c.b16 %v2141, %v2137
    %v2334 = vpack.c.b16 %v2146, %v2142
    %v2335 = vpack.c.b16 %v2147, %v2143
    %v2336 = vpack.c.b16 %v2148, %v2144
    %v2337 = vpack.c.b16 %v2149, %v2145
    %v2338 = vpack.c.b16 %v2154, %v2150
    %v2339 = vpack.c.b16 %v2155, %v2151
    %v2340 = vpack.c.b16 %v2156, %v2152
    %v2341 = vpack.c.b16 %v2157, %v2153
    %v2342 = vpack.c.b16 %v2162, %v2158
    %v2343 = vpack.c.b16 %v2163, %v2159
    %v2344 = vpack.c.b16 %v2164, %v2160
    %v2345 = vpack.c.b16 %v2165, %v2161
    %v2346 = vpack.c.b16 %v2170, %v2166
    %v2347 = vpack.c.b16 %v2171, %v2167
    %v2348 = vpack.c.b16 %v2172, %v2168
    %v2349 = vpack.c.b16 %v2173, %v2169
    %v2350 = vpack.c.b16 %v2178, %v2174
    %v2351 = vpack.c.b16 %v2179, %v2175
    %v2352 = vpack.c.b16 %v2180, %v2176
    %v2353 = vpack.c.b16 %v2181, %v2177
    %v2354 = vpack.c.b16 %v2186, %v2182
    %v2355 = vpack.c.b16 %v2187, %v2183
    %v2356 = vpack.c.b16 %v2188, %v2184
    %v2357 = vpack.c.b16 %v2189, %v2185
    %v2358 = vpack.c.b16 %v2194, %v2190
    %v2359 = vpack.c.b16 %v2195, %v2191
    %v2360 = vpack.c.b16 %v2196, %v2192
    %v2361 = vpack.c.b16 %v2197, %v2193
    %v2362 = vpack.c.b16 %v2202, %v2198
    %v2363 = vpack.c.b16 %v2203, %v2199
    %v2364 = vpack.c.b16 %v2204, %v2200
    %v2365 = vpack.c.b16 %v2205, %v2201
    %v2366 = vpack.c.b16 %v2210, %v2206
    %v2367 = vpack.c.b16 %v2211, %v2207
    %v2368 = vpack.c.b16 %v2212, %v2208
    %v2369 = vpack.c.b16 %v2213, %v2209
    %v2370 = vpack.c.b16 %v2218, %v2214
    %v2371 = vpack.c.b16 %v2219, %v2215
    %v2372 = vpack.c.b16 %v2220, %v2216
    %v2373 = vpack.c.b16 %v2221, %v2217
    %v2374 = vpack.c.b16 %v2226, %v2222
    %v2375 = vpack.c.b16 %v2227, %v2223
    %v2376 = vpack.c.b16 %v2228, %v2224
    %v2377 = vpack.c.b16 %v2229, %v2225
    %v2378 = vpack.c.b16 %v2234, %v2230
    %v2379 = vpack.c.b16 %v2235, %v2231
    %v2380 = vpack.c.b16 %v2236, %v2232
    %v2381 = vpack.c.b16 %v2237, %v2233
    %v2382 = vpack.c.b16 %v2242, %v2238
    %v2383 = vpack.c.b16 %v2243, %v2239
    %v2384 = vpack.c.b16 %v2244, %v2240
    %v2385 = vpack.c.b16 %v2245, %v2241
    %v2386 = vpack.c.b16 %v2250, %v2246
    %v2387 = vpack.c.b16 %v2251, %v2247
    %v2388 = vpack.c.b16 %v2252, %v2248
    %v2389 = vpack.c.b16 %v2253, %v2249
    %v2390 = vpack.c.b16 %v2258, %v2254
    %v2391 = vpack.c.b16 %v2259, %v2255
    %v2392 = vpack.c.b16 %v2260, %v2256
    %v2393 = vpack.c.b16 %v2261, %v2257
    %v2394 = vpack.c.b16 %v2266, %v2262
    %v2395 = vpack.c.b16 %v2267, %v2263
    %v2396 = vpack.c.b16 %v2268, %v2264
    %v2397 = vpack.c.b16 %v2269, %v2265
    %2526 = vmatpush.bf16.msra.mxu0 %v2298
    %2527 = vmatpush.bf16.msra.mxu0 %v2294
    %2528 = vmatpush.bf16.msra.mxu0 %v2290
    %2529 = vmatpush.bf16.msra.mxu0 %v2286
    %2530 = vmatpush.bf16.msra.mxu0 %v2282
    %2531 = vmatpush.bf16.msra.mxu0 %v2278
    %2532 = vmatpush.bf16.msra.mxu0 %v2274
    %2533 = vmatpush.bf16.msra.mxu0 %v2270
    %2534 = vmatmul.bf16.gmra.mxu0 %v1744
    %v2535 = vpop.f32.mrf.mxu0
    %v2536 = vadd.f32 %v1878, %v2535
    %v2537 = vpop.f32.mrf.mxu0
    %2538 = vdwg.mxu0
    %2539 = vmatpush.bf16.msra.mxu0 %v2330
    %2540 = vmatpush.bf16.msra.mxu0 %v2326
    %2541 = vmatpush.bf16.msra.mxu0 %v2322
    %2542 = vmatpush.bf16.msra.mxu0 %v2318
    %2543 = vmatpush.bf16.msra.mxu0 %v2314
    %2544 = vmatpush.bf16.msra.mxu0 %v2310
    %2545 = vmatpush.bf16.msra.mxu0 %v2306
    %2546 = vmatpush.bf16.msra.mxu0 %v2302
    %2547 = vmatmul.bf16.gmra.mxu0 %v1745
    %v2548 = vpop.f32.mrf.mxu0
    %v2549 = vadd.f32 %v2536, %v2548
    %v2550 = vpop.f32.mrf.mxu0
    %2551 = vdwg.mxu0
    %2552 = vmatpush.bf16.msra.mxu0 %v2362
    %2553 = vmatpush.bf16.msra.mxu0 %v2358
    %2554 = vmatpush.bf16.msra.mxu0 %v2354
    %2555 = vmatpush.bf16.msra.mxu0 %v2350
    %2556 = vmatpush.bf16.msra.mxu0 %v2346
    %2557 = vmatpush.bf16.msra.mxu0 %v2342
    %2558 = vmatpush.bf16.msra.mxu0 %v2338
    %2559 = vmatpush.bf16.msra.mxu0 %v2334
    %2560 = vmatmul.bf16.gmra.mxu0 %v1746
    %v2561 = vpop.f32.mrf.mxu0
    %v2562 = vadd.f32 %v2549, %v2561
    %v2563 = vpop.f32.mrf.mxu0
    %2564 = vdwg.mxu0
    %2565 = vmatpush.bf16.msra.mxu0 %v2394
    %2566 = vmatpush.bf16.msra.mxu0 %v2390
    %2567 = vmatpush.bf16.msra.mxu0 %v2386
    %2568 = vmatpush.bf16.msra.mxu0 %v2382
    %2569 = vmatpush.bf16.msra.mxu0 %v2378
    %2570 = vmatpush.bf16.msra.mxu0 %v2374
    %2571 = vmatpush.bf16.msra.mxu0 %v2370
    %2572 = vmatpush.bf16.msra.mxu0 %v2366
    %2573 = vmatmul.bf16.gmra.mxu0 %v1747
    %v2574 = vpop.f32.mrf.mxu0
    %v2575 = vadd.f32 %v2562, %v2574
    %v2576 = vpop.f32.mrf.mxu0
    %2577 = vdwg.mxu0
    %2578 = vmatpush.bf16.msra.mxu0 %v2299
    %2579 = vmatpush.bf16.msra.mxu0 %v2295
    %2580 = vmatpush.bf16.msra.mxu0 %v2291
    %2581 = vmatpush.bf16.msra.mxu0 %v2287
    %2582 = vmatpush.bf16.msra.mxu0 %v2283
    %2583 = vmatpush.bf16.msra.mxu0 %v2279
    %2584 = vmatpush.bf16.msra.mxu0 %v2275
    %2585 = vmatpush.bf16.msra.mxu0 %v2271
    %2586 = vmatmul.bf16.gmra.mxu0 %v1744
    %v2587 = vpop.f32.mrf.mxu0
    %v2588 = vadd.f32 %v1879, %v2587
    %v2589 = vpop.f32.mrf.mxu0
    %2590 = vdwg.mxu0
    %2591 = vmatpush.bf16.msra.mxu0 %v2331
    %2592 = vmatpush.bf16.msra.mxu0 %v2327
    %2593 = vmatpush.bf16.msra.mxu0 %v2323
    %2594 = vmatpush.bf16.msra.mxu0 %v2319
    %2595 = vmatpush.bf16.msra.mxu0 %v2315
    %2596 = vmatpush.bf16.msra.mxu0 %v2311
    %2597 = vmatpush.bf16.msra.mxu0 %v2307
    %2598 = vmatpush.bf16.msra.mxu0 %v2303
    %2599 = vmatmul.bf16.gmra.mxu0 %v1745
    %v2600 = vpop.f32.mrf.mxu0
    %v2601 = vadd.f32 %v2588, %v2600
    %v2602 = vpop.f32.mrf.mxu0
    %2603 = vdwg.mxu0
    %2604 = vmatpush.bf16.msra.mxu0 %v2363
    %2605 = vmatpush.bf16.msra.mxu0 %v2359
    %2606 = vmatpush.bf16.msra.mxu0 %v2355
    %2607 = vmatpush.bf16.msra.mxu0 %v2351
    %2608 = vmatpush.bf16.msra.mxu0 %v2347
    %2609 = vmatpush.bf16.msra.mxu0 %v2343
    %2610 = vmatpush.bf16.msra.mxu0 %v2339
    %2611 = vmatpush.bf16.msra.mxu0 %v2335
    %2612 = vmatmul.bf16.gmra.mxu0 %v1746
    %v2613 = vpop.f32.mrf.mxu0
    %v2614 = vadd.f32 %v2601, %v2613
    %v2615 = vpop.f32.mrf.mxu0
    %2616 = vdwg.mxu0
    %2617 = vmatpush.bf16.msra.mxu0 %v2395
    %2618 = vmatpush.bf16.msra.mxu0 %v2391
    %2619 = vmatpush.bf16.msra.mxu0 %v2387
    %2620 = vmatpush.bf16.msra.mxu0 %v2383
    %2621 = vmatpush.bf16.msra.mxu0 %v2379
    %2622 = vmatpush.bf16.msra.mxu0 %v2375
    %2623 = vmatpush.bf16.msra.mxu0 %v2371
    %2624 = vmatpush.bf16.msra.mxu0 %v2367
    %2625 = vmatmul.bf16.gmra.mxu0 %v1747
    %v2626 = vpop.f32.mrf.mxu0
    %v2627 = vadd.f32 %v2614, %v2626
    %v2628 = vpop.f32.mrf.mxu0
    %2629 = vdwg.mxu0
    %2630 = vmatpush.bf16.msra.mxu0 %v2300
    %2631 = vmatpush.bf16.msra.mxu0 %v2296
    %2632 = vmatpush.bf16.msra.mxu0 %v2292
    %2633 = vmatpush.bf16.msra.mxu0 %v2288
    %2634 = vmatpush.bf16.msra.mxu0 %v2284
    %2635 = vmatpush.bf16.msra.mxu0 %v2280
    %2636 = vmatpush.bf16.msra.mxu0 %v2276
    %2637 = vmatpush.bf16.msra.mxu0 %v2272
    %2638 = vmatmul.bf16.gmra.mxu0 %v1744
    %v2639 = vpop.f32.mrf.mxu0
    %v2640 = vadd.f32 %v1880, %v2639
    %v2641 = vpop.f32.mrf.mxu0
    %2642 = vdwg.mxu0
    %2643 = vmatpush.bf16.msra.mxu0 %v2332
    %2644 = vmatpush.bf16.msra.mxu0 %v2328
    %2645 = vmatpush.bf16.msra.mxu0 %v2324
    %2646 = vmatpush.bf16.msra.mxu0 %v2320
    %2647 = vmatpush.bf16.msra.mxu0 %v2316
    %2648 = vmatpush.bf16.msra.mxu0 %v2312
    %2649 = vmatpush.bf16.msra.mxu0 %v2308
    %2650 = vmatpush.bf16.msra.mxu0 %v2304
    %2651 = vmatmul.bf16.gmra.mxu0 %v1745
    %v2652 = vpop.f32.mrf.mxu0
    %v2653 = vadd.f32 %v2640, %v2652
    %v2654 = vpop.f32.mrf.mxu0
    %2655 = vdwg.mxu0
    %2656 = vmatpush.bf16.msra.mxu0 %v2364
    %2657 = vmatpush.bf16.msra.mxu0 %v2360
    %2658 = vmatpush.bf16.msra.mxu0 %v2356
    %2659 = vmatpush.bf16.msra.mxu0 %v2352
    %2660 = vmatpush.bf16.msra.mxu0 %v2348
    %2661 = vmatpush.bf16.msra.mxu0 %v2344
    %2662 = vmatpush.bf16.msra.mxu0 %v2340
    %2663 = vmatpush.bf16.msra.mxu0 %v2336
    %2664 = vmatmul.bf16.gmra.mxu0 %v1746
    %v2665 = vpop.f32.mrf.mxu0
    %v2666 = vadd.f32 %v2653, %v2665
    %v2667 = vpop.f32.mrf.mxu0
    %2668 = vdwg.mxu0
    %2669 = vmatpush.bf16.msra.mxu0 %v2396
    %2670 = vmatpush.bf16.msra.mxu0 %v2392
    %2671 = vmatpush.bf16.msra.mxu0 %v2388
    %2672 = vmatpush.bf16.msra.mxu0 %v2384
    %2673 = vmatpush.bf16.msra.mxu0 %v2380
    %2674 = vmatpush.bf16.msra.mxu0 %v2376
    %2675 = vmatpush.bf16.msra.mxu0 %v2372
    %2676 = vmatpush.bf16.msra.mxu0 %v2368
    %2677 = vmatmul.bf16.gmra.mxu0 %v1747
    %v2678 = vpop.f32.mrf.mxu0
    %v2679 = vadd.f32 %v2666, %v2678
    %v2680 = vpop.f32.mrf.mxu0
    %2681 = vdwg.mxu0
    %2682 = vmatpush.bf16.msra.mxu0 %v2301
    %2683 = vmatpush.bf16.msra.mxu0 %v2297
    %2684 = vmatpush.bf16.msra.mxu0 %v2293
    %2685 = vmatpush.bf16.msra.mxu0 %v2289
    %2686 = vmatpush.bf16.msra.mxu0 %v2285
    %2687 = vmatpush.bf16.msra.mxu0 %v2281
    %2688 = vmatpush.bf16.msra.mxu0 %v2277
    %2689 = vmatpush.bf16.msra.mxu0 %v2273
    %2690 = vmatmul.bf16.gmra.mxu0 %v1744
    %v2691 = vpop.f32.mrf.mxu0
    %v2692 = vadd.f32 %v1881, %v2691
    %v2693 = vpop.f32.mrf.mxu0
    %2694 = vdwg.mxu0
    %2695 = vmatpush.bf16.msra.mxu0 %v2333
    %2696 = vmatpush.bf16.msra.mxu0 %v2329
    %2697 = vmatpush.bf16.msra.mxu0 %v2325
    %2698 = vmatpush.bf16.msra.mxu0 %v2321
    %2699 = vmatpush.bf16.msra.mxu0 %v2317
    %2700 = vmatpush.bf16.msra.mxu0 %v2313
    %2701 = vmatpush.bf16.msra.mxu0 %v2309
    %2702 = vmatpush.bf16.msra.mxu0 %v2305
    %2703 = vmatmul.bf16.gmra.mxu0 %v1745
    %v2704 = vpop.f32.mrf.mxu0
    %v2705 = vadd.f32 %v2692, %v2704
    %v2706 = vpop.f32.mrf.mxu0
    %2707 = vdwg.mxu0
    %2708 = vmatpush.bf16.msra.mxu0 %v2365
    %2709 = vmatpush.bf16.msra.mxu0 %v2361
    %2710 = vmatpush.bf16.msra.mxu0 %v2357
    %2711 = vmatpush.bf16.msra.mxu0 %v2353
    %2712 = vmatpush.bf16.msra.mxu0 %v2349
    %2713 = vmatpush.bf16.msra.mxu0 %v2345
    %2714 = vmatpush.bf16.msra.mxu0 %v2341
    %2715 = vmatpush.bf16.msra.mxu0 %v2337
    %2716 = vmatmul.bf16.gmra.mxu0 %v1746
    %v2717 = vpop.f32.mrf.mxu0
    %v2718 = vadd.f32 %v2705, %v2717
    %v2719 = vpop.f32.mrf.mxu0
    %2720 = vdwg.mxu0
    %2721 = vmatpush.bf16.msra.mxu0 %v2397
    %2722 = vmatpush.bf16.msra.mxu0 %v2393
    %2723 = vmatpush.bf16.msra.mxu0 %v2389
    %2724 = vmatpush.bf16.msra.mxu0 %v2385
    %2725 = vmatpush.bf16.msra.mxu0 %v2381
    %2726 = vmatpush.bf16.msra.mxu0 %v2377
    %2727 = vmatpush.bf16.msra.mxu0 %v2373
    %2728 = vmatpush.bf16.msra.mxu0 %v2369
    %2729 = vmatmul.bf16.gmra.mxu0 %v1747
    %v2730 = vpop.f32.mrf.mxu0
    %v2731 = vadd.f32 %v2718, %v2730
    %v2732 = vpop.f32.mrf.mxu0
    %2733 = vdwg.mxu0
    %s2734 = scalar_lea.vmem [#allocation10], 1
    %v2735 = vld [vmem:[%s2734] ss:$8 sm:$0xf]
    %v2737 = vperm.slane %v2735, 0
    %v2738 = vperm.slane %v2735, 1
    %v2739 = vperm.slane %v2735, 2
    %v2740 = vperm.slane %v2735, 3
    %v2745 = vmul.f32 %v544, %v2737
    %v2746 = vmul.f32 %v544, %v2738
    %v2747 = vmul.f32 %v544, %v2739
    %v2748 = vmul.f32 %v544, %v2740
    %s2749 = scalar_lea.vmem [#allocation10], 2
    %v2750 = vld [vmem:[%s2749] ss:$8 sm:$0xf]
    %v2752 = vperm.slane %v2750, 0
    %v2753 = vperm.slane %v2750, 1
    %v2754 = vperm.slane %v2750, 2
    %v2755 = vperm.slane %v2750, 3
    %v2760 = vadd.f32 %v2745, %v2752
    %v2761 = vadd.f32 %v2746, %v2753
    %v2762 = vadd.f32 %v2747, %v2754
    %v2763 = vadd.f32 %v2748, %v2755
    %s2764 = scalar_lea.vmem [#allocation10], 3
    %v2765 = vld [vmem:[%s2764] ss:$8 sm:$0xf]
    %v2767 = vperm.slane %v2765, 0
    %v2768 = vperm.slane %v2765, 1
    %v2769 = vperm.slane %v2765, 2
    %v2770 = vperm.slane %v2765, 3
    %v2775 = vmul.f32 %v544, %v2767
    %v2776 = vmul.f32 %v544, %v2768
    %v2777 = vmul.f32 %v544, %v2769
    %v2778 = vmul.f32 %v544, %v2770
    %s2779 = scalar_lea.vmem [#allocation10], 4
    %v2780 = vld [vmem:[%s2779] ss:$8 sm:$0xf]
    %v2782 = vperm.slane %v2780, 0
    %v2783 = vperm.slane %v2780, 1
    %v2784 = vperm.slane %v2780, 2
    %v2785 = vperm.slane %v2780, 3
    %v2790 = vadd.f32 %v2775, %v2782
    %v2791 = vadd.f32 %v2776, %v2783
    %v2792 = vadd.f32 %v2777, %v2784
    %v2793 = vadd.f32 %v2778, %v2785
    %v2794 = vmul.f32 %v2760, %v2575
    %v2795 = vmul.f32 %v2761, %v2627
    %v2796 = vmul.f32 %v2762, %v2679
    %v2797 = vmul.f32 %v2763, %v2731
    %v2798 = vadd.f32 %v2794, %v2790
    %v2799 = vadd.f32 %v2795, %v2791
    %v2800 = vadd.f32 %v2796, %v2792
    %v2801 = vadd.f32 %v2797, %v2793
    %v2802 = vmax.f32 %v2798, 0.0
    %v2803 = vmax.f32 %v2799, 0.0
    %v2804 = vmax.f32 %v2800, 0.0
    %v2805 = vmax.f32 %v2801, 0.0
    %v2806 = vpack.c.bf16 %v2802, %v2802
    %v2807 = vpack.c.bf16 %v2803, %v2803
    %v2808 = vpack.c.bf16 %v2804, %v2804
    %v2809 = vpack.c.bf16 %v2805, %v2805
    %v2810 = vld [vmem:[#allocation12] sm:$0xf]
    %v2811 = vld [vmem:[#allocation12 + $0x4] sm:$0xf]
    %v2812 = vld [vmem:[#allocation12 + $0x8] sm:$0xf]
    %v2813 = vld [vmem:[#allocation12 + $0xc] sm:$0xf]
    %v2814 = vld [vmem:[#allocation12 + $0x10] sm:$0xf]
    %v2815 = vld [vmem:[#allocation12 + $0x14] sm:$0xf]
    %v2816 = vld [vmem:[#allocation12 + $0x18] sm:$0xf]
    %v2817 = vld [vmem:[#allocation12 + $0x1c] sm:$0xf]
    %v2818 = vld [vmem:[#allocation12 + $0x20] sm:$0xf]
    %v2819 = vld [vmem:[#allocation12 + $0x24] sm:$0xf]
    %v2820 = vld [vmem:[#allocation12 + $0x28] sm:$0xf]
    %v2821 = vld [vmem:[#allocation12 + $0x2c] sm:$0xf]
    %v2822 = vld [vmem:[#allocation12 + $0x30] sm:$0xf]
    %v2823 = vld [vmem:[#allocation12 + $0x34] sm:$0xf]
    %v2824 = vld [vmem:[#allocation12 + $0x38] sm:$0xf]
    %v2825 = vld [vmem:[#allocation12 + $0x3c] sm:$0xf]
    %v2826 = vld [vmem:[#allocation12 + $0x40] sm:$0xf]
    %v2827 = vld [vmem:[#allocation12 + $0x44] sm:$0xf]
    %v2828 = vld [vmem:[#allocation12 + $0x48] sm:$0xf]
    %v2829 = vld [vmem:[#allocation12 + $0x4c] sm:$0xf]
    %v2830 = vld [vmem:[#allocation12 + $0x50] sm:$0xf]
    %v2831 = vld [vmem:[#allocation12 + $0x54] sm:$0xf]
    %v2832 = vld [vmem:[#allocation12 + $0x58] sm:$0xf]
    %v2833 = vld [vmem:[#allocation12 + $0x5c] sm:$0xf]
    %v2834 = vld [vmem:[#allocation12 + $0x60] sm:$0xf]
    %v2835 = vld [vmem:[#allocation12 + $0x64] sm:$0xf]
    %v2836 = vld [vmem:[#allocation12 + $0x68] sm:$0xf]
    %v2837 = vld [vmem:[#allocation12 + $0x6c] sm:$0xf]
    %v2838 = vld [vmem:[#allocation12 + $0x70] sm:$0xf]
    %v2839 = vld [vmem:[#allocation12 + $0x74] sm:$0xf]
    %v2840 = vld [vmem:[#allocation12 + $0x78] sm:$0xf]
    %v2841 = vld [vmem:[#allocation12 + $0x7c] sm:$0xf]
    %v2842 = vld [vmem:[#allocation12 + $0x80] sm:$0xf]
    %v2843 = vld [vmem:[#allocation12 + $0x84] sm:$0xf]
    %v2844 = vld [vmem:[#allocation12 + $0x88] sm:$0xf]
    %v2845 = vld [vmem:[#allocation12 + $0x8c] sm:$0xf]
    %v2846 = vld [vmem:[#allocation12 + $0x90] sm:$0xf]
    %v2847 = vld [vmem:[#allocation12 + $0x94] sm:$0xf]
    %v2848 = vld [vmem:[#allocation12 + $0x98] sm:$0xf]
    %v2849 = vld [vmem:[#allocation12 + $0x9c] sm:$0xf]
    %v2850 = vld [vmem:[#allocation12 + $0xa0] sm:$0xf]
    %v2851 = vld [vmem:[#allocation12 + $0xa4] sm:$0xf]
    %v2852 = vld [vmem:[#allocation12 + $0xa8] sm:$0xf]
    %v2853 = vld [vmem:[#allocation12 + $0xac] sm:$0xf]
    %v2854 = vld [vmem:[#allocation12 + $0xb0] sm:$0xf]
    %v2855 = vld [vmem:[#allocation12 + $0xb4] sm:$0xf]
    %v2856 = vld [vmem:[#allocation12 + $0xb8] sm:$0xf]
    %v2857 = vld [vmem:[#allocation12 + $0xbc] sm:$0xf]
    %v2858 = vld [vmem:[#allocation12 + $0xc0] sm:$0xf]
    %v2859 = vld [vmem:[#allocation12 + $0xc4] sm:$0xf]
    %v2860 = vld [vmem:[#allocation12 + $0xc8] sm:$0xf]
    %v2861 = vld [vmem:[#allocation12 + $0xcc] sm:$0xf]
    %v2862 = vld [vmem:[#allocation12 + $0xd0] sm:$0xf]
    %v2863 = vld [vmem:[#allocation12 + $0xd4] sm:$0xf]
    %v2864 = vld [vmem:[#allocation12 + $0xd8] sm:$0xf]
    %v2865 = vld [vmem:[#allocation12 + $0xdc] sm:$0xf]
    %v2866 = vld [vmem:[#allocation12 + $0xe0] sm:$0xf]
    %v2867 = vld [vmem:[#allocation12 + $0xe4] sm:$0xf]
    %v2868 = vld [vmem:[#allocation12 + $0xe8] sm:$0xf]
    %v2869 = vld [vmem:[#allocation12 + $0xec] sm:$0xf]
    %v2870 = vld [vmem:[#allocation12 + $0xf0] sm:$0xf]
    %v2871 = vld [vmem:[#allocation12 + $0xf4] sm:$0xf]
    %v2872 = vld [vmem:[#allocation12 + $0xf8] sm:$0xf]
    %v2873 = vld [vmem:[#allocation12 + $0xfc] sm:$0xf]
    %v2874 = vld [vmem:[%s9] sm:$0x1]
    %v2875 = vperm.slane %v2874, 0
    %v2940 = vunpack.c.l.b16 %v2810
    %v2941 = vunpack.c.l.b16 %v2811
    %v2942 = vunpack.c.l.b16 %v2812
    %v2943 = vunpack.c.l.b16 %v2813
    %v2944 = vunpack.c.l.b16 %v2814
    %v2945 = vunpack.c.l.b16 %v2815
    %v2946 = vunpack.c.l.b16 %v2816
    %v2947 = vunpack.c.l.b16 %v2817
    %v2948 = vunpack.c.l.b16 %v2818
    %v2949 = vunpack.c.l.b16 %v2819
    %v2950 = vunpack.c.l.b16 %v2820
    %v2951 = vunpack.c.l.b16 %v2821
    %v2952 = vunpack.c.l.b16 %v2822
    %v2953 = vunpack.c.l.b16 %v2823
    %v2954 = vunpack.c.l.b16 %v2824
    %v2955 = vunpack.c.l.b16 %v2825
    %v2956 = vunpack.c.l.b16 %v2826
    %v2957 = vunpack.c.l.b16 %v2827
    %v2958 = vunpack.c.l.b16 %v2828
    %v2959 = vunpack.c.l.b16 %v2829
    %v2960 = vunpack.c.l.b16 %v2830
    %v2961 = vunpack.c.l.b16 %v2831
    %v2962 = vunpack.c.l.b16 %v2832
    %v2963 = vunpack.c.l.b16 %v2833
    %v2964 = vunpack.c.l.b16 %v2834
    %v2965 = vunpack.c.l.b16 %v2835
    %v2966 = vunpack.c.l.b16 %v2836
    %v2967 = vunpack.c.l.b16 %v2837
    %v2968 = vunpack.c.l.b16 %v2838
    %v2969 = vunpack.c.l.b16 %v2839
    %v2970 = vunpack.c.l.b16 %v2840
    %v2971 = vunpack.c.l.b16 %v2841
    %v2972 = vunpack.c.l.b16 %v2842
    %v2973 = vunpack.c.l.b16 %v2843
    %v2974 = vunpack.c.l.b16 %v2844
    %v2975 = vunpack.c.l.b16 %v2845
    %v2976 = vunpack.c.l.b16 %v2846
    %v2977 = vunpack.c.l.b16 %v2847
    %v2978 = vunpack.c.l.b16 %v2848
    %v2979 = vunpack.c.l.b16 %v2849
    %v2980 = vunpack.c.l.b16 %v2850
    %v2981 = vunpack.c.l.b16 %v2851
    %v2982 = vunpack.c.l.b16 %v2852
    %v2983 = vunpack.c.l.b16 %v2853
    %v2984 = vunpack.c.l.b16 %v2854
    %v2985 = vunpack.c.l.b16 %v2855
    %v2986 = vunpack.c.l.b16 %v2856
    %v2987 = vunpack.c.l.b16 %v2857
    %v2988 = vunpack.c.l.b16 %v2858
    %v2989 = vunpack.c.l.b16 %v2859
    %v2990 = vunpack.c.l.b16 %v2860
    %v2991 = vunpack.c.l.b16 %v2861
    %v2992 = vunpack.c.l.b16 %v2862
    %v2993 = vunpack.c.l.b16 %v2863
    %v2994 = vunpack.c.l.b16 %v2864
    %v2995 = vunpack.c.l.b16 %v2865
    %v2996 = vunpack.c.l.b16 %v2866
    %v2997 = vunpack.c.l.b16 %v2867
    %v2998 = vunpack.c.l.b16 %v2868
    %v2999 = vunpack.c.l.b16 %v2869
    %v3000 = vunpack.c.l.b16 %v2870
    %v3001 = vunpack.c.l.b16 %v2871
    %v3002 = vunpack.c.l.b16 %v2872
    %v3003 = vunpack.c.l.b16 %v2873
    %v3004 = vpack.c.b16 %v2941, %v2940
    %v3005 = vpack.c.b16 %v2943, %v2942
    %v3006 = vpack.c.b16 %v2945, %v2944
    %v3007 = vpack.c.b16 %v2947, %v2946
    %v3008 = vpack.c.b16 %v2949, %v2948
    %v3009 = vpack.c.b16 %v2951, %v2950
    %v3010 = vpack.c.b16 %v2953, %v2952
    %v3011 = vpack.c.b16 %v2955, %v2954
    %v3012 = vpack.c.b16 %v2957, %v2956
    %v3013 = vpack.c.b16 %v2959, %v2958
    %v3014 = vpack.c.b16 %v2961, %v2960
    %v3015 = vpack.c.b16 %v2963, %v2962
    %v3016 = vpack.c.b16 %v2965, %v2964
    %v3017 = vpack.c.b16 %v2967, %v2966
    %v3018 = vpack.c.b16 %v2969, %v2968
    %v3019 = vpack.c.b16 %v2971, %v2970
    %v3020 = vpack.c.b16 %v2973, %v2972
    %v3021 = vpack.c.b16 %v2975, %v2974
    %v3022 = vpack.c.b16 %v2977, %v2976
    %v3023 = vpack.c.b16 %v2979, %v2978
    %v3024 = vpack.c.b16 %v2981, %v2980
    %v3025 = vpack.c.b16 %v2983, %v2982
    %v3026 = vpack.c.b16 %v2985, %v2984
    %v3027 = vpack.c.b16 %v2987, %v2986
    %v3028 = vpack.c.b16 %v2989, %v2988
    %v3029 = vpack.c.b16 %v2991, %v2990
    %v3030 = vpack.c.b16 %v2993, %v2992
    %v3031 = vpack.c.b16 %v2995, %v2994
    %v3032 = vpack.c.b16 %v2997, %v2996
    %v3033 = vpack.c.b16 %v2999, %v2998
    %v3034 = vpack.c.b16 %v3001, %v3000
    %v3035 = vpack.c.b16 %v3003, %v3002
    %3068 = vmatpush.bf16.msra.mxu0 %v3011
    %3069 = vmatpush.bf16.msra.mxu0 %v3010
    %3070 = vmatpush.bf16.msra.mxu0 %v3009
    %3071 = vmatpush.bf16.msra.mxu0 %v3008
    %3072 = vmatpush.bf16.msra.mxu0 %v3007
    %3073 = vmatpush.bf16.msra.mxu0 %v3006
    %3074 = vmatpush.bf16.msra.mxu0 %v3005
    %3075 = vmatpush.bf16.msra.mxu0 %v3004
    %3076 = vmatmul.bf16.gmra.mxu0 %v2806
    %v3077 = vpop.f32.mrf.mxu0
    %v3078 = vadd.f32 %v2875, %v3077
    %v3079 = vpop.f32.mrf.mxu0
    %3080 = vdwg.mxu0
    %3081 = vmatpush.bf16.msra.mxu0 %v3019
    %3082 = vmatpush.bf16.msra.mxu0 %v3018
    %3083 = vmatpush.bf16.msra.mxu0 %v3017
    %3084 = vmatpush.bf16.msra.mxu0 %v3016
    %3085 = vmatpush.bf16.msra.mxu0 %v3015
    %3086 = vmatpush.bf16.msra.mxu0 %v3014
    %3087 = vmatpush.bf16.msra.mxu0 %v3013
    %3088 = vmatpush.bf16.msra.mxu0 %v3012
    %3089 = vmatmul.bf16.gmra.mxu0 %v2807
    %v3090 = vpop.f32.mrf.mxu0
    %v3091 = vadd.f32 %v3078, %v3090
    %v3092 = vpop.f32.mrf.mxu0
    %3093 = vdwg.mxu0
    %3094 = vmatpush.bf16.msra.mxu0 %v3027
    %3095 = vmatpush.bf16.msra.mxu0 %v3026
    %3096 = vmatpush.bf16.msra.mxu0 %v3025
    %3097 = vmatpush.bf16.msra.mxu0 %v3024
    %3098 = vmatpush.bf16.msra.mxu0 %v3023
    %3099 = vmatpush.bf16.msra.mxu0 %v3022
    %3100 = vmatpush.bf16.msra.mxu0 %v3021
    %3101 = vmatpush.bf16.msra.mxu0 %v3020
    %3102 = vmatmul.bf16.gmra.mxu0 %v2808
    %v3103 = vpop.f32.mrf.mxu0
    %v3104 = vadd.f32 %v3091, %v3103
    %v3105 = vpop.f32.mrf.mxu0
    %3106 = vdwg.mxu0
    %3107 = vmatpush.bf16.msra.mxu0 %v3035
    %3108 = vmatpush.bf16.msra.mxu0 %v3034
    %3109 = vmatpush.bf16.msra.mxu0 %v3033
    %3110 = vmatpush.bf16.msra.mxu0 %v3032
    %3111 = vmatpush.bf16.msra.mxu0 %v3031
    %3112 = vmatpush.bf16.msra.mxu0 %v3030
    %3113 = vmatpush.bf16.msra.mxu0 %v3029
    %3114 = vmatpush.bf16.msra.mxu0 %v3028
    %3115 = vmatmul.bf16.gmra.mxu0 %v2809
    %v3116 = vpop.f32.mrf.mxu0
    %v3117 = vadd.f32 %v3104, %v3116
    %v3118 = vpop.f32.mrf.mxu0
    %3119 = vdwg.mxu0
    %v3120 = vld [vmem:[%s9 + $0x1] sm:$0x1]
    %v3121 = vperm.slane %v3120, 0
    %v3122 = vmul.f32 %v544, %v3121
    %v3123 = vld [vmem:[%s9 + $0x2] sm:$0x1]
    %v3124 = vperm.slane %v3123, 0
    %v3125 = vadd.f32 %v3122, %v3124
    %v3126 = vld [vmem:[%s9 + $0x3] sm:$0x1]
    %v3127 = vperm.slane %v3126, 0
    %v3128 = vmul.f32 %v544, %v3127
    %v3129 = vld [vmem:[%s9 + $0x4] sm:$0x1]
    %v3130 = vperm.slane %v3129, 0
    %v3131 = vadd.f32 %v3128, %v3130
    %v3132 = vmul.f32 %v3125, %v3117
    %v3133 = vadd.f32 %v3132, %v3131
    %v3134 = vpack.c.bf16 %v678, %v678
    %v3135 = vpack.c.bf16 %v679, %v679
    %v3136 = vpack.c.bf16 %v680, %v680
    %v3137 = vpack.c.bf16 %v681, %v681
    %v3138 = vld [vmem:[#allocation13] sm:$0xff]
    %v3139 = vld [vmem:[#allocation13 + $0x8] sm:$0xff]
    %v3140 = vld [vmem:[#allocation13 + $0x10] sm:$0xff]
    %v3141 = vld [vmem:[#allocation13 + $0x18] sm:$0xff]
    %v3142 = vld [vmem:[#allocation13 + $0x20] sm:$0xff]
    %v3143 = vld [vmem:[#allocation13 + $0x28] sm:$0xff]
    %v3144 = vld [vmem:[#allocation13 + $0x30] sm:$0xff]
    %v3145 = vld [vmem:[#allocation13 + $0x38] sm:$0xff]
    %v3146 = vld [vmem:[#allocation13 + $0x40] sm:$0xff]
    %v3147 = vld [vmem:[#allocation13 + $0x48] sm:$0xff]
    %v3148 = vld [vmem:[#allocation13 + $0x50] sm:$0xff]
    %v3149 = vld [vmem:[#allocation13 + $0x58] sm:$0xff]
    %v3150 = vld [vmem:[#allocation13 + $0x60] sm:$0xff]
    %v3151 = vld [vmem:[#allocation13 + $0x68] sm:$0xff]
    %v3152 = vld [vmem:[#allocation13 + $0x70] sm:$0xff]
    %v3153 = vld [vmem:[#allocation13 + $0x78] sm:$0xff]
    %v3154 = vld [vmem:[#allocation13 + $0x80] sm:$0xff]
    %v3155 = vld [vmem:[#allocation13 + $0x88] sm:$0xff]
    %v3156 = vld [vmem:[#allocation13 + $0x90] sm:$0xff]
    %v3157 = vld [vmem:[#allocation13 + $0x98] sm:$0xff]
    %v3158 = vld [vmem:[#allocation13 + $0xa0] sm:$0xff]
    %v3159 = vld [vmem:[#allocation13 + $0xa8] sm:$0xff]
    %v3160 = vld [vmem:[#allocation13 + $0xb0] sm:$0xff]
    %v3161 = vld [vmem:[#allocation13 + $0xb8] sm:$0xff]
    %v3162 = vld [vmem:[#allocation13 + $0xc0] sm:$0xff]
    %v3163 = vld [vmem:[#allocation13 + $0xc8] sm:$0xff]
    %v3164 = vld [vmem:[#allocation13 + $0xd0] sm:$0xff]
    %v3165 = vld [vmem:[#allocation13 + $0xd8] sm:$0xff]
    %v3166 = vld [vmem:[#allocation13 + $0xe0] sm:$0xff]
    %v3167 = vld [vmem:[#allocation13 + $0xe8] sm:$0xff]
    %v3168 = vld [vmem:[#allocation13 + $0xf0] sm:$0xff]
    %v3169 = vld [vmem:[#allocation13 + $0xf8] sm:$0xff]
    %v3170 = vld [vmem:[#allocation13 + $0x100] sm:$0xff]
    %v3171 = vld [vmem:[#allocation13 + $0x108] sm:$0xff]
    %v3172 = vld [vmem:[#allocation13 + $0x110] sm:$0xff]
    %v3173 = vld [vmem:[#allocation13 + $0x118] sm:$0xff]
    %v3174 = vld [vmem:[#allocation13 + $0x120] sm:$0xff]
    %v3175 = vld [vmem:[#allocation13 + $0x128] sm:$0xff]
    %v3176 = vld [vmem:[#allocation13 + $0x130] sm:$0xff]
    %v3177 = vld [vmem:[#allocation13 + $0x138] sm:$0xff]
    %v3178 = vld [vmem:[#allocation13 + $0x140] sm:$0xff]
    %v3179 = vld [vmem:[#allocation13 + $0x148] sm:$0xff]
    %v3180 = vld [vmem:[#allocation13 + $0x150] sm:$0xff]
    %v3181 = vld [vmem:[#allocation13 + $0x158] sm:$0xff]
    %v3182 = vld [vmem:[#allocation13 + $0x160] sm:$0xff]
    %v3183 = vld [vmem:[#allocation13 + $0x168] sm:$0xff]
    %v3184 = vld [vmem:[#allocation13 + $0x170] sm:$0xff]
    %v3185 = vld [vmem:[#allocation13 + $0x178] sm:$0xff]
    %v3186 = vld [vmem:[#allocation13 + $0x180] sm:$0xff]
    %v3187 = vld [vmem:[#allocation13 + $0x188] sm:$0xff]
    %v3188 = vld [vmem:[#allocation13 + $0x190] sm:$0xff]
    %v3189 = vld [vmem:[#allocation13 + $0x198] sm:$0xff]
    %v3190 = vld [vmem:[#allocation13 + $0x1a0] sm:$0xff]
    %v3191 = vld [vmem:[#allocation13 + $0x1a8] sm:$0xff]
    %v3192 = vld [vmem:[#allocation13 + $0x1b0] sm:$0xff]
    %v3193 = vld [vmem:[#allocation13 + $0x1b8] sm:$0xff]
    %v3194 = vld [vmem:[#allocation13 + $0x1c0] sm:$0xff]
    %v3195 = vld [vmem:[#allocation13 + $0x1c8] sm:$0xff]
    %v3196 = vld [vmem:[#allocation13 + $0x1d0] sm:$0xff]
    %v3197 = vld [vmem:[#allocation13 + $0x1d8] sm:$0xff]
    %v3198 = vld [vmem:[#allocation13 + $0x1e0] sm:$0xff]
    %v3199 = vld [vmem:[#allocation13 + $0x1e8] sm:$0xff]
    %v3200 = vld [vmem:[#allocation13 + $0x1f0] sm:$0xff]
    %v3201 = vld [vmem:[#allocation13 + $0x1f8] sm:$0xff]
    %v3202 = vld [vmem:[#allocation13 + $0x200] sm:$0xff]
    %v3203 = vld [vmem:[#allocation13 + $0x208] sm:$0xff]
    %v3204 = vld [vmem:[#allocation13 + $0x210] sm:$0xff]
    %v3205 = vld [vmem:[#allocation13 + $0x218] sm:$0xff]
    %v3206 = vld [vmem:[#allocation13 + $0x220] sm:$0xff]
    %v3207 = vld [vmem:[#allocation13 + $0x228] sm:$0xff]
    %v3208 = vld [vmem:[#allocation13 + $0x230] sm:$0xff]
    %v3209 = vld [vmem:[#allocation13 + $0x238] sm:$0xff]
    %v3210 = vld [vmem:[#allocation13 + $0x240] sm:$0xff]
    %v3211 = vld [vmem:[#allocation13 + $0x248] sm:$0xff]
    %v3212 = vld [vmem:[#allocation13 + $0x250] sm:$0xff]
    %v3213 = vld [vmem:[#allocation13 + $0x258] sm:$0xff]
    %v3214 = vld [vmem:[#allocation13 + $0x260] sm:$0xff]
    %v3215 = vld [vmem:[#allocation13 + $0x268] sm:$0xff]
    %v3216 = vld [vmem:[#allocation13 + $0x270] sm:$0xff]
    %v3217 = vld [vmem:[#allocation13 + $0x278] sm:$0xff]
    %v3218 = vld [vmem:[#allocation13 + $0x280] sm:$0xff]
    %v3219 = vld [vmem:[#allocation13 + $0x288] sm:$0xff]
    %v3220 = vld [vmem:[#allocation13 + $0x290] sm:$0xff]
    %v3221 = vld [vmem:[#allocation13 + $0x298] sm:$0xff]
    %v3222 = vld [vmem:[#allocation13 + $0x2a0] sm:$0xff]
    %v3223 = vld [vmem:[#allocation13 + $0x2a8] sm:$0xff]
    %v3224 = vld [vmem:[#allocation13 + $0x2b0] sm:$0xff]
    %v3225 = vld [vmem:[#allocation13 + $0x2b8] sm:$0xff]
    %v3226 = vld [vmem:[#allocation13 + $0x2c0] sm:$0xff]
    %v3227 = vld [vmem:[#allocation13 + $0x2c8] sm:$0xff]
    %v3228 = vld [vmem:[#allocation13 + $0x2d0] sm:$0xff]
    %v3229 = vld [vmem:[#allocation13 + $0x2d8] sm:$0xff]
    %v3230 = vld [vmem:[#allocation13 + $0x2e0] sm:$0xff]
    %v3231 = vld [vmem:[#allocation13 + $0x2e8] sm:$0xff]
    %v3232 = vld [vmem:[#allocation13 + $0x2f0] sm:$0xff]
    %v3233 = vld [vmem:[#allocation13 + $0x2f8] sm:$0xff]
    %v3234 = vld [vmem:[#allocation13 + $0x300] sm:$0xff]
    %v3235 = vld [vmem:[#allocation13 + $0x308] sm:$0xff]
    %v3236 = vld [vmem:[#allocation13 + $0x310] sm:$0xff]
    %v3237 = vld [vmem:[#allocation13 + $0x318] sm:$0xff]
    %v3238 = vld [vmem:[#allocation13 + $0x320] sm:$0xff]
    %v3239 = vld [vmem:[#allocation13 + $0x328] sm:$0xff]
    %v3240 = vld [vmem:[#allocation13 + $0x330] sm:$0xff]
    %v3241 = vld [vmem:[#allocation13 + $0x338] sm:$0xff]
    %v3242 = vld [vmem:[#allocation13 + $0x340] sm:$0xff]
    %v3243 = vld [vmem:[#allocation13 + $0x348] sm:$0xff]
    %v3244 = vld [vmem:[#allocation13 + $0x350] sm:$0xff]
    %v3245 = vld [vmem:[#allocation13 + $0x358] sm:$0xff]
    %v3246 = vld [vmem:[#allocation13 + $0x360] sm:$0xff]
    %v3247 = vld [vmem:[#allocation13 + $0x368] sm:$0xff]
    %v3248 = vld [vmem:[#allocation13 + $0x370] sm:$0xff]
    %v3249 = vld [vmem:[#allocation13 + $0x378] sm:$0xff]
    %v3250 = vld [vmem:[#allocation13 + $0x380] sm:$0xff]
    %v3251 = vld [vmem:[#allocation13 + $0x388] sm:$0xff]
    %v3252 = vld [vmem:[#allocation13 + $0x390] sm:$0xff]
    %v3253 = vld [vmem:[#allocation13 + $0x398] sm:$0xff]
    %v3254 = vld [vmem:[#allocation13 + $0x3a0] sm:$0xff]
    %v3255 = vld [vmem:[#allocation13 + $0x3a8] sm:$0xff]
    %v3256 = vld [vmem:[#allocation13 + $0x3b0] sm:$0xff]
    %v3257 = vld [vmem:[#allocation13 + $0x3b8] sm:$0xff]
    %v3258 = vld [vmem:[#allocation13 + $0x3c0] sm:$0xff]
    %v3259 = vld [vmem:[#allocation13 + $0x3c8] sm:$0xff]
    %v3260 = vld [vmem:[#allocation13 + $0x3d0] sm:$0xff]
    %v3261 = vld [vmem:[#allocation13 + $0x3d8] sm:$0xff]
    %v3262 = vld [vmem:[#allocation13 + $0x3e0] sm:$0xff]
    %v3263 = vld [vmem:[#allocation13 + $0x3e8] sm:$0xff]
    %v3264 = vld [vmem:[#allocation13 + $0x3f0] sm:$0xff]
    %v3265 = vld [vmem:[#allocation13 + $0x3f8] sm:$0xff]
    %v3266 = vld [vmem:[#allocation15] ss:$8 sm:$0xf]
    %v3268 = vperm.slane %v3266, 0
    %v3269 = vperm.slane %v3266, 1
    %v3270 = vperm.slane %v3266, 2
    %v3271 = vperm.slane %v3266, 3
    %v3404 = vunpack.c.l.b16 %v3138
    %v3405 = vunpack.c.h.b16 %v3138
    %v3406 = vunpack.c.l.b16 %v3139
    %v3407 = vunpack.c.h.b16 %v3139
    %v3408 = vunpack.c.l.b16 %v3140
    %v3409 = vunpack.c.h.b16 %v3140
    %v3410 = vunpack.c.l.b16 %v3141
    %v3411 = vunpack.c.h.b16 %v3141
    %v3412 = vunpack.c.l.b16 %v3142
    %v3413 = vunpack.c.h.b16 %v3142
    %v3414 = vunpack.c.l.b16 %v3143
    %v3415 = vunpack.c.h.b16 %v3143
    %v3416 = vunpack.c.l.b16 %v3144
    %v3417 = vunpack.c.h.b16 %v3144
    %v3418 = vunpack.c.l.b16 %v3145
    %v3419 = vunpack.c.h.b16 %v3145
    %v3420 = vunpack.c.l.b16 %v3146
    %v3421 = vunpack.c.h.b16 %v3146
    %v3422 = vunpack.c.l.b16 %v3147
    %v3423 = vunpack.c.h.b16 %v3147
    %v3424 = vunpack.c.l.b16 %v3148
    %v3425 = vunpack.c.h.b16 %v3148
    %v3426 = vunpack.c.l.b16 %v3149
    %v3427 = vunpack.c.h.b16 %v3149
    %v3428 = vunpack.c.l.b16 %v3150
    %v3429 = vunpack.c.h.b16 %v3150
    %v3430 = vunpack.c.l.b16 %v3151
    %v3431 = vunpack.c.h.b16 %v3151
    %v3432 = vunpack.c.l.b16 %v3152
    %v3433 = vunpack.c.h.b16 %v3152
    %v3434 = vunpack.c.l.b16 %v3153
    %v3435 = vunpack.c.h.b16 %v3153
    %v3436 = vunpack.c.l.b16 %v3154
    %v3437 = vunpack.c.h.b16 %v3154
    %v3438 = vunpack.c.l.b16 %v3155
    %v3439 = vunpack.c.h.b16 %v3155
    %v3440 = vunpack.c.l.b16 %v3156
    %v3441 = vunpack.c.h.b16 %v3156
    %v3442 = vunpack.c.l.b16 %v3157
    %v3443 = vunpack.c.h.b16 %v3157
    %v3444 = vunpack.c.l.b16 %v3158
    %v3445 = vunpack.c.h.b16 %v3158
    %v3446 = vunpack.c.l.b16 %v3159
    %v3447 = vunpack.c.h.b16 %v3159
    %v3448 = vunpack.c.l.b16 %v3160
    %v3449 = vunpack.c.h.b16 %v3160
    %v3450 = vunpack.c.l.b16 %v3161
    %v3451 = vunpack.c.h.b16 %v3161
    %v3452 = vunpack.c.l.b16 %v3162
    %v3453 = vunpack.c.h.b16 %v3162
    %v3454 = vunpack.c.l.b16 %v3163
    %v3455 = vunpack.c.h.b16 %v3163
    %v3456 = vunpack.c.l.b16 %v3164
    %v3457 = vunpack.c.h.b16 %v3164
    %v3458 = vunpack.c.l.b16 %v3165
    %v3459 = vunpack.c.h.b16 %v3165
    %v3460 = vunpack.c.l.b16 %v3166
    %v3461 = vunpack.c.h.b16 %v3166
    %v3462 = vunpack.c.l.b16 %v3167
    %v3463 = vunpack.c.h.b16 %v3167
    %v3464 = vunpack.c.l.b16 %v3168
    %v3465 = vunpack.c.h.b16 %v3168
    %v3466 = vunpack.c.l.b16 %v3169
    %v3467 = vunpack.c.h.b16 %v3169
    %v3468 = vunpack.c.l.b16 %v3170
    %v3469 = vunpack.c.h.b16 %v3170
    %v3470 = vunpack.c.l.b16 %v3171
    %v3471 = vunpack.c.h.b16 %v3171
    %v3472 = vunpack.c.l.b16 %v3172
    %v3473 = vunpack.c.h.b16 %v3172
    %v3474 = vunpack.c.l.b16 %v3173
    %v3475 = vunpack.c.h.b16 %v3173
    %v3476 = vunpack.c.l.b16 %v3174
    %v3477 = vunpack.c.h.b16 %v3174
    %v3478 = vunpack.c.l.b16 %v3175
    %v3479 = vunpack.c.h.b16 %v3175
    %v3480 = vunpack.c.l.b16 %v3176
    %v3481 = vunpack.c.h.b16 %v3176
    %v3482 = vunpack.c.l.b16 %v3177
    %v3483 = vunpack.c.h.b16 %v3177
    %v3484 = vunpack.c.l.b16 %v3178
    %v3485 = vunpack.c.h.b16 %v3178
    %v3486 = vunpack.c.l.b16 %v3179
    %v3487 = vunpack.c.h.b16 %v3179
    %v3488 = vunpack.c.l.b16 %v3180
    %v3489 = vunpack.c.h.b16 %v3180
    %v3490 = vunpack.c.l.b16 %v3181
    %v3491 = vunpack.c.h.b16 %v3181
    %v3492 = vunpack.c.l.b16 %v3182
    %v3493 = vunpack.c.h.b16 %v3182
    %v3494 = vunpack.c.l.b16 %v3183
    %v3495 = vunpack.c.h.b16 %v3183
    %v3496 = vunpack.c.l.b16 %v3184
    %v3497 = vunpack.c.h.b16 %v3184
    %v3498 = vunpack.c.l.b16 %v3185
    %v3499 = vunpack.c.h.b16 %v3185
    %v3500 = vunpack.c.l.b16 %v3186
    %v3501 = vunpack.c.h.b16 %v3186
    %v3502 = vunpack.c.l.b16 %v3187
    %v3503 = vunpack.c.h.b16 %v3187
    %v3504 = vunpack.c.l.b16 %v3188
    %v3505 = vunpack.c.h.b16 %v3188
    %v3506 = vunpack.c.l.b16 %v3189
    %v3507 = vunpack.c.h.b16 %v3189
    %v3508 = vunpack.c.l.b16 %v3190
    %v3509 = vunpack.c.h.b16 %v3190
    %v3510 = vunpack.c.l.b16 %v3191
    %v3511 = vunpack.c.h.b16 %v3191
    %v3512 = vunpack.c.l.b16 %v3192
    %v3513 = vunpack.c.h.b16 %v3192
    %v3514 = vunpack.c.l.b16 %v3193
    %v3515 = vunpack.c.h.b16 %v3193
    %v3516 = vunpack.c.l.b16 %v3194
    %v3517 = vunpack.c.h.b16 %v3194
    %v3518 = vunpack.c.l.b16 %v3195
    %v3519 = vunpack.c.h.b16 %v3195
    %v3520 = vunpack.c.l.b16 %v3196
    %v3521 = vunpack.c.h.b16 %v3196
    %v3522 = vunpack.c.l.b16 %v3197
    %v3523 = vunpack.c.h.b16 %v3197
    %v3524 = vunpack.c.l.b16 %v3198
    %v3525 = vunpack.c.h.b16 %v3198
    %v3526 = vunpack.c.l.b16 %v3199
    %v3527 = vunpack.c.h.b16 %v3199
    %v3528 = vunpack.c.l.b16 %v3200
    %v3529 = vunpack.c.h.b16 %v3200
    %v3530 = vunpack.c.l.b16 %v3201
    %v3531 = vunpack.c.h.b16 %v3201
    %v3532 = vunpack.c.l.b16 %v3202
    %v3533 = vunpack.c.h.b16 %v3202
    %v3534 = vunpack.c.l.b16 %v3203
    %v3535 = vunpack.c.h.b16 %v3203
    %v3536 = vunpack.c.l.b16 %v3204
    %v3537 = vunpack.c.h.b16 %v3204
    %v3538 = vunpack.c.l.b16 %v3205
    %v3539 = vunpack.c.h.b16 %v3205
    %v3540 = vunpack.c.l.b16 %v3206
    %v3541 = vunpack.c.h.b16 %v3206
    %v3542 = vunpack.c.l.b16 %v3207
    %v3543 = vunpack.c.h.b16 %v3207
    %v3544 = vunpack.c.l.b16 %v3208
    %v3545 = vunpack.c.h.b16 %v3208
    %v3546 = vunpack.c.l.b16 %v3209
    %v3547 = vunpack.c.h.b16 %v3209
    %v3548 = vunpack.c.l.b16 %v3210
    %v3549 = vunpack.c.h.b16 %v3210
    %v3550 = vunpack.c.l.b16 %v3211
    %v3551 = vunpack.c.h.b16 %v3211
    %v3552 = vunpack.c.l.b16 %v3212
    %v3553 = vunpack.c.h.b16 %v3212
    %v3554 = vunpack.c.l.b16 %v3213
    %v3555 = vunpack.c.h.b16 %v3213
    %v3556 = vunpack.c.l.b16 %v3214
    %v3557 = vunpack.c.h.b16 %v3214
    %v3558 = vunpack.c.l.b16 %v3215
    %v3559 = vunpack.c.h.b16 %v3215
    %v3560 = vunpack.c.l.b16 %v3216
    %v3561 = vunpack.c.h.b16 %v3216
    %v3562 = vunpack.c.l.b16 %v3217
    %v3563 = vunpack.c.h.b16 %v3217
    %v3564 = vunpack.c.l.b16 %v3218
    %v3565 = vunpack.c.h.b16 %v3218
    %v3566 = vunpack.c.l.b16 %v3219
    %v3567 = vunpack.c.h.b16 %v3219
    %v3568 = vunpack.c.l.b16 %v3220
    %v3569 = vunpack.c.h.b16 %v3220
    %v3570 = vunpack.c.l.b16 %v3221
    %v3571 = vunpack.c.h.b16 %v3221
    %v3572 = vunpack.c.l.b16 %v3222
    %v3573 = vunpack.c.h.b16 %v3222
    %v3574 = vunpack.c.l.b16 %v3223
    %v3575 = vunpack.c.h.b16 %v3223
    %v3576 = vunpack.c.l.b16 %v3224
    %v3577 = vunpack.c.h.b16 %v3224
    %v3578 = vunpack.c.l.b16 %v3225
    %v3579 = vunpack.c.h.b16 %v3225
    %v3580 = vunpack.c.l.b16 %v3226
    %v3581 = vunpack.c.h.b16 %v3226
    %v3582 = vunpack.c.l.b16 %v3227
    %v3583 = vunpack.c.h.b16 %v3227
    %v3584 = vunpack.c.l.b16 %v3228
    %v3585 = vunpack.c.h.b16 %v3228
    %v3586 = vunpack.c.l.b16 %v3229
    %v3587 = vunpack.c.h.b16 %v3229
    %v3588 = vunpack.c.l.b16 %v3230
    %v3589 = vunpack.c.h.b16 %v3230
    %v3590 = vunpack.c.l.b16 %v3231
    %v3591 = vunpack.c.h.b16 %v3231
    %v3592 = vunpack.c.l.b16 %v3232
    %v3593 = vunpack.c.h.b16 %v3232
    %v3594 = vunpack.c.l.b16 %v3233
    %v3595 = vunpack.c.h.b16 %v3233
    %v3596 = vunpack.c.l.b16 %v3234
    %v3597 = vunpack.c.h.b16 %v3234
    %v3598 = vunpack.c.l.b16 %v3235
    %v3599 = vunpack.c.h.b16 %v3235
    %v3600 = vunpack.c.l.b16 %v3236
    %v3601 = vunpack.c.h.b16 %v3236
    %v3602 = vunpack.c.l.b16 %v3237
    %v3603 = vunpack.c.h.b16 %v3237
    %v3604 = vunpack.c.l.b16 %v3238
    %v3605 = vunpack.c.h.b16 %v3238
    %v3606 = vunpack.c.l.b16 %v3239
    %v3607 = vunpack.c.h.b16 %v3239
    %v3608 = vunpack.c.l.b16 %v3240
    %v3609 = vunpack.c.h.b16 %v3240
    %v3610 = vunpack.c.l.b16 %v3241
    %v3611 = vunpack.c.h.b16 %v3241
    %v3612 = vunpack.c.l.b16 %v3242
    %v3613 = vunpack.c.h.b16 %v3242
    %v3614 = vunpack.c.l.b16 %v3243
    %v3615 = vunpack.c.h.b16 %v3243
    %v3616 = vunpack.c.l.b16 %v3244
    %v3617 = vunpack.c.h.b16 %v3244
    %v3618 = vunpack.c.l.b16 %v3245
    %v3619 = vunpack.c.h.b16 %v3245
    %v3620 = vunpack.c.l.b16 %v3246
    %v3621 = vunpack.c.h.b16 %v3246
    %v3622 = vunpack.c.l.b16 %v3247
    %v3623 = vunpack.c.h.b16 %v3247
    %v3624 = vunpack.c.l.b16 %v3248
    %v3625 = vunpack.c.h.b16 %v3248
    %v3626 = vunpack.c.l.b16 %v3249
    %v3627 = vunpack.c.h.b16 %v3249
    %v3628 = vunpack.c.l.b16 %v3250
    %v3629 = vunpack.c.h.b16 %v3250
    %v3630 = vunpack.c.l.b16 %v3251
    %v3631 = vunpack.c.h.b16 %v3251
    %v3632 = vunpack.c.l.b16 %v3252
    %v3633 = vunpack.c.h.b16 %v3252
    %v3634 = vunpack.c.l.b16 %v3253
    %v3635 = vunpack.c.h.b16 %v3253
    %v3636 = vunpack.c.l.b16 %v3254
    %v3637 = vunpack.c.h.b16 %v3254
    %v3638 = vunpack.c.l.b16 %v3255
    %v3639 = vunpack.c.h.b16 %v3255
    %v3640 = vunpack.c.l.b16 %v3256
    %v3641 = vunpack.c.h.b16 %v3256
    %v3642 = vunpack.c.l.b16 %v3257
    %v3643 = vunpack.c.h.b16 %v3257
    %v3644 = vunpack.c.l.b16 %v3258
    %v3645 = vunpack.c.h.b16 %v3258
    %v3646 = vunpack.c.l.b16 %v3259
    %v3647 = vunpack.c.h.b16 %v3259
    %v3648 = vunpack.c.l.b16 %v3260
    %v3649 = vunpack.c.h.b16 %v3260
    %v3650 = vunpack.c.l.b16 %v3261
    %v3651 = vunpack.c.h.b16 %v3261
    %v3652 = vunpack.c.l.b16 %v3262
    %v3653 = vunpack.c.h.b16 %v3262
    %v3654 = vunpack.c.l.b16 %v3263
    %v3655 = vunpack.c.h.b16 %v3263
    %v3656 = vunpack.c.l.b16 %v3264
    %v3657 = vunpack.c.h.b16 %v3264
    %v3658 = vunpack.c.l.b16 %v3265
    %v3659 = vunpack.c.h.b16 %v3265
    %v3660 = vpack.c.b16 %v3408, %v3404
    %v3661 = vpack.c.b16 %v3409, %v3405
    %v3662 = vpack.c.b16 %v3410, %v3406
    %v3663 = vpack.c.b16 %v3411, %v3407
    %v3664 = vpack.c.b16 %v3416, %v3412
    %v3665 = vpack.c.b16 %v3417, %v3413
    %v3666 = vpack.c.b16 %v3418, %v3414
    %v3667 = vpack.c.b16 %v3419, %v3415
    %v3668 = vpack.c.b16 %v3424, %v3420
    %v3669 = vpack.c.b16 %v3425, %v3421
    %v3670 = vpack.c.b16 %v3426, %v3422
    %v3671 = vpack.c.b16 %v3427, %v3423
    %v3672 = vpack.c.b16 %v3432, %v3428
    %v3673 = vpack.c.b16 %v3433, %v3429
    %v3674 = vpack.c.b16 %v3434, %v3430
    %v3675 = vpack.c.b16 %v3435, %v3431
    %v3676 = vpack.c.b16 %v3440, %v3436
    %v3677 = vpack.c.b16 %v3441, %v3437
    %v3678 = vpack.c.b16 %v3442, %v3438
    %v3679 = vpack.c.b16 %v3443, %v3439
    %v3680 = vpack.c.b16 %v3448, %v3444
    %v3681 = vpack.c.b16 %v3449, %v3445
    %v3682 = vpack.c.b16 %v3450, %v3446
    %v3683 = vpack.c.b16 %v3451, %v3447
    %v3684 = vpack.c.b16 %v3456, %v3452
    %v3685 = vpack.c.b16 %v3457, %v3453
    %v3686 = vpack.c.b16 %v3458, %v3454
    %v3687 = vpack.c.b16 %v3459, %v3455
    %v3688 = vpack.c.b16 %v3464, %v3460
    %v3689 = vpack.c.b16 %v3465, %v3461
    %v3690 = vpack.c.b16 %v3466, %v3462
    %v3691 = vpack.c.b16 %v3467, %v3463
    %v3692 = vpack.c.b16 %v3472, %v3468
    %v3693 = vpack.c.b16 %v3473, %v3469
    %v3694 = vpack.c.b16 %v3474, %v3470
    %v3695 = vpack.c.b16 %v3475, %v3471
    %v3696 = vpack.c.b16 %v3480, %v3476
    %v3697 = vpack.c.b16 %v3481, %v3477
    %v3698 = vpack.c.b16 %v3482, %v3478
    %v3699 = vpack.c.b16 %v3483, %v3479
    %v3700 = vpack.c.b16 %v3488, %v3484
    %v3701 = vpack.c.b16 %v3489, %v3485
    %v3702 = vpack.c.b16 %v3490, %v3486
    %v3703 = vpack.c.b16 %v3491, %v3487
    %v3704 = vpack.c.b16 %v3496, %v3492
    %v3705 = vpack.c.b16 %v3497, %v3493
    %v3706 = vpack.c.b16 %v3498, %v3494
    %v3707 = vpack.c.b16 %v3499, %v3495
    %v3708 = vpack.c.b16 %v3504, %v3500
    %v3709 = vpack.c.b16 %v3505, %v3501
    %v3710 = vpack.c.b16 %v3506, %v3502
    %v3711 = vpack.c.b16 %v3507, %v3503
    %v3712 = vpack.c.b16 %v3512, %v3508
    %v3713 = vpack.c.b16 %v3513, %v3509
    %v3714 = vpack.c.b16 %v3514, %v3510
    %v3715 = vpack.c.b16 %v3515, %v3511
    %v3716 = vpack.c.b16 %v3520, %v3516
    %v3717 = vpack.c.b16 %v3521, %v3517
    %v3718 = vpack.c.b16 %v3522, %v3518
    %v3719 = vpack.c.b16 %v3523, %v3519
    %v3720 = vpack.c.b16 %v3528, %v3524
    %v3721 = vpack.c.b16 %v3529, %v3525
    %v3722 = vpack.c.b16 %v3530, %v3526
    %v3723 = vpack.c.b16 %v3531, %v3527
    %v3724 = vpack.c.b16 %v3536, %v3532
    %v3725 = vpack.c.b16 %v3537, %v3533
    %v3726 = vpack.c.b16 %v3538, %v3534
    %v3727 = vpack.c.b16 %v3539, %v3535
    %v3728 = vpack.c.b16 %v3544, %v3540
    %v3729 = vpack.c.b16 %v3545, %v3541
    %v3730 = vpack.c.b16 %v3546, %v3542
    %v3731 = vpack.c.b16 %v3547, %v3543
    %v3732 = vpack.c.b16 %v3552, %v3548
    %v3733 = vpack.c.b16 %v3553, %v3549
    %v3734 = vpack.c.b16 %v3554, %v3550
    %v3735 = vpack.c.b16 %v3555, %v3551
    %v3736 = vpack.c.b16 %v3560, %v3556
    %v3737 = vpack.c.b16 %v3561, %v3557
    %v3738 = vpack.c.b16 %v3562, %v3558
    %v3739 = vpack.c.b16 %v3563, %v3559
    %v3740 = vpack.c.b16 %v3568, %v3564
    %v3741 = vpack.c.b16 %v3569, %v3565
    %v3742 = vpack.c.b16 %v3570, %v3566
    %v3743 = vpack.c.b16 %v3571, %v3567
    %v3744 = vpack.c.b16 %v3576, %v3572
    %v3745 = vpack.c.b16 %v3577, %v3573
    %v3746 = vpack.c.b16 %v3578, %v3574
    %v3747 = vpack.c.b16 %v3579, %v3575
    %v3748 = vpack.c.b16 %v3584, %v3580
    %v3749 = vpack.c.b16 %v3585, %v3581
    %v3750 = vpack.c.b16 %v3586, %v3582
    %v3751 = vpack.c.b16 %v3587, %v3583
    %v3752 = vpack.c.b16 %v3592, %v3588
    %v3753 = vpack.c.b16 %v3593, %v3589
    %v3754 = vpack.c.b16 %v3594, %v3590
    %v3755 = vpack.c.b16 %v3595, %v3591
    %v3756 = vpack.c.b16 %v3600, %v3596
    %v3757 = vpack.c.b16 %v3601, %v3597
    %v3758 = vpack.c.b16 %v3602, %v3598
    %v3759 = vpack.c.b16 %v3603, %v3599
    %v3760 = vpack.c.b16 %v3608, %v3604
    %v3761 = vpack.c.b16 %v3609, %v3605
    %v3762 = vpack.c.b16 %v3610, %v3606
    %v3763 = vpack.c.b16 %v3611, %v3607
    %v3764 = vpack.c.b16 %v3616, %v3612
    %v3765 = vpack.c.b16 %v3617, %v3613
    %v3766 = vpack.c.b16 %v3618, %v3614
    %v3767 = vpack.c.b16 %v3619, %v3615
    %v3768 = vpack.c.b16 %v3624, %v3620
    %v3769 = vpack.c.b16 %v3625, %v3621
    %v3770 = vpack.c.b16 %v3626, %v3622
    %v3771 = vpack.c.b16 %v3627, %v3623
    %v3772 = vpack.c.b16 %v3632, %v3628
    %v3773 = vpack.c.b16 %v3633, %v3629
    %v3774 = vpack.c.b16 %v3634, %v3630
    %v3775 = vpack.c.b16 %v3635, %v3631
    %v3776 = vpack.c.b16 %v3640, %v3636
    %v3777 = vpack.c.b16 %v3641, %v3637
    %v3778 = vpack.c.b16 %v3642, %v3638
    %v3779 = vpack.c.b16 %v3643, %v3639
    %v3780 = vpack.c.b16 %v3648, %v3644
    %v3781 = vpack.c.b16 %v3649, %v3645
    %v3782 = vpack.c.b16 %v3650, %v3646
    %v3783 = vpack.c.b16 %v3651, %v3647
    %v3784 = vpack.c.b16 %v3656, %v3652
    %v3785 = vpack.c.b16 %v3657, %v3653
    %v3786 = vpack.c.b16 %v3658, %v3654
    %v3787 = vpack.c.b16 %v3659, %v3655
    %3916 = vmatpush.bf16.msra.mxu0 %v3688
    %3917 = vmatpush.bf16.msra.mxu0 %v3684
    %3918 = vmatpush.bf16.msra.mxu0 %v3680
    %3919 = vmatpush.bf16.msra.mxu0 %v3676
    %3920 = vmatpush.bf16.msra.mxu0 %v3672
    %3921 = vmatpush.bf16.msra.mxu0 %v3668
    %3922 = vmatpush.bf16.msra.mxu0 %v3664
    %3923 = vmatpush.bf16.msra.mxu0 %v3660
    %3924 = vmatmul.bf16.gmra.mxu0 %v3134
    %v3925 = vpop.f32.mrf.mxu0
    %v3926 = vadd.f32 %v3268, %v3925
    %v3927 = vpop.f32.mrf.mxu0
    %3928 = vdwg.mxu0
    %3929 = vmatpush.bf16.msra.mxu0 %v3720
    %3930 = vmatpush.bf16.msra.mxu0 %v3716
    %3931 = vmatpush.bf16.msra.mxu0 %v3712
    %3932 = vmatpush.bf16.msra.mxu0 %v3708
    %3933 = vmatpush.bf16.msra.mxu0 %v3704
    %3934 = vmatpush.bf16.msra.mxu0 %v3700
    %3935 = vmatpush.bf16.msra.mxu0 %v3696
    %3936 = vmatpush.bf16.msra.mxu0 %v3692
    %3937 = vmatmul.bf16.gmra.mxu0 %v3135
    %v3938 = vpop.f32.mrf.mxu0
    %v3939 = vadd.f32 %v3926, %v3938
    %v3940 = vpop.f32.mrf.mxu0
    %3941 = vdwg.mxu0
    %3942 = vmatpush.bf16.msra.mxu0 %v3752
    %3943 = vmatpush.bf16.msra.mxu0 %v3748
    %3944 = vmatpush.bf16.msra.mxu0 %v3744
    %3945 = vmatpush.bf16.msra.mxu0 %v3740
    %3946 = vmatpush.bf16.msra.mxu0 %v3736
    %3947 = vmatpush.bf16.msra.mxu0 %v3732
    %3948 = vmatpush.bf16.msra.mxu0 %v3728
    %3949 = vmatpush.bf16.msra.mxu0 %v3724
    %3950 = vmatmul.bf16.gmra.mxu0 %v3136
    %v3951 = vpop.f32.mrf.mxu0
    %v3952 = vadd.f32 %v3939, %v3951
    %v3953 = vpop.f32.mrf.mxu0
    %3954 = vdwg.mxu0
    %3955 = vmatpush.bf16.msra.mxu0 %v3784
    %3956 = vmatpush.bf16.msra.mxu0 %v3780
    %3957 = vmatpush.bf16.msra.mxu0 %v3776
    %3958 = vmatpush.bf16.msra.mxu0 %v3772
    %3959 = vmatpush.bf16.msra.mxu0 %v3768
    %3960 = vmatpush.bf16.msra.mxu0 %v3764
    %3961 = vmatpush.bf16.msra.mxu0 %v3760
    %3962 = vmatpush.bf16.msra.mxu0 %v3756
    %3963 = vmatmul.bf16.gmra.mxu0 %v3137
    %v3964 = vpop.f32.mrf.mxu0
    %v3965 = vadd.f32 %v3952, %v3964
    %v3966 = vpop.f32.mrf.mxu0
    %3967 = vdwg.mxu0
    %3968 = vmatpush.bf16.msra.mxu0 %v3689
    %3969 = vmatpush.bf16.msra.mxu0 %v3685
    %3970 = vmatpush.bf16.msra.mxu0 %v3681
    %3971 = vmatpush.bf16.msra.mxu0 %v3677
    %3972 = vmatpush.bf16.msra.mxu0 %v3673
    %3973 = vmatpush.bf16.msra.mxu0 %v3669
    %3974 = vmatpush.bf16.msra.mxu0 %v3665
    %3975 = vmatpush.bf16.msra.mxu0 %v3661
    %3976 = vmatmul.bf16.gmra.mxu0 %v3134
    %v3977 = vpop.f32.mrf.mxu0
    %v3978 = vadd.f32 %v3269, %v3977
    %v3979 = vpop.f32.mrf.mxu0
    %3980 = vdwg.mxu0
    %3981 = vmatpush.bf16.msra.mxu0 %v3721
    %3982 = vmatpush.bf16.msra.mxu0 %v3717
    %3983 = vmatpush.bf16.msra.mxu0 %v3713
    %3984 = vmatpush.bf16.msra.mxu0 %v3709
    %3985 = vmatpush.bf16.msra.mxu0 %v3705
    %3986 = vmatpush.bf16.msra.mxu0 %v3701
    %3987 = vmatpush.bf16.msra.mxu0 %v3697
    %3988 = vmatpush.bf16.msra.mxu0 %v3693
    %3989 = vmatmul.bf16.gmra.mxu0 %v3135
    %v3990 = vpop.f32.mrf.mxu0
    %v3991 = vadd.f32 %v3978, %v3990
    %v3992 = vpop.f32.mrf.mxu0
    %3993 = vdwg.mxu0
    %3994 = vmatpush.bf16.msra.mxu0 %v3753
    %3995 = vmatpush.bf16.msra.mxu0 %v3749
    %3996 = vmatpush.bf16.msra.mxu0 %v3745
    %3997 = vmatpush.bf16.msra.mxu0 %v3741
    %3998 = vmatpush.bf16.msra.mxu0 %v3737
    %3999 = vmatpush.bf16.msra.mxu0 %v3733
    %4000 = vmatpush.bf16.msra.mxu0 %v3729
    %4001 = vmatpush.bf16.msra.mxu0 %v3725
    %4002 = vmatmul.bf16.gmra.mxu0 %v3136
    %v4003 = vpop.f32.mrf.mxu0
    %v4004 = vadd.f32 %v3991, %v4003
    %v4005 = vpop.f32.mrf.mxu0
    %4006 = vdwg.mxu0
    %4007 = vmatpush.bf16.msra.mxu0 %v3785
    %4008 = vmatpush.bf16.msra.mxu0 %v3781
    %4009 = vmatpush.bf16.msra.mxu0 %v3777
    %4010 = vmatpush.bf16.msra.mxu0 %v3773
    %4011 = vmatpush.bf16.msra.mxu0 %v3769
    %4012 = vmatpush.bf16.msra.mxu0 %v3765
    %4013 = vmatpush.bf16.msra.mxu0 %v3761
    %4014 = vmatpush.bf16.msra.mxu0 %v3757
    %4015 = vmatmul.bf16.gmra.mxu0 %v3137
    %v4016 = vpop.f32.mrf.mxu0
    %v4017 = vadd.f32 %v4004, %v4016
    %v4018 = vpop.f32.mrf.mxu0
    %4019 = vdwg.mxu0
    %4020 = vmatpush.bf16.msra.mxu0 %v3690
    %4021 = vmatpush.bf16.msra.mxu0 %v3686
    %4022 = vmatpush.bf16.msra.mxu0 %v3682
    %4023 = vmatpush.bf16.msra.mxu0 %v3678
    %4024 = vmatpush.bf16.msra.mxu0 %v3674
    %4025 = vmatpush.bf16.msra.mxu0 %v3670
    %4026 = vmatpush.bf16.msra.mxu0 %v3666
    %4027 = vmatpush.bf16.msra.mxu0 %v3662
    %4028 = vmatmul.bf16.gmra.mxu0 %v3134
    %v4029 = vpop.f32.mrf.mxu0
    %v4030 = vadd.f32 %v3270, %v4029
    %v4031 = vpop.f32.mrf.mxu0
    %4032 = vdwg.mxu0
    %4033 = vmatpush.bf16.msra.mxu0 %v3722
    %4034 = vmatpush.bf16.msra.mxu0 %v3718
    %4035 = vmatpush.bf16.msra.mxu0 %v3714
    %4036 = vmatpush.bf16.msra.mxu0 %v3710
    %4037 = vmatpush.bf16.msra.mxu0 %v3706
    %4038 = vmatpush.bf16.msra.mxu0 %v3702
    %4039 = vmatpush.bf16.msra.mxu0 %v3698
    %4040 = vmatpush.bf16.msra.mxu0 %v3694
    %4041 = vmatmul.bf16.gmra.mxu0 %v3135
    %v4042 = vpop.f32.mrf.mxu0
    %v4043 = vadd.f32 %v4030, %v4042
    %v4044 = vpop.f32.mrf.mxu0
    %4045 = vdwg.mxu0
    %4046 = vmatpush.bf16.msra.mxu0 %v3754
    %4047 = vmatpush.bf16.msra.mxu0 %v3750
    %4048 = vmatpush.bf16.msra.mxu0 %v3746
    %4049 = vmatpush.bf16.msra.mxu0 %v3742
    %4050 = vmatpush.bf16.msra.mxu0 %v3738
    %4051 = vmatpush.bf16.msra.mxu0 %v3734
    %4052 = vmatpush.bf16.msra.mxu0 %v3730
    %4053 = vmatpush.bf16.msra.mxu0 %v3726
    %4054 = vmatmul.bf16.gmra.mxu0 %v3136
    %v4055 = vpop.f32.mrf.mxu0
    %v4056 = vadd.f32 %v4043, %v4055
    %v4057 = vpop.f32.mrf.mxu0
    %4058 = vdwg.mxu0
    %4059 = vmatpush.bf16.msra.mxu0 %v3786
    %4060 = vmatpush.bf16.msra.mxu0 %v3782
    %4061 = vmatpush.bf16.msra.mxu0 %v3778
    %4062 = vmatpush.bf16.msra.mxu0 %v3774
    %4063 = vmatpush.bf16.msra.mxu0 %v3770
    %4064 = vmatpush.bf16.msra.mxu0 %v3766
    %4065 = vmatpush.bf16.msra.mxu0 %v3762
    %4066 = vmatpush.bf16.msra.mxu0 %v3758
    %4067 = vmatmul.bf16.gmra.mxu0 %v3137
    %v4068 = vpop.f32.mrf.mxu0
    %v4069 = vadd.f32 %v4056, %v4068
    %v4070 = vpop.f32.mrf.mxu0
    %4071 = vdwg.mxu0
    %4072 = vmatpush.bf16.msra.mxu0 %v3691
    %4073 = vmatpush.bf16.msra.mxu0 %v3687
    %4074 = vmatpush.bf16.msra.mxu0 %v3683
    %4075 = vmatpush.bf16.msra.mxu0 %v3679
    %4076 = vmatpush.bf16.msra.mxu0 %v3675
    %4077 = vmatpush.bf16.msra.mxu0 %v3671
    %4078 = vmatpush.bf16.msra.mxu0 %v3667
    %4079 = vmatpush.bf16.msra.mxu0 %v3663
    %4080 = vmatmul.bf16.gmra.mxu0 %v3134
    %v4081 = vpop.f32.mrf.mxu0
    %v4082 = vadd.f32 %v3271, %v4081
    %v4083 = vpop.f32.mrf.mxu0
    %4084 = vdwg.mxu0
    %4085 = vmatpush.bf16.msra.mxu0 %v3723
    %4086 = vmatpush.bf16.msra.mxu0 %v3719
    %4087 = vmatpush.bf16.msra.mxu0 %v3715
    %4088 = vmatpush.bf16.msra.mxu0 %v3711
    %4089 = vmatpush.bf16.msra.mxu0 %v3707
    %4090 = vmatpush.bf16.msra.mxu0 %v3703
    %4091 = vmatpush.bf16.msra.mxu0 %v3699
    %4092 = vmatpush.bf16.msra.mxu0 %v3695
    %4093 = vmatmul.bf16.gmra.mxu0 %v3135
    %v4094 = vpop.f32.mrf.mxu0
    %v4095 = vadd.f32 %v4082, %v4094
    %v4096 = vpop.f32.mrf.mxu0
    %4097 = vdwg.mxu0
    %4098 = vmatpush.bf16.msra.mxu0 %v3755
    %4099 = vmatpush.bf16.msra.mxu0 %v3751
    %4100 = vmatpush.bf16.msra.mxu0 %v3747
    %4101 = vmatpush.bf16.msra.mxu0 %v3743
    %4102 = vmatpush.bf16.msra.mxu0 %v3739
    %4103 = vmatpush.bf16.msra.mxu0 %v3735
    %4104 = vmatpush.bf16.msra.mxu0 %v3731
    %4105 = vmatpush.bf16.msra.mxu0 %v3727
    %4106 = vmatmul.bf16.gmra.mxu0 %v3136
    %v4107 = vpop.f32.mrf.mxu0
    %v4108 = vadd.f32 %v4095, %v4107
    %v4109 = vpop.f32.mrf.mxu0
    %4110 = vdwg.mxu0
    %4111 = vmatpush.bf16.msra.mxu0 %v3787
    %4112 = vmatpush.bf16.msra.mxu0 %v3783
    %4113 = vmatpush.bf16.msra.mxu0 %v3779
    %4114 = vmatpush.bf16.msra.mxu0 %v3775
    %4115 = vmatpush.bf16.msra.mxu0 %v3771
    %4116 = vmatpush.bf16.msra.mxu0 %v3767
    %4117 = vmatpush.bf16.msra.mxu0 %v3763
    %4118 = vmatpush.bf16.msra.mxu0 %v3759
    %4119 = vmatmul.bf16.gmra.mxu0 %v3137
    %v4120 = vpop.f32.mrf.mxu0
    %v4121 = vadd.f32 %v4108, %v4120
    %v4122 = vpop.f32.mrf.mxu0
    %4123 = vdwg.mxu0
    %s4124 = scalar_lea.vmem [#allocation15], 1
    %v4125 = vld [vmem:[%s4124] ss:$8 sm:$0xf]
    %v4127 = vperm.slane %v4125, 0
    %v4128 = vperm.slane %v4125, 1
    %v4129 = vperm.slane %v4125, 2
    %v4130 = vperm.slane %v4125, 3
    %v4135 = vmul.f32 %v544, %v4127
    %v4136 = vmul.f32 %v544, %v4128
    %v4137 = vmul.f32 %v544, %v4129
    %v4138 = vmul.f32 %v544, %v4130
    %s4139 = scalar_lea.vmem [#allocation15], 2
    %v4140 = vld [vmem:[%s4139] ss:$8 sm:$0xf]
    %v4142 = vperm.slane %v4140, 0
    %v4143 = vperm.slane %v4140, 1
    %v4144 = vperm.slane %v4140, 2
    %v4145 = vperm.slane %v4140, 3
    %v4150 = vadd.f32 %v4135, %v4142
    %v4151 = vadd.f32 %v4136, %v4143
    %v4152 = vadd.f32 %v4137, %v4144
    %v4153 = vadd.f32 %v4138, %v4145
    %s4154 = scalar_lea.vmem [#allocation15], 3
    %v4155 = vld [vmem:[%s4154] ss:$8 sm:$0xf]
    %v4157 = vperm.slane %v4155, 0
    %v4158 = vperm.slane %v4155, 1
    %v4159 = vperm.slane %v4155, 2
    %v4160 = vperm.slane %v4155, 3
    %v4165 = vmul.f32 %v544, %v4157
    %v4166 = vmul.f32 %v544, %v4158
    %v4167 = vmul.f32 %v544, %v4159
    %v4168 = vmul.f32 %v544, %v4160
    %s4169 = scalar_lea.vmem [#allocation15], 4
    %v4170 = vld [vmem:[%s4169] ss:$8 sm:$0xf]
    %v4172 = vperm.slane %v4170, 0
    %v4173 = vperm.slane %v4170, 1
    %v4174 = vperm.slane %v4170, 2
    %v4175 = vperm.slane %v4170, 3
    %v4180 = vadd.f32 %v4165, %v4172
    %v4181 = vadd.f32 %v4166, %v4173
    %v4182 = vadd.f32 %v4167, %v4174
    %v4183 = vadd.f32 %v4168, %v4175
    %v4184 = vmul.f32 %v4150, %v3965
    %v4185 = vmul.f32 %v4151, %v4017
    %v4186 = vmul.f32 %v4152, %v4069
    %v4187 = vmul.f32 %v4153, %v4121
    %v4188 = vadd.f32 %v4184, %v4180
    %v4189 = vadd.f32 %v4185, %v4181
    %v4190 = vadd.f32 %v4186, %v4182
    %v4191 = vadd.f32 %v4187, %v4183
    %v4192 = vmax.f32 %v4188, 0.0
    %v4193 = vmax.f32 %v4189, 0.0
    %v4194 = vmax.f32 %v4190, 0.0
    %v4195 = vmax.f32 %v4191, 0.0
    %v4196 = vpack.c.bf16 %v4192, %v4192
    %v4197 = vpack.c.bf16 %v4193, %v4193
    %v4198 = vpack.c.bf16 %v4194, %v4194
    %v4199 = vpack.c.bf16 %v4195, %v4195
    %v4200 = vld [vmem:[#allocation16] sm:$0xff]
    %v4201 = vld [vmem:[#allocation16 + $0x8] sm:$0xff]
    %v4202 = vld [vmem:[#allocation16 + $0x10] sm:$0xff]
    %v4203 = vld [vmem:[#allocation16 + $0x18] sm:$0xff]
    %v4204 = vld [vmem:[#allocation16 + $0x20] sm:$0xff]
    %v4205 = vld [vmem:[#allocation16 + $0x28] sm:$0xff]
    %v4206 = vld [vmem:[#allocation16 + $0x30] sm:$0xff]
    %v4207 = vld [vmem:[#allocation16 + $0x38] sm:$0xff]
    %v4208 = vld [vmem:[#allocation16 + $0x40] sm:$0xff]
    %v4209 = vld [vmem:[#allocation16 + $0x48] sm:$0xff]
    %v4210 = vld [vmem:[#allocation16 + $0x50] sm:$0xff]
    %v4211 = vld [vmem:[#allocation16 + $0x58] sm:$0xff]
    %v4212 = vld [vmem:[#allocation16 + $0x60] sm:$0xff]
    %v4213 = vld [vmem:[#allocation16 + $0x68] sm:$0xff]
    %v4214 = vld [vmem:[#allocation16 + $0x70] sm:$0xff]
    %v4215 = vld [vmem:[#allocation16 + $0x78] sm:$0xff]
    %v4216 = vld [vmem:[#allocation16 + $0x80] sm:$0xff]
    %v4217 = vld [vmem:[#allocation16 + $0x88] sm:$0xff]
    %v4218 = vld [vmem:[#allocation16 + $0x90] sm:$0xff]
    %v4219 = vld [vmem:[#allocation16 + $0x98] sm:$0xff]
    %v4220 = vld [vmem:[#allocation16 + $0xa0] sm:$0xff]
    %v4221 = vld [vmem:[#allocation16 + $0xa8] sm:$0xff]
    %v4222 = vld [vmem:[#allocation16 + $0xb0] sm:$0xff]
    %v4223 = vld [vmem:[#allocation16 + $0xb8] sm:$0xff]
    %v4224 = vld [vmem:[#allocation16 + $0xc0] sm:$0xff]
    %v4225 = vld [vmem:[#allocation16 + $0xc8] sm:$0xff]
    %v4226 = vld [vmem:[#allocation16 + $0xd0] sm:$0xff]
    %v4227 = vld [vmem:[#allocation16 + $0xd8] sm:$0xff]
    %v4228 = vld [vmem:[#allocation16 + $0xe0] sm:$0xff]
    %v4229 = vld [vmem:[#allocation16 + $0xe8] sm:$0xff]
    %v4230 = vld [vmem:[#allocation16 + $0xf0] sm:$0xff]
    %v4231 = vld [vmem:[#allocation16 + $0xf8] sm:$0xff]
    %v4232 = vld [vmem:[#allocation16 + $0x100] sm:$0xff]
    %v4233 = vld [vmem:[#allocation16 + $0x108] sm:$0xff]
    %v4234 = vld [vmem:[#allocation16 + $0x110] sm:$0xff]
    %v4235 = vld [vmem:[#allocation16 + $0x118] sm:$0xff]
    %v4236 = vld [vmem:[#allocation16 + $0x120] sm:$0xff]
    %v4237 = vld [vmem:[#allocation16 + $0x128] sm:$0xff]
    %v4238 = vld [vmem:[#allocation16 + $0x130] sm:$0xff]
    %v4239 = vld [vmem:[#allocation16 + $0x138] sm:$0xff]
    %v4240 = vld [vmem:[#allocation16 + $0x140] sm:$0xff]
    %v4241 = vld [vmem:[#allocation16 + $0x148] sm:$0xff]
    %v4242 = vld [vmem:[#allocation16 + $0x150] sm:$0xff]
    %v4243 = vld [vmem:[#allocation16 + $0x158] sm:$0xff]
    %v4244 = vld [vmem:[#allocation16 + $0x160] sm:$0xff]
    %v4245 = vld [vmem:[#allocation16 + $0x168] sm:$0xff]
    %v4246 = vld [vmem:[#allocation16 + $0x170] sm:$0xff]
    %v4247 = vld [vmem:[#allocation16 + $0x178] sm:$0xff]
    %v4248 = vld [vmem:[#allocation16 + $0x180] sm:$0xff]
    %v4249 = vld [vmem:[#allocation16 + $0x188] sm:$0xff]
    %v4250 = vld [vmem:[#allocation16 + $0x190] sm:$0xff]
    %v4251 = vld [vmem:[#allocation16 + $0x198] sm:$0xff]
    %v4252 = vld [vmem:[#allocation16 + $0x1a0] sm:$0xff]
    %v4253 = vld [vmem:[#allocation16 + $0x1a8] sm:$0xff]
    %v4254 = vld [vmem:[#allocation16 + $0x1b0] sm:$0xff]
    %v4255 = vld [vmem:[#allocation16 + $0x1b8] sm:$0xff]
    %v4256 = vld [vmem:[#allocation16 + $0x1c0] sm:$0xff]
    %v4257 = vld [vmem:[#allocation16 + $0x1c8] sm:$0xff]
    %v4258 = vld [vmem:[#allocation16 + $0x1d0] sm:$0xff]
    %v4259 = vld [vmem:[#allocation16 + $0x1d8] sm:$0xff]
    %v4260 = vld [vmem:[#allocation16 + $0x1e0] sm:$0xff]
    %v4261 = vld [vmem:[#allocation16 + $0x1e8] sm:$0xff]
    %v4262 = vld [vmem:[#allocation16 + $0x1f0] sm:$0xff]
    %v4263 = vld [vmem:[#allocation16 + $0x1f8] sm:$0xff]
    %v4264 = vld [vmem:[#allocation16 + $0x200] sm:$0xff]
    %v4265 = vld [vmem:[#allocation16 + $0x208] sm:$0xff]
    %v4266 = vld [vmem:[#allocation16 + $0x210] sm:$0xff]
    %v4267 = vld [vmem:[#allocation16 + $0x218] sm:$0xff]
    %v4268 = vld [vmem:[#allocation16 + $0x220] sm:$0xff]
    %v4269 = vld [vmem:[#allocation16 + $0x228] sm:$0xff]
    %v4270 = vld [vmem:[#allocation16 + $0x230] sm:$0xff]
    %v4271 = vld [vmem:[#allocation16 + $0x238] sm:$0xff]
    %v4272 = vld [vmem:[#allocation16 + $0x240] sm:$0xff]
    %v4273 = vld [vmem:[#allocation16 + $0x248] sm:$0xff]
    %v4274 = vld [vmem:[#allocation16 + $0x250] sm:$0xff]
    %v4275 = vld [vmem:[#allocation16 + $0x258] sm:$0xff]
    %v4276 = vld [vmem:[#allocation16 + $0x260] sm:$0xff]
    %v4277 = vld [vmem:[#allocation16 + $0x268] sm:$0xff]
    %v4278 = vld [vmem:[#allocation16 + $0x270] sm:$0xff]
    %v4279 = vld [vmem:[#allocation16 + $0x278] sm:$0xff]
    %v4280 = vld [vmem:[#allocation16 + $0x280] sm:$0xff]
    %v4281 = vld [vmem:[#allocation16 + $0x288] sm:$0xff]
    %v4282 = vld [vmem:[#allocation16 + $0x290] sm:$0xff]
    %v4283 = vld [vmem:[#allocation16 + $0x298] sm:$0xff]
    %v4284 = vld [vmem:[#allocation16 + $0x2a0] sm:$0xff]
    %v4285 = vld [vmem:[#allocation16 + $0x2a8] sm:$0xff]
    %v4286 = vld [vmem:[#allocation16 + $0x2b0] sm:$0xff]
    %v4287 = vld [vmem:[#allocation16 + $0x2b8] sm:$0xff]
    %v4288 = vld [vmem:[#allocation16 + $0x2c0] sm:$0xff]
    %v4289 = vld [vmem:[#allocation16 + $0x2c8] sm:$0xff]
    %v4290 = vld [vmem:[#allocation16 + $0x2d0] sm:$0xff]
    %v4291 = vld [vmem:[#allocation16 + $0x2d8] sm:$0xff]
    %v4292 = vld [vmem:[#allocation16 + $0x2e0] sm:$0xff]
    %v4293 = vld [vmem:[#allocation16 + $0x2e8] sm:$0xff]
    %v4294 = vld [vmem:[#allocation16 + $0x2f0] sm:$0xff]
    %v4295 = vld [vmem:[#allocation16 + $0x2f8] sm:$0xff]
    %v4296 = vld [vmem:[#allocation16 + $0x300] sm:$0xff]
    %v4297 = vld [vmem:[#allocation16 + $0x308] sm:$0xff]
    %v4298 = vld [vmem:[#allocation16 + $0x310] sm:$0xff]
    %v4299 = vld [vmem:[#allocation16 + $0x318] sm:$0xff]
    %v4300 = vld [vmem:[#allocation16 + $0x320] sm:$0xff]
    %v4301 = vld [vmem:[#allocation16 + $0x328] sm:$0xff]
    %v4302 = vld [vmem:[#allocation16 + $0x330] sm:$0xff]
    %v4303 = vld [vmem:[#allocation16 + $0x338] sm:$0xff]
    %v4304 = vld [vmem:[#allocation16 + $0x340] sm:$0xff]
    %v4305 = vld [vmem:[#allocation16 + $0x348] sm:$0xff]
    %v4306 = vld [vmem:[#allocation16 + $0x350] sm:$0xff]
    %v4307 = vld [vmem:[#allocation16 + $0x358] sm:$0xff]
    %v4308 = vld [vmem:[#allocation16 + $0x360] sm:$0xff]
    %v4309 = vld [vmem:[#allocation16 + $0x368] sm:$0xff]
    %v4310 = vld [vmem:[#allocation16 + $0x370] sm:$0xff]
    %v4311 = vld [vmem:[#allocation16 + $0x378] sm:$0xff]
    %v4312 = vld [vmem:[#allocation16 + $0x380] sm:$0xff]
    %v4313 = vld [vmem:[#allocation16 + $0x388] sm:$0xff]
    %v4314 = vld [vmem:[#allocation16 + $0x390] sm:$0xff]
    %v4315 = vld [vmem:[#allocation16 + $0x398] sm:$0xff]
    %v4316 = vld [vmem:[#allocation16 + $0x3a0] sm:$0xff]
    %v4317 = vld [vmem:[#allocation16 + $0x3a8] sm:$0xff]
    %v4318 = vld [vmem:[#allocation16 + $0x3b0] sm:$0xff]
    %v4319 = vld [vmem:[#allocation16 + $0x3b8] sm:$0xff]
    %v4320 = vld [vmem:[#allocation16 + $0x3c0] sm:$0xff]
    %v4321 = vld [vmem:[#allocation16 + $0x3c8] sm:$0xff]
    %v4322 = vld [vmem:[#allocation16 + $0x3d0] sm:$0xff]
    %v4323 = vld [vmem:[#allocation16 + $0x3d8] sm:$0xff]
    %v4324 = vld [vmem:[#allocation16 + $0x3e0] sm:$0xff]
    %v4325 = vld [vmem:[#allocation16 + $0x3e8] sm:$0xff]
    %v4326 = vld [vmem:[#allocation16 + $0x3f0] sm:$0xff]
    %v4327 = vld [vmem:[#allocation16 + $0x3f8] sm:$0xff]
    %v4328 = vld [vmem:[#allocation18] ss:$8 sm:$0xf]
    %v4330 = vperm.slane %v4328, 0
    %v4331 = vperm.slane %v4328, 1
    %v4332 = vperm.slane %v4328, 2
    %v4333 = vperm.slane %v4328, 3
    %v4466 = vunpack.c.l.b16 %v4200
    %v4467 = vunpack.c.h.b16 %v4200
    %v4468 = vunpack.c.l.b16 %v4201
    %v4469 = vunpack.c.h.b16 %v4201
    %v4470 = vunpack.c.l.b16 %v4202
    %v4471 = vunpack.c.h.b16 %v4202
    %v4472 = vunpack.c.l.b16 %v4203
    %v4473 = vunpack.c.h.b16 %v4203
    %v4474 = vunpack.c.l.b16 %v4204
    %v4475 = vunpack.c.h.b16 %v4204
    %v4476 = vunpack.c.l.b16 %v4205
    %v4477 = vunpack.c.h.b16 %v4205
    %v4478 = vunpack.c.l.b16 %v4206
    %v4479 = vunpack.c.h.b16 %v4206
    %v4480 = vunpack.c.l.b16 %v4207
    %v4481 = vunpack.c.h.b16 %v4207
    %v4482 = vunpack.c.l.b16 %v4208
    %v4483 = vunpack.c.h.b16 %v4208
    %v4484 = vunpack.c.l.b16 %v4209
    %v4485 = vunpack.c.h.b16 %v4209
    %v4486 = vunpack.c.l.b16 %v4210
    %v4487 = vunpack.c.h.b16 %v4210
    %v4488 = vunpack.c.l.b16 %v4211
    %v4489 = vunpack.c.h.b16 %v4211
    %v4490 = vunpack.c.l.b16 %v4212
    %v4491 = vunpack.c.h.b16 %v4212
    %v4492 = vunpack.c.l.b16 %v4213
    %v4493 = vunpack.c.h.b16 %v4213
    %v4494 = vunpack.c.l.b16 %v4214
    %v4495 = vunpack.c.h.b16 %v4214
    %v4496 = vunpack.c.l.b16 %v4215
    %v4497 = vunpack.c.h.b16 %v4215
    %v4498 = vunpack.c.l.b16 %v4216
    %v4499 = vunpack.c.h.b16 %v4216
    %v4500 = vunpack.c.l.b16 %v4217
    %v4501 = vunpack.c.h.b16 %v4217
    %v4502 = vunpack.c.l.b16 %v4218
    %v4503 = vunpack.c.h.b16 %v4218
    %v4504 = vunpack.c.l.b16 %v4219
    %v4505 = vunpack.c.h.b16 %v4219
    %v4506 = vunpack.c.l.b16 %v4220
    %v4507 = vunpack.c.h.b16 %v4220
    %v4508 = vunpack.c.l.b16 %v4221
    %v4509 = vunpack.c.h.b16 %v4221
    %v4510 = vunpack.c.l.b16 %v4222
    %v4511 = vunpack.c.h.b16 %v4222
    %v4512 = vunpack.c.l.b16 %v4223
    %v4513 = vunpack.c.h.b16 %v4223
    %v4514 = vunpack.c.l.b16 %v4224
    %v4515 = vunpack.c.h.b16 %v4224
    %v4516 = vunpack.c.l.b16 %v4225
    %v4517 = vunpack.c.h.b16 %v4225
    %v4518 = vunpack.c.l.b16 %v4226
    %v4519 = vunpack.c.h.b16 %v4226
    %v4520 = vunpack.c.l.b16 %v4227
    %v4521 = vunpack.c.h.b16 %v4227
    %v4522 = vunpack.c.l.b16 %v4228
    %v4523 = vunpack.c.h.b16 %v4228
    %v4524 = vunpack.c.l.b16 %v4229
    %v4525 = vunpack.c.h.b16 %v4229
    %v4526 = vunpack.c.l.b16 %v4230
    %v4527 = vunpack.c.h.b16 %v4230
    %v4528 = vunpack.c.l.b16 %v4231
    %v4529 = vunpack.c.h.b16 %v4231
    %v4530 = vunpack.c.l.b16 %v4232
    %v4531 = vunpack.c.h.b16 %v4232
    %v4532 = vunpack.c.l.b16 %v4233
    %v4533 = vunpack.c.h.b16 %v4233
    %v4534 = vunpack.c.l.b16 %v4234
    %v4535 = vunpack.c.h.b16 %v4234
    %v4536 = vunpack.c.l.b16 %v4235
    %v4537 = vunpack.c.h.b16 %v4235
    %v4538 = vunpack.c.l.b16 %v4236
    %v4539 = vunpack.c.h.b16 %v4236
    %v4540 = vunpack.c.l.b16 %v4237
    %v4541 = vunpack.c.h.b16 %v4237
    %v4542 = vunpack.c.l.b16 %v4238
    %v4543 = vunpack.c.h.b16 %v4238
    %v4544 = vunpack.c.l.b16 %v4239
    %v4545 = vunpack.c.h.b16 %v4239
    %v4546 = vunpack.c.l.b16 %v4240
    %v4547 = vunpack.c.h.b16 %v4240
    %v4548 = vunpack.c.l.b16 %v4241
    %v4549 = vunpack.c.h.b16 %v4241
    %v4550 = vunpack.c.l.b16 %v4242
    %v4551 = vunpack.c.h.b16 %v4242
    %v4552 = vunpack.c.l.b16 %v4243
    %v4553 = vunpack.c.h.b16 %v4243
    %v4554 = vunpack.c.l.b16 %v4244
    %v4555 = vunpack.c.h.b16 %v4244
    %v4556 = vunpack.c.l.b16 %v4245
    %v4557 = vunpack.c.h.b16 %v4245
    %v4558 = vunpack.c.l.b16 %v4246
    %v4559 = vunpack.c.h.b16 %v4246
    %v4560 = vunpack.c.l.b16 %v4247
    %v4561 = vunpack.c.h.b16 %v4247
    %v4562 = vunpack.c.l.b16 %v4248
    %v4563 = vunpack.c.h.b16 %v4248
    %v4564 = vunpack.c.l.b16 %v4249
    %v4565 = vunpack.c.h.b16 %v4249
    %v4566 = vunpack.c.l.b16 %v4250
    %v4567 = vunpack.c.h.b16 %v4250
    %v4568 = vunpack.c.l.b16 %v4251
    %v4569 = vunpack.c.h.b16 %v4251
    %v4570 = vunpack.c.l.b16 %v4252
    %v4571 = vunpack.c.h.b16 %v4252
    %v4572 = vunpack.c.l.b16 %v4253
    %v4573 = vunpack.c.h.b16 %v4253
    %v4574 = vunpack.c.l.b16 %v4254
    %v4575 = vunpack.c.h.b16 %v4254
    %v4576 = vunpack.c.l.b16 %v4255
    %v4577 = vunpack.c.h.b16 %v4255
    %v4578 = vunpack.c.l.b16 %v4256
    %v4579 = vunpack.c.h.b16 %v4256
    %v4580 = vunpack.c.l.b16 %v4257
    %v4581 = vunpack.c.h.b16 %v4257
    %v4582 = vunpack.c.l.b16 %v4258
    %v4583 = vunpack.c.h.b16 %v4258
    %v4584 = vunpack.c.l.b16 %v4259
    %v4585 = vunpack.c.h.b16 %v4259
    %v4586 = vunpack.c.l.b16 %v4260
    %v4587 = vunpack.c.h.b16 %v4260
    %v4588 = vunpack.c.l.b16 %v4261
    %v4589 = vunpack.c.h.b16 %v4261
    %v4590 = vunpack.c.l.b16 %v4262
    %v4591 = vunpack.c.h.b16 %v4262
    %v4592 = vunpack.c.l.b16 %v4263
    %v4593 = vunpack.c.h.b16 %v4263
    %v4594 = vunpack.c.l.b16 %v4264
    %v4595 = vunpack.c.h.b16 %v4264
    %v4596 = vunpack.c.l.b16 %v4265
    %v4597 = vunpack.c.h.b16 %v4265
    %v4598 = vunpack.c.l.b16 %v4266
    %v4599 = vunpack.c.h.b16 %v4266
    %v4600 = vunpack.c.l.b16 %v4267
    %v4601 = vunpack.c.h.b16 %v4267
    %v4602 = vunpack.c.l.b16 %v4268
    %v4603 = vunpack.c.h.b16 %v4268
    %v4604 = vunpack.c.l.b16 %v4269
    %v4605 = vunpack.c.h.b16 %v4269
    %v4606 = vunpack.c.l.b16 %v4270
    %v4607 = vunpack.c.h.b16 %v4270
    %v4608 = vunpack.c.l.b16 %v4271
    %v4609 = vunpack.c.h.b16 %v4271
    %v4610 = vunpack.c.l.b16 %v4272
    %v4611 = vunpack.c.h.b16 %v4272
    %v4612 = vunpack.c.l.b16 %v4273
    %v4613 = vunpack.c.h.b16 %v4273
    %v4614 = vunpack.c.l.b16 %v4274
    %v4615 = vunpack.c.h.b16 %v4274
    %v4616 = vunpack.c.l.b16 %v4275
    %v4617 = vunpack.c.h.b16 %v4275
    %v4618 = vunpack.c.l.b16 %v4276
    %v4619 = vunpack.c.h.b16 %v4276
    %v4620 = vunpack.c.l.b16 %v4277
    %v4621 = vunpack.c.h.b16 %v4277
    %v4622 = vunpack.c.l.b16 %v4278
    %v4623 = vunpack.c.h.b16 %v4278
    %v4624 = vunpack.c.l.b16 %v4279
    %v4625 = vunpack.c.h.b16 %v4279
    %v4626 = vunpack.c.l.b16 %v4280
    %v4627 = vunpack.c.h.b16 %v4280
    %v4628 = vunpack.c.l.b16 %v4281
    %v4629 = vunpack.c.h.b16 %v4281
    %v4630 = vunpack.c.l.b16 %v4282
    %v4631 = vunpack.c.h.b16 %v4282
    %v4632 = vunpack.c.l.b16 %v4283
    %v4633 = vunpack.c.h.b16 %v4283
    %v4634 = vunpack.c.l.b16 %v4284
    %v4635 = vunpack.c.h.b16 %v4284
    %v4636 = vunpack.c.l.b16 %v4285
    %v4637 = vunpack.c.h.b16 %v4285
    %v4638 = vunpack.c.l.b16 %v4286
    %v4639 = vunpack.c.h.b16 %v4286
    %v4640 = vunpack.c.l.b16 %v4287
    %v4641 = vunpack.c.h.b16 %v4287
    %v4642 = vunpack.c.l.b16 %v4288
    %v4643 = vunpack.c.h.b16 %v4288
    %v4644 = vunpack.c.l.b16 %v4289
    %v4645 = vunpack.c.h.b16 %v4289
    %v4646 = vunpack.c.l.b16 %v4290
    %v4647 = vunpack.c.h.b16 %v4290
    %v4648 = vunpack.c.l.b16 %v4291
    %v4649 = vunpack.c.h.b16 %v4291
    %v4650 = vunpack.c.l.b16 %v4292
    %v4651 = vunpack.c.h.b16 %v4292
    %v4652 = vunpack.c.l.b16 %v4293
    %v4653 = vunpack.c.h.b16 %v4293
    %v4654 = vunpack.c.l.b16 %v4294
    %v4655 = vunpack.c.h.b16 %v4294
    %v4656 = vunpack.c.l.b16 %v4295
    %v4657 = vunpack.c.h.b16 %v4295
    %v4658 = vunpack.c.l.b16 %v4296
    %v4659 = vunpack.c.h.b16 %v4296
    %v4660 = vunpack.c.l.b16 %v4297
    %v4661 = vunpack.c.h.b16 %v4297
    %v4662 = vunpack.c.l.b16 %v4298
    %v4663 = vunpack.c.h.b16 %v4298
    %v4664 = vunpack.c.l.b16 %v4299
    %v4665 = vunpack.c.h.b16 %v4299
    %v4666 = vunpack.c.l.b16 %v4300
    %v4667 = vunpack.c.h.b16 %v4300
    %v4668 = vunpack.c.l.b16 %v4301
    %v4669 = vunpack.c.h.b16 %v4301
    %v4670 = vunpack.c.l.b16 %v4302
    %v4671 = vunpack.c.h.b16 %v4302
    %v4672 = vunpack.c.l.b16 %v4303
    %v4673 = vunpack.c.h.b16 %v4303
    %v4674 = vunpack.c.l.b16 %v4304
    %v4675 = vunpack.c.h.b16 %v4304
    %v4676 = vunpack.c.l.b16 %v4305
    %v4677 = vunpack.c.h.b16 %v4305
    %v4678 = vunpack.c.l.b16 %v4306
    %v4679 = vunpack.c.h.b16 %v4306
    %v4680 = vunpack.c.l.b16 %v4307
    %v4681 = vunpack.c.h.b16 %v4307
    %v4682 = vunpack.c.l.b16 %v4308
    %v4683 = vunpack.c.h.b16 %v4308
    %v4684 = vunpack.c.l.b16 %v4309
    %v4685 = vunpack.c.h.b16 %v4309
    %v4686 = vunpack.c.l.b16 %v4310
    %v4687 = vunpack.c.h.b16 %v4310
    %v4688 = vunpack.c.l.b16 %v4311
    %v4689 = vunpack.c.h.b16 %v4311
    %v4690 = vunpack.c.l.b16 %v4312
    %v4691 = vunpack.c.h.b16 %v4312
    %v4692 = vunpack.c.l.b16 %v4313
    %v4693 = vunpack.c.h.b16 %v4313
    %v4694 = vunpack.c.l.b16 %v4314
    %v4695 = vunpack.c.h.b16 %v4314
    %v4696 = vunpack.c.l.b16 %v4315
    %v4697 = vunpack.c.h.b16 %v4315
    %v4698 = vunpack.c.l.b16 %v4316
    %v4699 = vunpack.c.h.b16 %v4316
    %v4700 = vunpack.c.l.b16 %v4317
    %v4701 = vunpack.c.h.b16 %v4317
    %v4702 = vunpack.c.l.b16 %v4318
    %v4703 = vunpack.c.h.b16 %v4318
    %v4704 = vunpack.c.l.b16 %v4319
    %v4705 = vunpack.c.h.b16 %v4319
    %v4706 = vunpack.c.l.b16 %v4320
    %v4707 = vunpack.c.h.b16 %v4320
    %v4708 = vunpack.c.l.b16 %v4321
    %v4709 = vunpack.c.h.b16 %v4321
    %v4710 = vunpack.c.l.b16 %v4322
    %v4711 = vunpack.c.h.b16 %v4322
    %v4712 = vunpack.c.l.b16 %v4323
    %v4713 = vunpack.c.h.b16 %v4323
    %v4714 = vunpack.c.l.b16 %v4324
    %v4715 = vunpack.c.h.b16 %v4324
    %v4716 = vunpack.c.l.b16 %v4325
    %v4717 = vunpack.c.h.b16 %v4325
    %v4718 = vunpack.c.l.b16 %v4326
    %v4719 = vunpack.c.h.b16 %v4326
    %v4720 = vunpack.c.l.b16 %v4327
    %v4721 = vunpack.c.h.b16 %v4327
    %v4722 = vpack.c.b16 %v4470, %v4466
    %v4723 = vpack.c.b16 %v4471, %v4467
    %v4724 = vpack.c.b16 %v4472, %v4468
    %v4725 = vpack.c.b16 %v4473, %v4469
    %v4726 = vpack.c.b16 %v4478, %v4474
    %v4727 = vpack.c.b16 %v4479, %v4475
    %v4728 = vpack.c.b16 %v4480, %v4476
    %v4729 = vpack.c.b16 %v4481, %v4477
    %v4730 = vpack.c.b16 %v4486, %v4482
    %v4731 = vpack.c.b16 %v4487, %v4483
    %v4732 = vpack.c.b16 %v4488, %v4484
    %v4733 = vpack.c.b16 %v4489, %v4485
    %v4734 = vpack.c.b16 %v4494, %v4490
    %v4735 = vpack.c.b16 %v4495, %v4491
    %v4736 = vpack.c.b16 %v4496, %v4492
    %v4737 = vpack.c.b16 %v4497, %v4493
    %v4738 = vpack.c.b16 %v4502, %v4498
    %v4739 = vpack.c.b16 %v4503, %v4499
    %v4740 = vpack.c.b16 %v4504, %v4500
    %v4741 = vpack.c.b16 %v4505, %v4501
    %v4742 = vpack.c.b16 %v4510, %v4506
    %v4743 = vpack.c.b16 %v4511, %v4507
    %v4744 = vpack.c.b16 %v4512, %v4508
    %v4745 = vpack.c.b16 %v4513, %v4509
    %v4746 = vpack.c.b16 %v4518, %v4514
    %v4747 = vpack.c.b16 %v4519, %v4515
    %v4748 = vpack.c.b16 %v4520, %v4516
    %v4749 = vpack.c.b16 %v4521, %v4517
    %v4750 = vpack.c.b16 %v4526, %v4522
    %v4751 = vpack.c.b16 %v4527, %v4523
    %v4752 = vpack.c.b16 %v4528, %v4524
    %v4753 = vpack.c.b16 %v4529, %v4525
    %v4754 = vpack.c.b16 %v4534, %v4530
    %v4755 = vpack.c.b16 %v4535, %v4531
    %v4756 = vpack.c.b16 %v4536, %v4532
    %v4757 = vpack.c.b16 %v4537, %v4533
    %v4758 = vpack.c.b16 %v4542, %v4538
    %v4759 = vpack.c.b16 %v4543, %v4539
    %v4760 = vpack.c.b16 %v4544, %v4540
    %v4761 = vpack.c.b16 %v4545, %v4541
    %v4762 = vpack.c.b16 %v4550, %v4546
    %v4763 = vpack.c.b16 %v4551, %v4547
    %v4764 = vpack.c.b16 %v4552, %v4548
    %v4765 = vpack.c.b16 %v4553, %v4549
    %v4766 = vpack.c.b16 %v4558, %v4554
    %v4767 = vpack.c.b16 %v4559, %v4555
    %v4768 = vpack.c.b16 %v4560, %v4556
    %v4769 = vpack.c.b16 %v4561, %v4557
    %v4770 = vpack.c.b16 %v4566, %v4562
    %v4771 = vpack.c.b16 %v4567, %v4563
    %v4772 = vpack.c.b16 %v4568, %v4564
    %v4773 = vpack.c.b16 %v4569, %v4565
    %v4774 = vpack.c.b16 %v4574, %v4570
    %v4775 = vpack.c.b16 %v4575, %v4571
    %v4776 = vpack.c.b16 %v4576, %v4572
    %v4777 = vpack.c.b16 %v4577, %v4573
    %v4778 = vpack.c.b16 %v4582, %v4578
    %v4779 = vpack.c.b16 %v4583, %v4579
    %v4780 = vpack.c.b16 %v4584, %v4580
    %v4781 = vpack.c.b16 %v4585, %v4581
    %v4782 = vpack.c.b16 %v4590, %v4586
    %v4783 = vpack.c.b16 %v4591, %v4587
    %v4784 = vpack.c.b16 %v4592, %v4588
    %v4785 = vpack.c.b16 %v4593, %v4589
    %v4786 = vpack.c.b16 %v4598, %v4594
    %v4787 = vpack.c.b16 %v4599, %v4595
    %v4788 = vpack.c.b16 %v4600, %v4596
    %v4789 = vpack.c.b16 %v4601, %v4597
    %v4790 = vpack.c.b16 %v4606, %v4602
    %v4791 = vpack.c.b16 %v4607, %v4603
    %v4792 = vpack.c.b16 %v4608, %v4604
    %v4793 = vpack.c.b16 %v4609, %v4605
    %v4794 = vpack.c.b16 %v4614, %v4610
    %v4795 = vpack.c.b16 %v4615, %v4611
    %v4796 = vpack.c.b16 %v4616, %v4612
    %v4797 = vpack.c.b16 %v4617, %v4613
    %v4798 = vpack.c.b16 %v4622, %v4618
    %v4799 = vpack.c.b16 %v4623, %v4619
    %v4800 = vpack.c.b16 %v4624, %v4620
    %v4801 = vpack.c.b16 %v4625, %v4621
    %v4802 = vpack.c.b16 %v4630, %v4626
    %v4803 = vpack.c.b16 %v4631, %v4627
    %v4804 = vpack.c.b16 %v4632, %v4628
    %v4805 = vpack.c.b16 %v4633, %v4629
    %v4806 = vpack.c.b16 %v4638, %v4634
    %v4807 = vpack.c.b16 %v4639, %v4635
    %v4808 = vpack.c.b16 %v4640, %v4636
    %v4809 = vpack.c.b16 %v4641, %v4637
    %v4810 = vpack.c.b16 %v4646, %v4642
    %v4811 = vpack.c.b16 %v4647, %v4643
    %v4812 = vpack.c.b16 %v4648, %v4644
    %v4813 = vpack.c.b16 %v4649, %v4645
    %v4814 = vpack.c.b16 %v4654, %v4650
    %v4815 = vpack.c.b16 %v4655, %v4651
    %v4816 = vpack.c.b16 %v4656, %v4652
    %v4817 = vpack.c.b16 %v4657, %v4653
    %v4818 = vpack.c.b16 %v4662, %v4658
    %v4819 = vpack.c.b16 %v4663, %v4659
    %v4820 = vpack.c.b16 %v4664, %v4660
    %v4821 = vpack.c.b16 %v4665, %v4661
    %v4822 = vpack.c.b16 %v4670, %v4666
    %v4823 = vpack.c.b16 %v4671, %v4667
    %v4824 = vpack.c.b16 %v4672, %v4668
    %v4825 = vpack.c.b16 %v4673, %v4669
    %v4826 = vpack.c.b16 %v4678, %v4674
    %v4827 = vpack.c.b16 %v4679, %v4675
    %v4828 = vpack.c.b16 %v4680, %v4676
    %v4829 = vpack.c.b16 %v4681, %v4677
    %v4830 = vpack.c.b16 %v4686, %v4682
    %v4831 = vpack.c.b16 %v4687, %v4683
    %v4832 = vpack.c.b16 %v4688, %v4684
    %v4833 = vpack.c.b16 %v4689, %v4685
    %v4834 = vpack.c.b16 %v4694, %v4690
    %v4835 = vpack.c.b16 %v4695, %v4691
    %v4836 = vpack.c.b16 %v4696, %v4692
    %v4837 = vpack.c.b16 %v4697, %v4693
    %v4838 = vpack.c.b16 %v4702, %v4698
    %v4839 = vpack.c.b16 %v4703, %v4699
    %v4840 = vpack.c.b16 %v4704, %v4700
    %v4841 = vpack.c.b16 %v4705, %v4701
    %v4842 = vpack.c.b16 %v4710, %v4706
    %v4843 = vpack.c.b16 %v4711, %v4707
    %v4844 = vpack.c.b16 %v4712, %v4708
    %v4845 = vpack.c.b16 %v4713, %v4709
    %v4846 = vpack.c.b16 %v4718, %v4714
    %v4847 = vpack.c.b16 %v4719, %v4715
    %v4848 = vpack.c.b16 %v4720, %v4716
    %v4849 = vpack.c.b16 %v4721, %v4717
    %4978 = vmatpush.bf16.msra.mxu0 %v4750
    %4979 = vmatpush.bf16.msra.mxu0 %v4746
    %4980 = vmatpush.bf16.msra.mxu0 %v4742
    %4981 = vmatpush.bf16.msra.mxu0 %v4738
    %4982 = vmatpush.bf16.msra.mxu0 %v4734
    %4983 = vmatpush.bf16.msra.mxu0 %v4730
    %4984 = vmatpush.bf16.msra.mxu0 %v4726
    %4985 = vmatpush.bf16.msra.mxu0 %v4722
    %4986 = vmatmul.bf16.gmra.mxu0 %v4196
    %v4987 = vpop.f32.mrf.mxu0
    %v4988 = vadd.f32 %v4330, %v4987
    %v4989 = vpop.f32.mrf.mxu0
    %4990 = vdwg.mxu0
    %4991 = vmatpush.bf16.msra.mxu0 %v4782
    %4992 = vmatpush.bf16.msra.mxu0 %v4778
    %4993 = vmatpush.bf16.msra.mxu0 %v4774
    %4994 = vmatpush.bf16.msra.mxu0 %v4770
    %4995 = vmatpush.bf16.msra.mxu0 %v4766
    %4996 = vmatpush.bf16.msra.mxu0 %v4762
    %4997 = vmatpush.bf16.msra.mxu0 %v4758
    %4998 = vmatpush.bf16.msra.mxu0 %v4754
    %4999 = vmatmul.bf16.gmra.mxu0 %v4197
    %v5000 = vpop.f32.mrf.mxu0
    %v5001 = vadd.f32 %v4988, %v5000
    %v5002 = vpop.f32.mrf.mxu0
    %5003 = vdwg.mxu0
    %5004 = vmatpush.bf16.msra.mxu0 %v4814
    %5005 = vmatpush.bf16.msra.mxu0 %v4810
    %5006 = vmatpush.bf16.msra.mxu0 %v4806
    %5007 = vmatpush.bf16.msra.mxu0 %v4802
    %5008 = vmatpush.bf16.msra.mxu0 %v4798
    %5009 = vmatpush.bf16.msra.mxu0 %v4794
    %5010 = vmatpush.bf16.msra.mxu0 %v4790
    %5011 = vmatpush.bf16.msra.mxu0 %v4786
    %5012 = vmatmul.bf16.gmra.mxu0 %v4198
    %v5013 = vpop.f32.mrf.mxu0
    %v5014 = vadd.f32 %v5001, %v5013
    %v5015 = vpop.f32.mrf.mxu0
    %5016 = vdwg.mxu0
    %5017 = vmatpush.bf16.msra.mxu0 %v4846
    %5018 = vmatpush.bf16.msra.mxu0 %v4842
    %5019 = vmatpush.bf16.msra.mxu0 %v4838
    %5020 = vmatpush.bf16.msra.mxu0 %v4834
    %5021 = vmatpush.bf16.msra.mxu0 %v4830
    %5022 = vmatpush.bf16.msra.mxu0 %v4826
    %5023 = vmatpush.bf16.msra.mxu0 %v4822
    %5024 = vmatpush.bf16.msra.mxu0 %v4818
    %5025 = vmatmul.bf16.gmra.mxu0 %v4199
    %v5026 = vpop.f32.mrf.mxu0
    %v5027 = vadd.f32 %v5014, %v5026
    %v5028 = vpop.f32.mrf.mxu0
    %5029 = vdwg.mxu0
    %5030 = vmatpush.bf16.msra.mxu0 %v4751
    %5031 = vmatpush.bf16.msra.mxu0 %v4747
    %5032 = vmatpush.bf16.msra.mxu0 %v4743
    %5033 = vmatpush.bf16.msra.mxu0 %v4739
    %5034 = vmatpush.bf16.msra.mxu0 %v4735
    %5035 = vmatpush.bf16.msra.mxu0 %v4731
    %5036 = vmatpush.bf16.msra.mxu0 %v4727
    %5037 = vmatpush.bf16.msra.mxu0 %v4723
    %5038 = vmatmul.bf16.gmra.mxu0 %v4196
    %v5039 = vpop.f32.mrf.mxu0
    %v5040 = vadd.f32 %v4331, %v5039
    %v5041 = vpop.f32.mrf.mxu0
    %5042 = vdwg.mxu0
    %5043 = vmatpush.bf16.msra.mxu0 %v4783
    %5044 = vmatpush.bf16.msra.mxu0 %v4779
    %5045 = vmatpush.bf16.msra.mxu0 %v4775
    %5046 = vmatpush.bf16.msra.mxu0 %v4771
    %5047 = vmatpush.bf16.msra.mxu0 %v4767
    %5048 = vmatpush.bf16.msra.mxu0 %v4763
    %5049 = vmatpush.bf16.msra.mxu0 %v4759
    %5050 = vmatpush.bf16.msra.mxu0 %v4755
    %5051 = vmatmul.bf16.gmra.mxu0 %v4197
    %v5052 = vpop.f32.mrf.mxu0
    %v5053 = vadd.f32 %v5040, %v5052
    %v5054 = vpop.f32.mrf.mxu0
    %5055 = vdwg.mxu0
    %5056 = vmatpush.bf16.msra.mxu0 %v4815
    %5057 = vmatpush.bf16.msra.mxu0 %v4811
    %5058 = vmatpush.bf16.msra.mxu0 %v4807
    %5059 = vmatpush.bf16.msra.mxu0 %v4803
    %5060 = vmatpush.bf16.msra.mxu0 %v4799
    %5061 = vmatpush.bf16.msra.mxu0 %v4795
    %5062 = vmatpush.bf16.msra.mxu0 %v4791
    %5063 = vmatpush.bf16.msra.mxu0 %v4787
    %5064 = vmatmul.bf16.gmra.mxu0 %v4198
    %v5065 = vpop.f32.mrf.mxu0
    %v5066 = vadd.f32 %v5053, %v5065
    %v5067 = vpop.f32.mrf.mxu0
    %5068 = vdwg.mxu0
    %5069 = vmatpush.bf16.msra.mxu0 %v4847
    %5070 = vmatpush.bf16.msra.mxu0 %v4843
    %5071 = vmatpush.bf16.msra.mxu0 %v4839
    %5072 = vmatpush.bf16.msra.mxu0 %v4835
    %5073 = vmatpush.bf16.msra.mxu0 %v4831
    %5074 = vmatpush.bf16.msra.mxu0 %v4827
    %5075 = vmatpush.bf16.msra.mxu0 %v4823
    %5076 = vmatpush.bf16.msra.mxu0 %v4819
    %5077 = vmatmul.bf16.gmra.mxu0 %v4199
    %v5078 = vpop.f32.mrf.mxu0
    %v5079 = vadd.f32 %v5066, %v5078
    %v5080 = vpop.f32.mrf.mxu0
    %5081 = vdwg.mxu0
    %5082 = vmatpush.bf16.msra.mxu0 %v4752
    %5083 = vmatpush.bf16.msra.mxu0 %v4748
    %5084 = vmatpush.bf16.msra.mxu0 %v4744
    %5085 = vmatpush.bf16.msra.mxu0 %v4740
    %5086 = vmatpush.bf16.msra.mxu0 %v4736
    %5087 = vmatpush.bf16.msra.mxu0 %v4732
    %5088 = vmatpush.bf16.msra.mxu0 %v4728
    %5089 = vmatpush.bf16.msra.mxu0 %v4724
    %5090 = vmatmul.bf16.gmra.mxu0 %v4196
    %v5091 = vpop.f32.mrf.mxu0
    %v5092 = vadd.f32 %v4332, %v5091
    %v5093 = vpop.f32.mrf.mxu0
    %5094 = vdwg.mxu0
    %5095 = vmatpush.bf16.msra.mxu0 %v4784
    %5096 = vmatpush.bf16.msra.mxu0 %v4780
    %5097 = vmatpush.bf16.msra.mxu0 %v4776
    %5098 = vmatpush.bf16.msra.mxu0 %v4772
    %5099 = vmatpush.bf16.msra.mxu0 %v4768
    %5100 = vmatpush.bf16.msra.mxu0 %v4764
    %5101 = vmatpush.bf16.msra.mxu0 %v4760
    %5102 = vmatpush.bf16.msra.mxu0 %v4756
    %5103 = vmatmul.bf16.gmra.mxu0 %v4197
    %v5104 = vpop.f32.mrf.mxu0
    %v5105 = vadd.f32 %v5092, %v5104
    %v5106 = vpop.f32.mrf.mxu0
    %5107 = vdwg.mxu0
    %5108 = vmatpush.bf16.msra.mxu0 %v4816
    %5109 = vmatpush.bf16.msra.mxu0 %v4812
    %5110 = vmatpush.bf16.msra.mxu0 %v4808
    %5111 = vmatpush.bf16.msra.mxu0 %v4804
    %5112 = vmatpush.bf16.msra.mxu0 %v4800
    %5113 = vmatpush.bf16.msra.mxu0 %v4796
    %5114 = vmatpush.bf16.msra.mxu0 %v4792
    %5115 = vmatpush.bf16.msra.mxu0 %v4788
    %5116 = vmatmul.bf16.gmra.mxu0 %v4198
    %v5117 = vpop.f32.mrf.mxu0
    %v5118 = vadd.f32 %v5105, %v5117
    %v5119 = vpop.f32.mrf.mxu0
    %5120 = vdwg.mxu0
    %5121 = vmatpush.bf16.msra.mxu0 %v4848
    %5122 = vmatpush.bf16.msra.mxu0 %v4844
    %5123 = vmatpush.bf16.msra.mxu0 %v4840
    %5124 = vmatpush.bf16.msra.mxu0 %v4836
    %5125 = vmatpush.bf16.msra.mxu0 %v4832
    %5126 = vmatpush.bf16.msra.mxu0 %v4828
    %5127 = vmatpush.bf16.msra.mxu0 %v4824
    %5128 = vmatpush.bf16.msra.mxu0 %v4820
    %5129 = vmatmul.bf16.gmra.mxu0 %v4199
    %v5130 = vpop.f32.mrf.mxu0
    %v5131 = vadd.f32 %v5118, %v5130
    %v5132 = vpop.f32.mrf.mxu0
    %5133 = vdwg.mxu0
    %5134 = vmatpush.bf16.msra.mxu0 %v4753
    %5135 = vmatpush.bf16.msra.mxu0 %v4749
    %5136 = vmatpush.bf16.msra.mxu0 %v4745
    %5137 = vmatpush.bf16.msra.mxu0 %v4741
    %5138 = vmatpush.bf16.msra.mxu0 %v4737
    %5139 = vmatpush.bf16.msra.mxu0 %v4733
    %5140 = vmatpush.bf16.msra.mxu0 %v4729
    %5141 = vmatpush.bf16.msra.mxu0 %v4725
    %5142 = vmatmul.bf16.gmra.mxu0 %v4196
    %v5143 = vpop.f32.mrf.mxu0
    %v5144 = vadd.f32 %v4333, %v5143
    %v5145 = vpop.f32.mrf.mxu0
    %5146 = vdwg.mxu0
    %5147 = vmatpush.bf16.msra.mxu0 %v4785
    %5148 = vmatpush.bf16.msra.mxu0 %v4781
    %5149 = vmatpush.bf16.msra.mxu0 %v4777
    %5150 = vmatpush.bf16.msra.mxu0 %v4773
    %5151 = vmatpush.bf16.msra.mxu0 %v4769
    %5152 = vmatpush.bf16.msra.mxu0 %v4765
    %5153 = vmatpush.bf16.msra.mxu0 %v4761
    %5154 = vmatpush.bf16.msra.mxu0 %v4757
    %5155 = vmatmul.bf16.gmra.mxu0 %v4197
    %v5156 = vpop.f32.mrf.mxu0
    %v5157 = vadd.f32 %v5144, %v5156
    %v5158 = vpop.f32.mrf.mxu0
    %5159 = vdwg.mxu0
    %5160 = vmatpush.bf16.msra.mxu0 %v4817
    %5161 = vmatpush.bf16.msra.mxu0 %v4813
    %5162 = vmatpush.bf16.msra.mxu0 %v4809
    %5163 = vmatpush.bf16.msra.mxu0 %v4805
    %5164 = vmatpush.bf16.msra.mxu0 %v4801
    %5165 = vmatpush.bf16.msra.mxu0 %v4797
    %5166 = vmatpush.bf16.msra.mxu0 %v4793
    %5167 = vmatpush.bf16.msra.mxu0 %v4789
    %5168 = vmatmul.bf16.gmra.mxu0 %v4198
    %v5169 = vpop.f32.mrf.mxu0
    %v5170 = vadd.f32 %v5157, %v5169
    %v5171 = vpop.f32.mrf.mxu0
    %5172 = vdwg.mxu0
    %5173 = vmatpush.bf16.msra.mxu0 %v4849
    %5174 = vmatpush.bf16.msra.mxu0 %v4845
    %5175 = vmatpush.bf16.msra.mxu0 %v4841
    %5176 = vmatpush.bf16.msra.mxu0 %v4837
    %5177 = vmatpush.bf16.msra.mxu0 %v4833
    %5178 = vmatpush.bf16.msra.mxu0 %v4829
    %5179 = vmatpush.bf16.msra.mxu0 %v4825
    %5180 = vmatpush.bf16.msra.mxu0 %v4821
    %5181 = vmatmul.bf16.gmra.mxu0 %v4199
    %v5182 = vpop.f32.mrf.mxu0
    %v5183 = vadd.f32 %v5170, %v5182
    %v5184 = vpop.f32.mrf.mxu0
    %5185 = vdwg.mxu0
    %s5186 = scalar_lea.vmem [#allocation18], 1
    %v5187 = vld [vmem:[%s5186] ss:$8 sm:$0xf]
    %v5189 = vperm.slane %v5187, 0
    %v5190 = vperm.slane %v5187, 1
    %v5191 = vperm.slane %v5187, 2
    %v5192 = vperm.slane %v5187, 3
    %v5197 = vmul.f32 %v544, %v5189
    %v5198 = vmul.f32 %v544, %v5190
    %v5199 = vmul.f32 %v544, %v5191
    %v5200 = vmul.f32 %v544, %v5192
    %s5201 = scalar_lea.vmem [#allocation18], 2
    %v5202 = vld [vmem:[%s5201] ss:$8 sm:$0xf]
    %v5204 = vperm.slane %v5202, 0
    %v5205 = vperm.slane %v5202, 1
    %v5206 = vperm.slane %v5202, 2
    %v5207 = vperm.slane %v5202, 3
    %v5212 = vadd.f32 %v5197, %v5204
    %v5213 = vadd.f32 %v5198, %v5205
    %v5214 = vadd.f32 %v5199, %v5206
    %v5215 = vadd.f32 %v5200, %v5207
    %s5216 = scalar_lea.vmem [#allocation18], 3
    %v5217 = vld [vmem:[%s5216] ss:$8 sm:$0xf]
    %v5219 = vperm.slane %v5217, 0
    %v5220 = vperm.slane %v5217, 1
    %v5221 = vperm.slane %v5217, 2
    %v5222 = vperm.slane %v5217, 3
    %v5227 = vmul.f32 %v544, %v5219
    %v5228 = vmul.f32 %v544, %v5220
    %v5229 = vmul.f32 %v544, %v5221
    %v5230 = vmul.f32 %v544, %v5222
    %s5231 = scalar_lea.vmem [#allocation18], 4
    %v5232 = vld [vmem:[%s5231] ss:$8 sm:$0xf]
    %v5234 = vperm.slane %v5232, 0
    %v5235 = vperm.slane %v5232, 1
    %v5236 = vperm.slane %v5232, 2
    %v5237 = vperm.slane %v5232, 3
    %v5242 = vadd.f32 %v5227, %v5234
    %v5243 = vadd.f32 %v5228, %v5235
    %v5244 = vadd.f32 %v5229, %v5236
    %v5245 = vadd.f32 %v5230, %v5237
    %v5246 = vmul.f32 %v5212, %v5027
    %v5247 = vmul.f32 %v5213, %v5079
    %v5248 = vmul.f32 %v5214, %v5131
    %v5249 = vmul.f32 %v5215, %v5183
    %v5250 = vadd.f32 %v5246, %v5242
    %v5251 = vadd.f32 %v5247, %v5243
    %v5252 = vadd.f32 %v5248, %v5244
    %v5253 = vadd.f32 %v5249, %v5245
    %v5254 = vmax.f32 %v5250, 0.0
    %v5255 = vmax.f32 %v5251, 0.0
    %v5256 = vmax.f32 %v5252, 0.0
    %v5257 = vmax.f32 %v5253, 0.0
    %v5258 = vld [vmem:[%s14] sm:$0xf]
    %v5260 = vperm.slane %v5258, 0
    %v5261 = vperm.slane %v5258, 1
    %v5262 = vperm.slane %v5258, 2
    %v5263 = vperm.slane %v5258, 3
    %v5268 = vmul.f32 %v5254, %v5260
    %v5269 = vmul.f32 %v5255, %v5261
    %v5270 = vmul.f32 %v5256, %v5262
    %v5271 = vmul.f32 %v5257, %v5263
    %v5272 = vadd.f32 %v5268, %v5269
    %v5273 = vadd.f32 %v5272, %v5270
    %v5274 = vadd.f32 %v5273, %v5271
    %5275 = vadd.xlane.f32.xlu0 %v5274
    %v5276 = vpop.xlane.xlu0 %5275
    %v5277 = vld [vmem:[%s15] sm:$0x1]
    %v5278 = vperm.slane %v5277, 0
    %v5279 = vadd.f32 %v5276, %v5278
    %v5280 = vld [vmem:[%s15 + $0x1] sm:$0x1]
    %v5281 = vperm.slane %v5280, 0
    %v5282 = vmul.f32 %v215, %v5281
    %v5283 = vld [vmem:[%s15 + $0x2] sm:$0x1]
    %v5284 = vperm.slane %v5283, 0
    %v5285 = vadd.f32 %v5282, %v5284
    %v5286 = vld [vmem:[%s15 + $0x3] sm:$0x1]
    %v5287 = vperm.slane %v5286, 0
    %v5288 = vmul.f32 %v215, %v5287
    %v5289 = vld [vmem:[%s15 + $0x4] sm:$0x1]
    %v5290 = vperm.slane %v5289, 0
    %v5291 = vadd.f32 %v5288, %v5290
    %v5292 = vmul.f32 %v5285, %v5279
    %v5293 = vadd.f32 %v5292, %v5291
    %v5294 = vlaneseq
    %v5295 = vand.u32 %v5294, 127
    %v5296 = vld [vmem:[%s1] sm:$0x1]
    %v5298 = vperm.slane %v5296, 0
    %v5300 = vadd.f32 %v3133, %v5298
    %vm5301 = vcmp.eq.s32.totalorder %v5295, 48
    %5303 = vset.pattern.permute.xlu0 0
    %5304 = vperm.xlu0 %5303, %v5293
    %v5305 = vpop.permute.xlu0 %5304
    %v5307 = vsel %vm5301, %v5305, 0.0
    %v5308 = vadd.f32 %v5300, %v5307
    %5309 = vst [vmem:[%s16] sm:$0xff] %v5308
    // Predicated region
    $region110: #{simulation_nn_ray_forward.1} parent=1 // pred_check
      _
    $region111: #{simulation_nn_ray_forward.1} parent=1 // pred_check_branch
      %5311 = sbr.rel (0) target = $region113
    $region112: #{simulation_nn_ray_forward.1} parent=1 // pred_region
      _
    $region113: #{simulation_nn_ray_forward.1} parent=1 // pred_fallthru
      _
    // Predicated region
    $region114: #{simulation_nn_ray_forward.1} parent=1 // pred_check
      _
    $region115: #{simulation_nn_ray_forward.1} parent=1 // pred_check_branch
      %5313 = sbr.rel (0) target = $region117
    $region116: #{simulation_nn_ray_forward.1} parent=1 // pred_region
      _
    $region117: #{simulation_nn_ray_forward.1} parent=1 // pred_fallthru
      _
    %5314 = vsyncpa [#allocation3], 1
    %5315 = vsyncpa [#allocation5], 1
    %5316 = vsyncpa [#allocation8], 1
    %5317 = vsyncpa [#allocation11], 1
    %5318 = vsyncpa [#allocation14], 1
    %5319 = vsyncpa [#allocation17], 1

</llo_original>
